<compile_context>
chip_gen: v7x
topology: tpu7x:2x2x1
jax: 0.10.0
libtpu: 0.0.40
codegen_flags: <defaults>
</compile_context>

<pallas_src>
import jax
import jax.numpy as jnp
from jax.experimental import pallas as pl
from jax.experimental.pallas import tpu as pltpu

CP = 8  # channel dimension padded to one full sublane group


# ----------------------------------------------------------------------------
# Fused kernel: 3x3 conv == (one tap-selection matmul per tap on the MXU to build
# the (9*CP, HW) tap matrix) followed by a single (CP, 9*CP) @ (9*CP, HW) matmul,
# fused with bias + activation; ResBlock skip is a 1x1 conv (one more matmul).
# Grid iterates over the batch; each step handles one image, all in VMEM/vregs.
# ----------------------------------------------------------------------------
def _fused_dae_kernel(x_ref, p_ref, w1_ref, b1_ref, w2_ref, b2_ref,
                      wsk_ref, w3_ref, b3_ref, o_ref):
    # x_ref : (CP, HW)           image, channels padded to CP, lane-dense HW
    # p_ref : (9, HW, HW)        0/1 shift matrices (zero-padding "SAME" taps)
    # w*    : (CP, 9*CP)         conv weights, (co, t*CP + ci) layout
    # b*    : (CP, 1)            biases (b2 already includes the skip bias)
    # wsk   : (CP, CP)           1x1 skip conv weight
    # o_ref : (CP, HW)
    x = x_ref[...]

    def conv3x3(a, w, b):
        # Build the 9 shifted taps with the MXU (selection matmuls), stack along
        # sublanes (aligned: each piece is exactly CP=8 rows), then one conv matmul.
        taps = [jnp.dot(a, p_ref[t], preferred_element_type=jnp.float32)
                for t in range(9)]                                  # 9 x (CP, HW)
        t_mat = jnp.concatenate(taps, axis=0)                       # (9*CP, HW)
        return jnp.dot(w, t_mat, preferred_element_type=jnp.float32) + b

    # ResBlock: h = tanh(conv1(x)); h = tanh(conv2(h) + skip1x1(x))   (bias folded)
    h = jnp.tanh(conv3x3(x, w1_ref[...], b1_ref[...]))
    h = jnp.tanh(conv3x3(h, w2_ref[...], b2_ref[...])
                 + jnp.dot(wsk_ref[...], x, preferred_element_type=jnp.float32))
    # Conv: sigmoid(conv3(h))
    o_ref[...] = jax.nn.sigmoid(
        conv3x3(h, w3_ref[...], b3_ref[...])).astype(o_ref.dtype)


# ----------------------------------------------------------------------------
# Trace-time helpers (weights / shift-matrix preparation; all tiny, XLA-side).
# ----------------------------------------------------------------------------
def _make_shift_mats(H, W, dtype=jnp.float32):
    """(9, HW, HW): P[t, q, p] = 1 iff pixel p's tap t (zero-padded SAME) is pixel q."""
    p = jnp.arange(H * W)
    y, x = p // W, p % W
    mats = []
    for dy in range(3):
        for dx in range(3):
            sy, sx = y + dy - 1, x + dx - 1
            valid = (sy >= 0) & (sy < H) & (sx >= 0) & (sx < W)
            src = jnp.where(valid, sy * W + sx, -1)                 # -1 -> no source
            mats.append((jnp.arange(H * W)[:, None] == src[None, :]).astype(dtype))
    return jnp.stack(mats, axis=0)


def _prep_w3x3(w_hwio, cin_p, cout_p):
    kh, kw, cin, cout = w_hwio.shape
    w = jnp.transpose(w_hwio.reshape(kh * kw, cin, cout), (2, 0, 1))  # (co, t, ci)
    w = jnp.pad(w, ((0, cout_p - cout), (0, 0), (0, cin_p - cin)))
    return w.reshape(cout_p, kh * kw * cin_p).astype(jnp.float32)


def _prep_w1x1(w_io, cin_p, cout_p):
    cin, cout = w_io.shape
    w = jnp.transpose(w_io, (1, 0))                                   # (co, ci)
    return jnp.pad(w, ((0, cout_p - cout), (0, cin_p - cin))).astype(jnp.float32)


def _prep_b(b, cout_p):
    return jnp.pad(b, (0, cout_p - b.shape[0])).reshape(cout_p, 1).astype(jnp.float32)


# ----------------------------------------------------------------------------
# Forward pass of myDenoisingAE (NCHW in, NCHW out; no transposes anywhere)
# ----------------------------------------------------------------------------
def denoising_ae_forward(x_nchw, params):
    N, S, H, W = x_nchw.shape
    HW = H * W

    x = x_nchw.reshape(N, S, HW).astype(jnp.float32)
    x = jnp.pad(x, ((0, 0), (0, CP - S), (0, 0)))                     # (N, CP, HW)

    pmats = _make_shift_mats(H, W)                                    # (9, HW, HW)
    w1 = _prep_w3x3(params["w1"], CP, CP)
    b1 = _prep_b(params["b1"], CP)
    w2 = _prep_w3x3(params["w2"], CP, CP)
    b2 = _prep_b(params["b2"] + params["bskip"], CP)                  # fold skip bias
    wsk = _prep_w1x1(params["wskip"], CP, CP)
    w3 = _prep_w3x3(params["w3"], CP, CP)
    b3 = _prep_b(params["b3"], CP)

    out = pl.pallas_call(
        _fused_dae_kernel,
        out_shape=jax.ShapeDtypeStruct((N, CP, HW), jnp.float32),
        grid_spec=pltpu.PrefetchScalarGridSpec(
            num_scalar_prefetch=0,
            grid=(N,),
            in_specs=[
                pl.BlockSpec((None, CP, HW), lambda n: (n, 0, 0)),    # x (per image)
                pl.BlockSpec((9, HW, HW), lambda n: (0, 0, 0)),       # shift mats
                pl.BlockSpec((CP, 9 * CP), lambda n: (0, 0)),         # w1
                pl.BlockSpec((CP, 1), lambda n: (0, 0)),              # b1
                pl.BlockSpec((CP, 9 * CP), lambda n: (0, 0)),         # w2
                pl.BlockSpec((CP, 1), lambda n: (0, 0)),              # b2 (+bskip)
                pl.BlockSpec((CP, CP), lambda n: (0, 0)),             # wskip
                pl.BlockSpec((CP, 9 * CP), lambda n: (0, 0)),         # w3
                pl.BlockSpec((CP, 1), lambda n: (0, 0)),              # b3
            ],
            out_specs=pl.BlockSpec((None, CP, HW), lambda n: (n, 0, 0)),
        ),
        compiler_params=pltpu.CompilerParams(
            dimension_semantics=("parallel",)),
    )(x, pmats, w1, b1, w2, b2, wsk, w3, b3)

    return out[:, :S, :].reshape(N, S, H, W)


# ----------------------------------------------------------------------------
# Pure-JAX reference (lax.conv) for a correctness self-check
# ----------------------------------------------------------------------------
def _ref_conv(x_nhwc, w_hwio, b, pad):
    y = jax.lax.conv_general_dilated(
        x_nhwc, w_hwio, window_strides=(1, 1), padding=pad,
        dimension_numbers=("NHWC", "HWIO", "NHWC"))
    return y + b.reshape(1, 1, 1, -1)


def reference_forward(x_nchw, params):
    x = jnp.transpose(x_nchw, (0, 2, 3, 1)).astype(jnp.float32)
    h = jnp.tanh(_ref_conv(x, params["w1"], params["b1"], "SAME"))
    skip = _ref_conv(x, params["wskip"].reshape(1, 1, *params["wskip"].shape),
                     params["bskip"], "VALID")
    h = jnp.tanh(_ref_conv(h, params["w2"], params["b2"], "SAME") + skip)
    y = jax.nn.sigmoid(_ref_conv(h, params["w3"], params["b3"], "SAME"))
    return jnp.transpose(y, (0, 3, 1, 2))


# ----------------------------------------------------------------------------
# Deterministic parameter init (PyTorch Conv2d-style uniform bounds)
# ----------------------------------------------------------------------------
def init_params(key, S):
    def conv_init(k, kh, kw, cin, cout):
        k1, k2 = jax.random.split(k)
        bound = 1.0 / float(cin * kh * kw) ** 0.5
        w = jax.random.uniform(k1, (kh, kw, cin, cout), jnp.float32, -bound, bound)
        b = jax.random.uniform(k2, (cout,), jnp.float32, -bound, bound)
        return w, b

    k1, k2, k3, k4 = jax.random.split(key, 4)
    w1, b1 = conv_init(k1, 3, 3, S, 3)        # ResBlock conv1: S -> 3
    w2, b2 = conv_init(k2, 3, 3, 3, 3)        # ResBlock conv2: 3 -> 3
    wskip, bskip = conv_init(k3, 1, 1, S, 3)  # ResBlock 1x1 skip: S -> 3
    w3, b3 = conv_init(k4, 3, 3, 3, S)        # Conv: 3 -> S
    return {"w1": w1, "b1": b1,
            "w2": w2, "b2": b2,
            "wskip": wskip.reshape(S, 3), "bskip": bskip,
            "w3": w3, "b3": b3}


if __name__ == "__main__":
    N, S, H, W = 2, 4, 16, 16
    key = jax.random.PRNGKey(0)
    kx, kp = jax.random.split(key)
    x = jax.random.normal(kx, (N, S, H, W), jnp.float32)   # NCHW like PyTorch
    params = init_params(kp, S)

    y = jax.block_until_ready(jax.jit(denoising_ae_forward)(x, params))
    assert y.shape == (N, S, H, W), y.shape

    y_ref = jax.block_until_ready(reference_forward(x, params))
    assert jnp.allclose(y, y_ref, atol=2e-4, rtol=2e-4), (
        float(jnp.max(jnp.abs(y - y_ref))))

    print("KERNEL_OK")
</pallas_src>

<mosaic_0001>
module attributes {stable_mosaic.version = 11 : i64} {
  func.func @_fused_dae_kernel(%arg0: i32, %arg1: memref<1x8x256xf32, #tpu.memory_space<vmem>>, %arg2: memref<9x256x256xf32, #tpu.memory_space<vmem>>, %arg3: memref<8x72xf32, #tpu.memory_space<vmem>>, %arg4: memref<8x1xf32, #tpu.memory_space<vmem>>, %arg5: memref<8x72xf32, #tpu.memory_space<vmem>>, %arg6: memref<8x1xf32, #tpu.memory_space<vmem>>, %arg7: memref<8x8xf32, #tpu.memory_space<vmem>>, %arg8: memref<8x72xf32, #tpu.memory_space<vmem>>, %arg9: memref<8x1xf32, #tpu.memory_space<vmem>>, %arg10: memref<1x8x256xf32, #tpu.memory_space<vmem>>) attributes {dimension_semantics = [#tpu.dimension_semantics<parallel>], iteration_bounds = array<i64: 2>, scalar_prefetch = 0 : i64, scratch_operands = 0 : i64, tpu.core_type = #tpu.core_type<tc>, window_params = [{transform_indices = @transform_0, window_bounds = array<i64: 1, 8, 256>}, {pipeline_mode = #tpu.pipeline_mode<synchronous>, transform_indices = @transform_1, window_bounds = array<i64: 9, 256, 256>}, {pipeline_mode = #tpu.pipeline_mode<synchronous>, transform_indices = @transform_2, window_bounds = array<i64: 8, 72>}, {pipeline_mode = #tpu.pipeline_mode<synchronous>, transform_indices = @transform_3, window_bounds = array<i64: 8, 1>}, {pipeline_mode = #tpu.pipeline_mode<synchronous>, transform_indices = @transform_4, window_bounds = array<i64: 8, 72>}, {pipeline_mode = #tpu.pipeline_mode<synchronous>, transform_indices = @transform_5, window_bounds = array<i64: 8, 1>}, {pipeline_mode = #tpu.pipeline_mode<synchronous>, transform_indices = @transform_6, window_bounds = array<i64: 8, 8>}, {pipeline_mode = #tpu.pipeline_mode<synchronous>, transform_indices = @transform_7, window_bounds = array<i64: 8, 72>}, {pipeline_mode = #tpu.pipeline_mode<synchronous>, transform_indices = @transform_8, window_bounds = array<i64: 8, 1>}, {transform_indices = @transform_9, window_bounds = array<i64: 1, 8, 256>}]} {
    %c0 = arith.constant 0 : index
    %c0_0 = arith.constant 0 : index
    %c0_1 = arith.constant 0 : index
    %0 = vector.load %arg1[%c0, %c0_0, %c0_1] : memref<1x8x256xf32, #tpu.memory_space<vmem>>, vector<1x8x256xf32>
    %1 = vector.shape_cast %0 : vector<1x8x256xf32> to vector<8x256xf32>
    %c0_2 = arith.constant 0 : index
    %c0_3 = arith.constant 0 : index
    %2 = vector.load %arg3[%c0_2, %c0_3] : memref<8x72xf32, #tpu.memory_space<vmem>>, vector<8x72xf32>
    %c0_4 = arith.constant 0 : index
    %c0_5 = arith.constant 0 : index
    %3 = vector.load %arg4[%c0_4, %c0_5] : memref<8x1xf32, #tpu.memory_space<vmem>>, vector<8x1xf32>
    %c0_6 = arith.constant 0 : index
    %c0_7 = arith.constant 0 : index
    %c0_8 = arith.constant 0 : index
    %4 = vector.load %arg2[%c0_6, %c0_7, %c0_8] : memref<9x256x256xf32, #tpu.memory_space<vmem>>, vector<1x256x256xf32>
    %5 = vector.shape_cast %4 : vector<1x256x256xf32> to vector<256x256xf32>
    %cst = arith.constant dense<0.000000e+00> : vector<8x256xf32>
    %6 = tpu.matmul %1, %5, %cst {dimension_numbers = #tpu.dot_dimension_numbers<[1], [0], [0], [1], [0, 0, 1, 1], [], []>} : vector<8x256xf32>, vector<256x256xf32>, vector<8x256xf32> -> vector<8x256xf32>
    %c1 = arith.constant 1 : index
    %c0_9 = arith.constant 0 : index
    %c0_10 = arith.constant 0 : index
    %7 = vector.load %arg2[%c1, %c0_9, %c0_10] : memref<9x256x256xf32, #tpu.memory_space<vmem>>, vector<1x256x256xf32>
    %8 = vector.shape_cast %7 : vector<1x256x256xf32> to vector<256x256xf32>
    %cst_11 = arith.constant dense<0.000000e+00> : vector<8x256xf32>
    %9 = tpu.matmul %1, %8, %cst_11 {dimension_numbers = #tpu.dot_dimension_numbers<[1], [0], [0], [1], [0, 0, 1, 1], [], []>} : vector<8x256xf32>, vector<256x256xf32>, vector<8x256xf32> -> vector<8x256xf32>
    %c2 = arith.constant 2 : index
    %c0_12 = arith.constant 0 : index
    %c0_13 = arith.constant 0 : index
    %10 = vector.load %arg2[%c2, %c0_12, %c0_13] : memref<9x256x256xf32, #tpu.memory_space<vmem>>, vector<1x256x256xf32>
    %11 = vector.shape_cast %10 : vector<1x256x256xf32> to vector<256x256xf32>
    %cst_14 = arith.constant dense<0.000000e+00> : vector<8x256xf32>
    %12 = tpu.matmul %1, %11, %cst_14 {dimension_numbers = #tpu.dot_dimension_numbers<[1], [0], [0], [1], [0, 0, 1, 1], [], []>} : vector<8x256xf32>, vector<256x256xf32>, vector<8x256xf32> -> vector<8x256xf32>
    %c3 = arith.constant 3 : index
    %c0_15 = arith.constant 0 : index
    %c0_16 = arith.constant 0 : index
    %13 = vector.load %arg2[%c3, %c0_15, %c0_16] : memref<9x256x256xf32, #tpu.memory_space<vmem>>, vector<1x256x256xf32>
    %14 = vector.shape_cast %13 : vector<1x256x256xf32> to vector<256x256xf32>
    %cst_17 = arith.constant dense<0.000000e+00> : vector<8x256xf32>
    %15 = tpu.matmul %1, %14, %cst_17 {dimension_numbers = #tpu.dot_dimension_numbers<[1], [0], [0], [1], [0, 0, 1, 1], [], []>} : vector<8x256xf32>, vector<256x256xf32>, vector<8x256xf32> -> vector<8x256xf32>
    %c4 = arith.constant 4 : index
    %c0_18 = arith.constant 0 : index
    %c0_19 = arith.constant 0 : index
    %16 = vector.load %arg2[%c4, %c0_18, %c0_19] : memref<9x256x256xf32, #tpu.memory_space<vmem>>, vector<1x256x256xf32>
    %17 = vector.shape_cast %16 : vector<1x256x256xf32> to vector<256x256xf32>
    %cst_20 = arith.constant dense<0.000000e+00> : vector<8x256xf32>
    %18 = tpu.matmul %1, %17, %cst_20 {dimension_numbers = #tpu.dot_dimension_numbers<[1], [0], [0], [1], [0, 0, 1, 1], [], []>} : vector<8x256xf32>, vector<256x256xf32>, vector<8x256xf32> -> vector<8x256xf32>
    %c5 = arith.constant 5 : index
    %c0_21 = arith.constant 0 : index
    %c0_22 = arith.constant 0 : index
    %19 = vector.load %arg2[%c5, %c0_21, %c0_22] : memref<9x256x256xf32, #tpu.memory_space<vmem>>, vector<1x256x256xf32>
    %20 = vector.shape_cast %19 : vector<1x256x256xf32> to vector<256x256xf32>
    %cst_23 = arith.constant dense<0.000000e+00> : vector<8x256xf32>
    %21 = tpu.matmul %1, %20, %cst_23 {dimension_numbers = #tpu.dot_dimension_numbers<[1], [0], [0], [1], [0, 0, 1, 1], [], []>} : vector<8x256xf32>, vector<256x256xf32>, vector<8x256xf32> -> vector<8x256xf32>
    %c6 = arith.constant 6 : index
    %c0_24 = arith.constant 0 : index
    %c0_25 = arith.constant 0 : index
    %22 = vector.load %arg2[%c6, %c0_24, %c0_25] : memref<9x256x256xf32, #tpu.memory_space<vmem>>, vector<1x256x256xf32>
    %23 = vector.shape_cast %22 : vector<1x256x256xf32> to vector<256x256xf32>
    %cst_26 = arith.constant dense<0.000000e+00> : vector<8x256xf32>
    %24 = tpu.matmul %1, %23, %cst_26 {dimension_numbers = #tpu.dot_dimension_numbers<[1], [0], [0], [1], [0, 0, 1, 1], [], []>} : vector<8x256xf32>, vector<256x256xf32>, vector<8x256xf32> -> vector<8x256xf32>
    %c7 = arith.constant 7 : index
    %c0_27 = arith.constant 0 : index
    %c0_28 = arith.constant 0 : index
    %25 = vector.load %arg2[%c7, %c0_27, %c0_28] : memref<9x256x256xf32, #tpu.memory_space<vmem>>, vector<1x256x256xf32>
    %26 = vector.shape_cast %25 : vector<1x256x256xf32> to vector<256x256xf32>
    %cst_29 = arith.constant dense<0.000000e+00> : vector<8x256xf32>
    %27 = tpu.matmul %1, %26, %cst_29 {dimension_numbers = #tpu.dot_dimension_numbers<[1], [0], [0], [1], [0, 0, 1, 1], [], []>} : vector<8x256xf32>, vector<256x256xf32>, vector<8x256xf32> -> vector<8x256xf32>
    %c8 = arith.constant 8 : index
    %c0_30 = arith.constant 0 : index
    %c0_31 = arith.constant 0 : index
    %28 = vector.load %arg2[%c8, %c0_30, %c0_31] : memref<9x256x256xf32, #tpu.memory_space<vmem>>, vector<1x256x256xf32>
    %29 = vector.shape_cast %28 : vector<1x256x256xf32> to vector<256x256xf32>
    %cst_32 = arith.constant dense<0.000000e+00> : vector<8x256xf32>
    %30 = tpu.matmul %1, %29, %cst_32 {dimension_numbers = #tpu.dot_dimension_numbers<[1], [0], [0], [1], [0, 0, 1, 1], [], []>} : vector<8x256xf32>, vector<256x256xf32>, vector<8x256xf32> -> vector<8x256xf32>
    %31 = tpu.concatenate %6, %9, %12, %15, %18, %21, %24, %27, %30 in 0 : vector<8x256xf32>, vector<8x256xf32>, vector<8x256xf32>, vector<8x256xf32>, vector<8x256xf32>, vector<8x256xf32>, vector<8x256xf32>, vector<8x256xf32>, vector<8x256xf32> -> vector<72x256xf32>
    %cst_33 = arith.constant dense<0.000000e+00> : vector<8x256xf32>
    %32 = tpu.matmul %2, %31, %cst_33 {dimension_numbers = #tpu.dot_dimension_numbers<[1], [0], [0], [1], [0, 0, 1, 1], [], []>} : vector<8x72xf32>, vector<72x256xf32>, vector<8x256xf32> -> vector<8x256xf32>
    %33 = vector.broadcast %3 : vector<8x1xf32> to vector<8x256xf32>
    %34 = arith.addf %32, %33 : vector<8x256xf32>
    %35 = math.tanh %34 : vector<8x256xf32>
    %c0_34 = arith.constant 0 : index
    %c0_35 = arith.constant 0 : index
    %36 = vector.load %arg5[%c0_34, %c0_35] : memref<8x72xf32, #tpu.memory_space<vmem>>, vector<8x72xf32>
    %c0_36 = arith.constant 0 : index
    %c0_37 = arith.constant 0 : index
    %37 = vector.load %arg6[%c0_36, %c0_37] : memref<8x1xf32, #tpu.memory_space<vmem>>, vector<8x1xf32>
    %c0_38 = arith.constant 0 : index
    %c0_39 = arith.constant 0 : index
    %c0_40 = arith.constant 0 : index
    %38 = vector.load %arg2[%c0_38, %c0_39, %c0_40] : memref<9x256x256xf32, #tpu.memory_space<vmem>>, vector<1x256x256xf32>
    %39 = vector.shape_cast %38 : vector<1x256x256xf32> to vector<256x256xf32>
    %cst_41 = arith.constant dense<0.000000e+00> : vector<8x256xf32>
    %40 = tpu.matmul %35, %39, %cst_41 {dimension_numbers = #tpu.dot_dimension_numbers<[1], [0], [0], [1], [0, 0, 1, 1], [], []>} : vector<8x256xf32>, vector<256x256xf32>, vector<8x256xf32> -> vector<8x256xf32>
    %c1_42 = arith.constant 1 : index
    %c0_43 = arith.constant 0 : index
    %c0_44 = arith.constant 0 : index
    %41 = vector.load %arg2[%c1_42, %c0_43, %c0_44] : memref<9x256x256xf32, #tpu.memory_space<vmem>>, vector<1x256x256xf32>
    %42 = vector.shape_cast %41 : vector<1x256x256xf32> to vector<256x256xf32>
    %cst_45 = arith.constant dense<0.000000e+00> : vector<8x256xf32>
    %43 = tpu.matmul %35, %42, %cst_45 {dimension_numbers = #tpu.dot_dimension_numbers<[1], [0], [0], [1], [0, 0, 1, 1], [], []>} : vector<8x256xf32>, vector<256x256xf32>, vector<8x256xf32> -> vector<8x256xf32>
    %c2_46 = arith.constant 2 : index
    %c0_47 = arith.constant 0 : index
    %c0_48 = arith.constant 0 : index
    %44 = vector.load %arg2[%c2_46, %c0_47, %c0_48] : memref<9x256x256xf32, #tpu.memory_space<vmem>>, vector<1x256x256xf32>
    %45 = vector.shape_cast %44 : vector<1x256x256xf32> to vector<256x256xf32>
    %cst_49 = arith.constant dense<0.000000e+00> : vector<8x256xf32>
    %46 = tpu.matmul %35, %45, %cst_49 {dimension_numbers = #tpu.dot_dimension_numbers<[1], [0], [0], [1], [0, 0, 1, 1], [], []>} : vector<8x256xf32>, vector<256x256xf32>, vector<8x256xf32> -> vector<8x256xf32>
    %c3_50 = arith.constant 3 : index
    %c0_51 = arith.constant 0 : index
    %c0_52 = arith.constant 0 : index
    %47 = vector.load %arg2[%c3_50, %c0_51, %c0_52] : memref<9x256x256xf32, #tpu.memory_space<vmem>>, vector<1x256x256xf32>
    %48 = vector.shape_cast %47 : vector<1x256x256xf32> to vector<256x256xf32>
    %cst_53 = arith.constant dense<0.000000e+00> : vector<8x256xf32>
    %49 = tpu.matmul %35, %48, %cst_53 {dimension_numbers = #tpu.dot_dimension_numbers<[1], [0], [0], [1], [0, 0, 1, 1], [], []>} : vector<8x256xf32>, vector<256x256xf32>, vector<8x256xf32> -> vector<8x256xf32>
    %c4_54 = arith.constant 4 : index
    %c0_55 = arith.constant 0 : index
    %c0_56 = arith.constant 0 : index
    %50 = vector.load %arg2[%c4_54, %c0_55, %c0_56] : memref<9x256x256xf32, #tpu.memory_space<vmem>>, vector<1x256x256xf32>
    %51 = vector.shape_cast %50 : vector<1x256x256xf32> to vector<256x256xf32>
    %cst_57 = arith.constant dense<0.000000e+00> : vector<8x256xf32>
    %52 = tpu.matmul %35, %51, %cst_57 {dimension_numbers = #tpu.dot_dimension_numbers<[1], [0], [0], [1], [0, 0, 1, 1], [], []>} : vector<8x256xf32>, vector<256x256xf32>, vector<8x256xf32> -> vector<8x256xf32>
    %c5_58 = arith.constant 5 : index
    %c0_59 = arith.constant 0 : index
    %c0_60 = arith.constant 0 : index
    %53 = vector.load %arg2[%c5_58, %c0_59, %c0_60] : memref<9x256x256xf32, #tpu.memory_space<vmem>>, vector<1x256x256xf32>
    %54 = vector.shape_cast %53 : vector<1x256x256xf32> to vector<256x256xf32>
    %cst_61 = arith.constant dense<0.000000e+00> : vector<8x256xf32>
    %55 = tpu.matmul %35, %54, %cst_61 {dimension_numbers = #tpu.dot_dimension_numbers<[1], [0], [0], [1], [0, 0, 1, 1], [], []>} : vector<8x256xf32>, vector<256x256xf32>, vector<8x256xf32> -> vector<8x256xf32>
    %c6_62 = arith.constant 6 : index
    %c0_63 = arith.constant 0 : index
    %c0_64 = arith.constant 0 : index
    %56 = vector.load %arg2[%c6_62, %c0_63, %c0_64] : memref<9x256x256xf32, #tpu.memory_space<vmem>>, vector<1x256x256xf32>
    %57 = vector.shape_cast %56 : vector<1x256x256xf32> to vector<256x256xf32>
    %cst_65 = arith.constant dense<0.000000e+00> : vector<8x256xf32>
    %58 = tpu.matmul %35, %57, %cst_65 {dimension_numbers = #tpu.dot_dimension_numbers<[1], [0], [0], [1], [0, 0, 1, 1], [], []>} : vector<8x256xf32>, vector<256x256xf32>, vector<8x256xf32> -> vector<8x256xf32>
    %c7_66 = arith.constant 7 : index
    %c0_67 = arith.constant 0 : index
    %c0_68 = arith.constant 0 : index
    %59 = vector.load %arg2[%c7_66, %c0_67, %c0_68] : memref<9x256x256xf32, #tpu.memory_space<vmem>>, vector<1x256x256xf32>
    %60 = vector.shape_cast %59 : vector<1x256x256xf32> to vector<256x256xf32>
    %cst_69 = arith.constant dense<0.000000e+00> : vector<8x256xf32>
    %61 = tpu.matmul %35, %60, %cst_69 {dimension_numbers = #tpu.dot_dimension_numbers<[1], [0], [0], [1], [0, 0, 1, 1], [], []>} : vector<8x256xf32>, vector<256x256xf32>, vector<8x256xf32> -> vector<8x256xf32>
    %c8_70 = arith.constant 8 : index
    %c0_71 = arith.constant 0 : index
    %c0_72 = arith.constant 0 : index
    %62 = vector.load %arg2[%c8_70, %c0_71, %c0_72] : memref<9x256x256xf32, #tpu.memory_space<vmem>>, vector<1x256x256xf32>
    %63 = vector.shape_cast %62 : vector<1x256x256xf32> to vector<256x256xf32>
    %cst_73 = arith.constant dense<0.000000e+00> : vector<8x256xf32>
    %64 = tpu.matmul %35, %63, %cst_73 {dimension_numbers = #tpu.dot_dimension_numbers<[1], [0], [0], [1], [0, 0, 1, 1], [], []>} : vector<8x256xf32>, vector<256x256xf32>, vector<8x256xf32> -> vector<8x256xf32>
    %65 = tpu.concatenate %40, %43, %46, %49, %52, %55, %58, %61, %64 in 0 : vector<8x256xf32>, vector<8x256xf32>, vector<8x256xf32>, vector<8x256xf32>, vector<8x256xf32>, vector<8x256xf32>, vector<8x256xf32>, vector<8x256xf32>, vector<8x256xf32> -> vector<72x256xf32>
    %cst_74 = arith.constant dense<0.000000e+00> : vector<8x256xf32>
    %66 = tpu.matmul %36, %65, %cst_74 {dimension_numbers = #tpu.dot_dimension_numbers<[1], [0], [0], [1], [0, 0, 1, 1], [], []>} : vector<8x72xf32>, vector<72x256xf32>, vector<8x256xf32> -> vector<8x256xf32>
    %67 = vector.broadcast %37 : vector<8x1xf32> to vector<8x256xf32>
    %68 = arith.addf %66, %67 : vector<8x256xf32>
    %c0_75 = arith.constant 0 : index
    %c0_76 = arith.constant 0 : index
    %69 = vector.load %arg7[%c0_75, %c0_76] : memref<8x8xf32, #tpu.memory_space<vmem>>, vector<8x8xf32>
    %cst_77 = arith.constant dense<0.000000e+00> : vector<8x256xf32>
    %70 = tpu.matmul %69, %1, %cst_77 {dimension_numbers = #tpu.dot_dimension_numbers<[1], [0], [0], [1], [0, 0, 1, 1], [], []>} : vector<8x8xf32>, vector<8x256xf32>, vector<8x256xf32> -> vector<8x256xf32>
    %71 = arith.addf %68, %70 : vector<8x256xf32>
    %72 = math.tanh %71 : vector<8x256xf32>
    %c0_78 = arith.constant 0 : index
    %c0_79 = arith.constant 0 : index
    %73 = vector.load %arg8[%c0_78, %c0_79] : memref<8x72xf32, #tpu.memory_space<vmem>>, vector<8x72xf32>
    %c0_80 = arith.constant 0 : index
    %c0_81 = arith.constant 0 : index
    %74 = vector.load %arg9[%c0_80, %c0_81] : memref<8x1xf32, #tpu.memory_space<vmem>>, vector<8x1xf32>
    %c0_82 = arith.constant 0 : index
    %c0_83 = arith.constant 0 : index
    %c0_84 = arith.constant 0 : index
    %75 = vector.load %arg2[%c0_82, %c0_83, %c0_84] : memref<9x256x256xf32, #tpu.memory_space<vmem>>, vector<1x256x256xf32>
    %76 = vector.shape_cast %75 : vector<1x256x256xf32> to vector<256x256xf32>
    %cst_85 = arith.constant dense<0.000000e+00> : vector<8x256xf32>
    %77 = tpu.matmul %72, %76, %cst_85 {dimension_numbers = #tpu.dot_dimension_numbers<[1], [0], [0], [1], [0, 0, 1, 1], [], []>} : vector<8x256xf32>, vector<256x256xf32>, vector<8x256xf32> -> vector<8x256xf32>
    %c1_86 = arith.constant 1 : index
    %c0_87 = arith.constant 0 : index
    %c0_88 = arith.constant 0 : index
    %78 = vector.load %arg2[%c1_86, %c0_87, %c0_88] : memref<9x256x256xf32, #tpu.memory_space<vmem>>, vector<1x256x256xf32>
    %79 = vector.shape_cast %78 : vector<1x256x256xf32> to vector<256x256xf32>
    %cst_89 = arith.constant dense<0.000000e+00> : vector<8x256xf32>
    %80 = tpu.matmul %72, %79, %cst_89 {dimension_numbers = #tpu.dot_dimension_numbers<[1], [0], [0], [1], [0, 0, 1, 1], [], []>} : vector<8x256xf32>, vector<256x256xf32>, vector<8x256xf32> -> vector<8x256xf32>
    %c2_90 = arith.constant 2 : index
    %c0_91 = arith.constant 0 : index
    %c0_92 = arith.constant 0 : index
    %81 = vector.load %arg2[%c2_90, %c0_91, %c0_92] : memref<9x256x256xf32, #tpu.memory_space<vmem>>, vector<1x256x256xf32>
    %82 = vector.shape_cast %81 : vector<1x256x256xf32> to vector<256x256xf32>
    %cst_93 = arith.constant dense<0.000000e+00> : vector<8x256xf32>
    %83 = tpu.matmul %72, %82, %cst_93 {dimension_numbers = #tpu.dot_dimension_numbers<[1], [0], [0], [1], [0, 0, 1, 1], [], []>} : vector<8x256xf32>, vector<256x256xf32>, vector<8x256xf32> -> vector<8x256xf32>
    %c3_94 = arith.constant 3 : index
    %c0_95 = arith.constant 0 : index
    %c0_96 = arith.constant 0 : index
    %84 = vector.load %arg2[%c3_94, %c0_95, %c0_96] : memref<9x256x256xf32, #tpu.memory_space<vmem>>, vector<1x256x256xf32>
    %85 = vector.shape_cast %84 : vector<1x256x256xf32> to vector<256x256xf32>
    %cst_97 = arith.constant dense<0.000000e+00> : vector<8x256xf32>
    %86 = tpu.matmul %72, %85, %cst_97 {dimension_numbers = #tpu.dot_dimension_numbers<[1], [0], [0], [1], [0, 0, 1, 1], [], []>} : vector<8x256xf32>, vector<256x256xf32>, vector<8x256xf32> -> vector<8x256xf32>
    %c4_98 = arith.constant 4 : index
    %c0_99 = arith.constant 0 : index
    %c0_100 = arith.constant 0 : index
    %87 = vector.load %arg2[%c4_98, %c0_99, %c0_100] : memref<9x256x256xf32, #tpu.memory_space<vmem>>, vector<1x256x256xf32>
    %88 = vector.shape_cast %87 : vector<1x256x256xf32> to vector<256x256xf32>
    %cst_101 = arith.constant dense<0.000000e+00> : vector<8x256xf32>
    %89 = tpu.matmul %72, %88, %cst_101 {dimension_numbers = #tpu.dot_dimension_numbers<[1], [0], [0], [1], [0, 0, 1, 1], [], []>} : vector<8x256xf32>, vector<256x256xf32>, vector<8x256xf32> -> vector<8x256xf32>
    %c5_102 = arith.constant 5 : index
    %c0_103 = arith.constant 0 : index
    %c0_104 = arith.constant 0 : index
    %90 = vector.load %arg2[%c5_102, %c0_103, %c0_104] : memref<9x256x256xf32, #tpu.memory_space<vmem>>, vector<1x256x256xf32>
    %91 = vector.shape_cast %90 : vector<1x256x256xf32> to vector<256x256xf32>
    %cst_105 = arith.constant dense<0.000000e+00> : vector<8x256xf32>
    %92 = tpu.matmul %72, %91, %cst_105 {dimension_numbers = #tpu.dot_dimension_numbers<[1], [0], [0], [1], [0, 0, 1, 1], [], []>} : vector<8x256xf32>, vector<256x256xf32>, vector<8x256xf32> -> vector<8x256xf32>
    %c6_106 = arith.constant 6 : index
    %c0_107 = arith.constant 0 : index
    %c0_108 = arith.constant 0 : index
    %93 = vector.load %arg2[%c6_106, %c0_107, %c0_108] : memref<9x256x256xf32, #tpu.memory_space<vmem>>, vector<1x256x256xf32>
    %94 = vector.shape_cast %93 : vector<1x256x256xf32> to vector<256x256xf32>
    %cst_109 = arith.constant dense<0.000000e+00> : vector<8x256xf32>
    %95 = tpu.matmul %72, %94, %cst_109 {dimension_numbers = #tpu.dot_dimension_numbers<[1], [0], [0], [1], [0, 0, 1, 1], [], []>} : vector<8x256xf32>, vector<256x256xf32>, vector<8x256xf32> -> vector<8x256xf32>
    %c7_110 = arith.constant 7 : index
    %c0_111 = arith.constant 0 : index
    %c0_112 = arith.constant 0 : index
    %96 = vector.load %arg2[%c7_110, %c0_111, %c0_112] : memref<9x256x256xf32, #tpu.memory_space<vmem>>, vector<1x256x256xf32>
    %97 = vector.shape_cast %96 : vector<1x256x256xf32> to vector<256x256xf32>
    %cst_113 = arith.constant dense<0.000000e+00> : vector<8x256xf32>
    %98 = tpu.matmul %72, %97, %cst_113 {dimension_numbers = #tpu.dot_dimension_numbers<[1], [0], [0], [1], [0, 0, 1, 1], [], []>} : vector<8x256xf32>, vector<256x256xf32>, vector<8x256xf32> -> vector<8x256xf32>
    %c8_114 = arith.constant 8 : index
    %c0_115 = arith.constant 0 : index
    %c0_116 = arith.constant 0 : index
    %99 = vector.load %arg2[%c8_114, %c0_115, %c0_116] : memref<9x256x256xf32, #tpu.memory_space<vmem>>, vector<1x256x256xf32>
    %100 = vector.shape_cast %99 : vector<1x256x256xf32> to vector<256x256xf32>
    %cst_117 = arith.constant dense<0.000000e+00> : vector<8x256xf32>
    %101 = tpu.matmul %72, %100, %cst_117 {dimension_numbers = #tpu.dot_dimension_numbers<[1], [0], [0], [1], [0, 0, 1, 1], [], []>} : vector<8x256xf32>, vector<256x256xf32>, vector<8x256xf32> -> vector<8x256xf32>
    %102 = tpu.concatenate %77, %80, %83, %86, %89, %92, %95, %98, %101 in 0 : vector<8x256xf32>, vector<8x256xf32>, vector<8x256xf32>, vector<8x256xf32>, vector<8x256xf32>, vector<8x256xf32>, vector<8x256xf32>, vector<8x256xf32>, vector<8x256xf32> -> vector<72x256xf32>
    %cst_118 = arith.constant dense<0.000000e+00> : vector<8x256xf32>
    %103 = tpu.matmul %73, %102, %cst_118 {dimension_numbers = #tpu.dot_dimension_numbers<[1], [0], [0], [1], [0, 0, 1, 1], [], []>} : vector<8x72xf32>, vector<72x256xf32>, vector<8x256xf32> -> vector<8x256xf32>
    %104 = vector.broadcast %74 : vector<8x1xf32> to vector<8x256xf32>
    %105 = arith.addf %103, %104 : vector<8x256xf32>
    %106 = arith.negf %105 : vector<8x256xf32>
    %107 = math.exp %106 : vector<8x256xf32>
    %cst_119 = arith.constant 1.000000e+00 : f32
    %108 = vector.broadcast %cst_119 : f32 to vector<8x256xf32>
    %109 = arith.addf %108, %107 : vector<8x256xf32>
    %110 = arith.divf %108, %109 : vector<8x256xf32>
    %c0_120 = arith.constant 0 : index
    %c0_121 = arith.constant 0 : index
    %c0_122 = arith.constant 0 : index
    %111 = vector.load %arg10[%c0_120, %c0_121, %c0_122] : memref<1x8x256xf32, #tpu.memory_space<vmem>>, vector<1x8x256xf32>
    %112 = vector.shape_cast %111 : vector<1x8x256xf32> to vector<8x256xf32>
    %113 = vector.shape_cast %110 : vector<8x256xf32> to vector<1x8x256xf32>
    tpu.vector_store %arg10[%c0_120, %c0_121, %c0_122], %113 {strides = array<i32>} : memref<1x8x256xf32, #tpu.memory_space<vmem>>, vector<1x8x256xf32>,
    return
  }
  func.func @transform_0(%arg0: i32) -> (i32, i32, i32) {
    %c0_i32 = arith.constant 0 : i32
    %c0_i32_0 = arith.constant 0 : i32
    %c0_i32_1 = arith.constant 0 : i32
    return %arg0, %c0_i32, %c0_i32_0 : i32, i32, i32
  }
  func.func @transform_1(%arg0: i32) -> (i32, i32, i32) {
    %c0_i32 = arith.constant 0 : i32
    %c0_i32_0 = arith.constant 0 : i32
    %c0_i32_1 = arith.constant 0 : i32
    %c0_i32_2 = arith.constant 0 : i32
    return %c0_i32, %c0_i32_0, %c0_i32_1 : i32, i32, i32
  }
  func.func @transform_2(%arg0: i32) -> (i32, i32) {
    %c0_i32 = arith.constant 0 : i32
    %c0_i32_0 = arith.constant 0 : i32
    %c0_i32_1 = arith.constant 0 : i32
    return %c0_i32, %c0_i32_0 : i32, i32
  }
  func.func @transform_3(%arg0: i32) -> (i32, i32) {
    %c0_i32 = arith.constant 0 : i32
    %c0_i32_0 = arith.constant 0 : i32
    %c0_i32_1 = arith.constant 0 : i32
    return %c0_i32, %c0_i32_0 : i32, i32
  }
  func.func @transform_4(%arg0: i32) -> (i32, i32) {
    %c0_i32 = arith.constant 0 : i32
    %c0_i32_0 = arith.constant 0 : i32
    %c0_i32_1 = arith.constant 0 : i32
    return %c0_i32, %c0_i32_0 : i32, i32
  }
  func.func @transform_5(%arg0: i32) -> (i32, i32) {
    %c0_i32 = arith.constant 0 : i32
    %c0_i32_0 = arith.constant 0 : i32
    %c0_i32_1 = arith.constant 0 : i32
    return %c0_i32, %c0_i32_0 : i32, i32
  }
  func.func @transform_6(%arg0: i32) -> (i32, i32) {
    %c0_i32 = arith.constant 0 : i32
    %c0_i32_0 = arith.constant 0 : i32
    %c0_i32_1 = arith.constant 0 : i32
    return %c0_i32, %c0_i32_0 : i32, i32
  }
  func.func @transform_7(%arg0: i32) -> (i32, i32) {
    %c0_i32 = arith.constant 0 : i32
    %c0_i32_0 = arith.constant 0 : i32
    %c0_i32_1 = arith.constant 0 : i32
    return %c0_i32, %c0_i32_0 : i32, i32
  }
  func.func @transform_8(%arg0: i32) -> (i32, i32) {
    %c0_i32 = arith.constant 0 : i32
    %c0_i32_0 = arith.constant 0 : i32
    %c0_i32_1 = arith.constant 0 : i32
    return %c0_i32, %c0_i32_0 : i32, i32
  }
  func.func @transform_9(%arg0: i32) -> (i32, i32, i32) {
    %c0_i32 = arith.constant 0 : i32
    %c0_i32_0 = arith.constant 0 : i32
    %c0_i32_1 = arith.constant 0 : i32
    return %arg0, %c0_i32, %c0_i32_0 : i32, i32, i32
  }
}

</mosaic_0001>

<llo_original>
// kernel: denoising_ae_forward.1
$region0: #{denoising_ae_forward.1}
  #allocation0 [shape = 'u32[]', space=smem, size = 0x4, offset = 0x4, fixed_abs, tag = 'smem constant byte address 0x4 - core index']
  #allocation1 [shape = 'u32[144,128]{1,0:T(1,128)}', space=vmem, size = 0x12000, scoped, tag = 'internal scratch']
  %s0 = inlined_call_operand.vmem [shape: f32[2,8,256], index: 0, kind: input, shape index: {}]
  %s1 = inlined_call_operand.vmem [shape: f32[9,256,256], index: 1, kind: input, shape index: {}]
  %s2 = inlined_call_operand.vmem [shape: f32[8,72], index: 2, kind: input, shape index: {}]
  %s3 = inlined_call_operand.vmem [shape: f32[8,1], index: 3, kind: input, shape index: {}]
  %s4 = inlined_call_operand.vmem [shape: f32[8,72], index: 4, kind: input, shape index: {}]
  %s5 = inlined_call_operand.vmem [shape: f32[8,1], index: 5, kind: input, shape index: {}]
  %s6 = inlined_call_operand.vmem [shape: f32[8,8], index: 6, kind: input, shape index: {}]
  %s7 = inlined_call_operand.vmem [shape: f32[8,72], index: 7, kind: input, shape index: {}]
  %s8 = inlined_call_operand.vmem [shape: f32[8,1], index: 8, kind: input, shape index: {}]
  %s9 = inlined_call_operand.vmem [shape: f32[2,8,256], index: 9, kind: output, shape index: {}]
  %s10 = sld [smem:[#allocation0]]
  $region69: #{denoising_ae_forward.1} parent=0
    _
  %s12 = ssub.s32 1, %s10
  %s13 = scalar_select 0, %s12, %s10
  loop: start=0, step=1, limit=4
  $region2: #{denoising_ae_forward.1} parent=0 // loop_pre_header
    _
  $region3: #{denoising_ae_forward.1} parent=0 // loop_header
    %s15 = sphi 0, %s19
    %p16 = scmp.ge.s32.totalorder %s15, 4
    %s25 = sphi 0, %s27
    %s28 = sphi 0, %s25
    %s29 = sphi 0, %s28
    %s45 = sphi 0, %s29
    %s49 = sphi 0, %s49
    %s51 = sphi 0, %s49
    %s52 = sphi 0, %s51
    %s66 = sphi 0, %s52
    %s70 = sphi 0, %s70
    %s72 = sphi 0, %s70
    %s73 = sphi 0, %s72
    %s87 = sphi 0, %s73
    %s91 = sphi 0, %s91
    %s93 = sphi 0, %s91
    %s94 = sphi 0, %s93
    %s108 = sphi 0, %s94
    %s112 = sphi 0, %s112
    %s114 = sphi 0, %s112
    %s115 = sphi 0, %s114
    %s129 = sphi 0, %s115
    %s133 = sphi 0, %s133
    %s135 = sphi 0, %s133
    %s136 = sphi 0, %s135
    %s150 = sphi 0, %s136
    %s154 = sphi 0, %s154
    %s156 = sphi 0, %s154
    %s157 = sphi 0, %s156
    %s171 = sphi 0, %s157
    %s175 = sphi 0, %s175
    %s177 = sphi 0, %s175
    %s178 = sphi 0, %s177
    %s192 = sphi 0, %s178
    %s196 = sphi 0, %s196
    %s198 = sphi 0, %s196
    %s199 = sphi 0, %s198
    %s213 = sphi 0, %s199
    %s219 = sphi 0, %s221
    %s222 = sphi 0, %s219
    %s223 = sphi 0, %s222
    %s239 = sphi 0, %s223
  $region4: #{denoising_ae_forward.1} parent=0 // loop_header_branch
    %18 = sbr.rel (%p16) target = $region8
  $region5: #{denoising_ae_forward.1} parent=0 // loop_body
    %s20 = ssub.s32 %s15, 1
    %s21 = ssub.s32 %s15, 2
    %s22 = sadd.s32 %s15, 1
    %s23 = ssub.s32 %s15, %s22
    %p24 = scmp.eq.s32.totalorder %s23, 0
    %s26 = sadd.s32 %s25, 1
    %s27 = scalar_select %p24, %s25, %s26
    %p30 = pneg %p24
    %p31 = scmp.eq.s32.totalorder %s15, 1
    %p32 = por %p30, %p31
    %p33 = scmp.ne.s32.totalorder %s25, %s28
    %p34 = scmp.eq.s32.totalorder %s15, 0
    %p35 = por %p33, %p34
    %p36 = scmp.ne.s32.totalorder %s25, %s28
    %p37 = scmp.eq.s32.totalorder %s20, 1
    %p38 = por %p36, %p37
    %p39 = scmp.ne.s32.totalorder %s28, %s29
    %p40 = scmp.eq.s32.totalorder %s20, 0
    %p41 = por %p39, %p40
    %p42 = scmp.ne.s32.totalorder %s28, %s29
    %p43 = scmp.eq.s32.totalorder %s21, 1
    %p44 = por %p42, %p43
    %p46 = scmp.ne.s32.totalorder %s29, %s45
    %p47 = scmp.eq.s32.totalorder %s21, 0
    %p48 = por %p46, %p47
    %s50 = sadd.s32 %s49, 1
    %p53 = scmp.eq.s32.totalorder %s15, 1
    %p54 = scmp.ne.s32.totalorder %s49, %s51
    %p55 = scmp.eq.s32.totalorder %s15, 0
    %p56 = por %p54, %p55
    %p57 = scmp.ne.s32.totalorder %s49, %s51
    %p58 = scmp.eq.s32.totalorder %s20, 1
    %p59 = por %p57, %p58
    %p60 = scmp.ne.s32.totalorder %s51, %s52
    %p61 = scmp.eq.s32.totalorder %s20, 0
    %p62 = por %p60, %p61
    %p63 = scmp.ne.s32.totalorder %s51, %s52
    %p64 = scmp.eq.s32.totalorder %s21, 1
    %p65 = por %p63, %p64
    %p67 = scmp.ne.s32.totalorder %s52, %s66
    %p68 = scmp.eq.s32.totalorder %s21, 0
    %p69 = por %p67, %p68
    %s71 = sadd.s32 %s70, 1
    %p74 = scmp.eq.s32.totalorder %s15, 1
    %p75 = scmp.ne.s32.totalorder %s70, %s72
    %p76 = scmp.eq.s32.totalorder %s15, 0
    %p77 = por %p75, %p76
    %p78 = scmp.ne.s32.totalorder %s70, %s72
    %p79 = scmp.eq.s32.totalorder %s20, 1
    %p80 = por %p78, %p79
    %p81 = scmp.ne.s32.totalorder %s72, %s73
    %p82 = scmp.eq.s32.totalorder %s20, 0
    %p83 = por %p81, %p82
    %p84 = scmp.ne.s32.totalorder %s72, %s73
    %p85 = scmp.eq.s32.totalorder %s21, 1
    %p86 = por %p84, %p85
    %p88 = scmp.ne.s32.totalorder %s73, %s87
    %p89 = scmp.eq.s32.totalorder %s21, 0
    %p90 = por %p88, %p89
    %s92 = sadd.s32 %s91, 1
    %p95 = scmp.eq.s32.totalorder %s15, 1
    %p96 = scmp.ne.s32.totalorder %s91, %s93
    %p97 = scmp.eq.s32.totalorder %s15, 0
    %p98 = por %p96, %p97
    %p99 = scmp.ne.s32.totalorder %s91, %s93
    %p100 = scmp.eq.s32.totalorder %s20, 1
    %p101 = por %p99, %p100
    %p102 = scmp.ne.s32.totalorder %s93, %s94
    %p103 = scmp.eq.s32.totalorder %s20, 0
    %p104 = por %p102, %p103
    %p105 = scmp.ne.s32.totalorder %s93, %s94
    %p106 = scmp.eq.s32.totalorder %s21, 1
    %p107 = por %p105, %p106
    %p109 = scmp.ne.s32.totalorder %s94, %s108
    %p110 = scmp.eq.s32.totalorder %s21, 0
    %p111 = por %p109, %p110
    %s113 = sadd.s32 %s112, 1
    %p116 = scmp.eq.s32.totalorder %s15, 1
    %p117 = scmp.ne.s32.totalorder %s112, %s114
    %p118 = scmp.eq.s32.totalorder %s15, 0
    %p119 = por %p117, %p118
    %p120 = scmp.ne.s32.totalorder %s112, %s114
    %p121 = scmp.eq.s32.totalorder %s20, 1
    %p122 = por %p120, %p121
    %p123 = scmp.ne.s32.totalorder %s114, %s115
    %p124 = scmp.eq.s32.totalorder %s20, 0
    %p125 = por %p123, %p124
    %p126 = scmp.ne.s32.totalorder %s114, %s115
    %p127 = scmp.eq.s32.totalorder %s21, 1
    %p128 = por %p126, %p127
    %p130 = scmp.ne.s32.totalorder %s115, %s129
    %p131 = scmp.eq.s32.totalorder %s21, 0
    %p132 = por %p130, %p131
    %s134 = sadd.s32 %s133, 1
    %p137 = scmp.eq.s32.totalorder %s15, 1
    %p138 = scmp.ne.s32.totalorder %s133, %s135
    %p139 = scmp.eq.s32.totalorder %s15, 0
    %p140 = por %p138, %p139
    %p141 = scmp.ne.s32.totalorder %s133, %s135
    %p142 = scmp.eq.s32.totalorder %s20, 1
    %p143 = por %p141, %p142
    %p144 = scmp.ne.s32.totalorder %s135, %s136
    %p145 = scmp.eq.s32.totalorder %s20, 0
    %p146 = por %p144, %p145
    %p147 = scmp.ne.s32.totalorder %s135, %s136
    %p148 = scmp.eq.s32.totalorder %s21, 1
    %p149 = por %p147, %p148
    %p151 = scmp.ne.s32.totalorder %s136, %s150
    %p152 = scmp.eq.s32.totalorder %s21, 0
    %p153 = por %p151, %p152
    %s155 = sadd.s32 %s154, 1
    %p158 = scmp.eq.s32.totalorder %s15, 1
    %p159 = scmp.ne.s32.totalorder %s154, %s156
    %p160 = scmp.eq.s32.totalorder %s15, 0
    %p161 = por %p159, %p160
    %p162 = scmp.ne.s32.totalorder %s154, %s156
    %p163 = scmp.eq.s32.totalorder %s20, 1
    %p164 = por %p162, %p163
    %p165 = scmp.ne.s32.totalorder %s156, %s157
    %p166 = scmp.eq.s32.totalorder %s20, 0
    %p167 = por %p165, %p166
    %p168 = scmp.ne.s32.totalorder %s156, %s157
    %p169 = scmp.eq.s32.totalorder %s21, 1
    %p170 = por %p168, %p169
    %p172 = scmp.ne.s32.totalorder %s157, %s171
    %p173 = scmp.eq.s32.totalorder %s21, 0
    %p174 = por %p172, %p173
    %s176 = sadd.s32 %s175, 1
    %p179 = scmp.eq.s32.totalorder %s15, 1
    %p180 = scmp.ne.s32.totalorder %s175, %s177
    %p181 = scmp.eq.s32.totalorder %s15, 0
    %p182 = por %p180, %p181
    %p183 = scmp.ne.s32.totalorder %s175, %s177
    %p184 = scmp.eq.s32.totalorder %s20, 1
    %p185 = por %p183, %p184
    %p186 = scmp.ne.s32.totalorder %s177, %s178
    %p187 = scmp.eq.s32.totalorder %s20, 0
    %p188 = por %p186, %p187
    %p189 = scmp.ne.s32.totalorder %s177, %s178
    %p190 = scmp.eq.s32.totalorder %s21, 1
    %p191 = por %p189, %p190
    %p193 = scmp.ne.s32.totalorder %s178, %s192
    %p194 = scmp.eq.s32.totalorder %s21, 0
    %p195 = por %p193, %p194
    %s197 = sadd.s32 %s196, 1
    %p200 = scmp.eq.s32.totalorder %s15, 1
    %p201 = scmp.ne.s32.totalorder %s196, %s198
    %p202 = scmp.eq.s32.totalorder %s15, 0
    %p203 = por %p201, %p202
    %p204 = scmp.ne.s32.totalorder %s196, %s198
    %p205 = scmp.eq.s32.totalorder %s20, 1
    %p206 = por %p204, %p205
    %p207 = scmp.ne.s32.totalorder %s198, %s199
    %p208 = scmp.eq.s32.totalorder %s20, 0
    %p209 = por %p207, %p208
    %p210 = scmp.ne.s32.totalorder %s198, %s199
    %p211 = scmp.eq.s32.totalorder %s21, 1
    %p212 = por %p210, %p211
    %p214 = scmp.ne.s32.totalorder %s199, %s213
    %p215 = scmp.eq.s32.totalorder %s21, 0
    %p216 = por %p214, %p215
    %s217 = ssub.s32 %s15, %s22
    %p218 = scmp.eq.s32.totalorder %s217, 0
    %s220 = sadd.s32 %s219, 1
    %s221 = scalar_select %p218, %s219, %s220
    %p224 = pneg %p218
    %p225 = scmp.eq.s32.totalorder %s15, 1
    %p226 = por %p224, %p225
    %p227 = scmp.ne.s32.totalorder %s219, %s222
    %p228 = scmp.eq.s32.totalorder %s15, 0
    %p229 = por %p227, %p228
    %p230 = scmp.ne.s32.totalorder %s219, %s222
    %p231 = scmp.eq.s32.totalorder %s20, 1
    %p232 = por %p230, %p231
    %p233 = scmp.ne.s32.totalorder %s222, %s223
    %p234 = scmp.eq.s32.totalorder %s20, 0
    %p235 = por %p233, %p234
    %p236 = scmp.ne.s32.totalorder %s222, %s223
    %p237 = scmp.eq.s32.totalorder %s21, 1
    %p238 = por %p236, %p237
    %p240 = scmp.ne.s32.totalorder %s223, %s239
    %p241 = scmp.eq.s32.totalorder %s21, 0
    %p242 = por %p240, %p241
    %p243 = scmp.le.s32.totalorder 1, %s15
    %p244 = scmp.lt.s32.totalorder %s15, 3
    %p245 = pnand %p243, %p244
    %p246 = pneg %p245
    // Predicated region
    $region9: #{denoising_ae_forward.1} parent=5 // pred_check
      _
    $region10: #{denoising_ae_forward.1} parent=5 // pred_check_branch
      %248 = sbr.rel (%p245) target = $region12
    $region11: #{denoising_ae_forward.1} parent=5 // pred_region
      %s249 = ssub.s32 %s15, 1
      // Predicated region
      $region13: #{denoising_ae_forward.1} parent=11 // pred_check
        %p250 = pneg %p62
      $region14: #{denoising_ae_forward.1} parent=11 // pred_check_branch
        %252 = sbr.rel (%p250) target = $region16
      $region15: #{denoising_ae_forward.1} parent=11 // pred_region
        _
      $region16: #{denoising_ae_forward.1} parent=11 // pred_fallthru
        _
      // Predicated region
      $region17: #{denoising_ae_forward.1} parent=11 // pred_check
        %p253 = pneg %p83
      $region18: #{denoising_ae_forward.1} parent=11 // pred_check_branch
        %255 = sbr.rel (%p253) target = $region20
      $region19: #{denoising_ae_forward.1} parent=11 // pred_region
        _
      $region20: #{denoising_ae_forward.1} parent=11 // pred_fallthru
        _
      // Predicated region
      $region21: #{denoising_ae_forward.1} parent=11 // pred_check
        %p256 = pneg %p104
      $region22: #{denoising_ae_forward.1} parent=11 // pred_check_branch
        %258 = sbr.rel (%p256) target = $region24
      $region23: #{denoising_ae_forward.1} parent=11 // pred_region
        _
      $region24: #{denoising_ae_forward.1} parent=11 // pred_fallthru
        _
      // Predicated region
      $region25: #{denoising_ae_forward.1} parent=11 // pred_check
        %p259 = pneg %p125
      $region26: #{denoising_ae_forward.1} parent=11 // pred_check_branch
        %261 = sbr.rel (%p259) target = $region28
      $region27: #{denoising_ae_forward.1} parent=11 // pred_region
        _
      $region28: #{denoising_ae_forward.1} parent=11 // pred_fallthru
        _
      // Predicated region
      $region29: #{denoising_ae_forward.1} parent=11 // pred_check
        %p262 = pneg %p146
      $region30: #{denoising_ae_forward.1} parent=11 // pred_check_branch
        %264 = sbr.rel (%p262) target = $region32
      $region31: #{denoising_ae_forward.1} parent=11 // pred_region
        _
      $region32: #{denoising_ae_forward.1} parent=11 // pred_fallthru
        _
      // Predicated region
      $region33: #{denoising_ae_forward.1} parent=11 // pred_check
        %p265 = pneg %p167
      $region34: #{denoising_ae_forward.1} parent=11 // pred_check_branch
        %267 = sbr.rel (%p265) target = $region36
      $region35: #{denoising_ae_forward.1} parent=11 // pred_region
        _
      $region36: #{denoising_ae_forward.1} parent=11 // pred_fallthru
        _
      // Predicated region
      $region37: #{denoising_ae_forward.1} parent=11 // pred_check
        %p268 = pneg %p188
      $region38: #{denoising_ae_forward.1} parent=11 // pred_check_branch
        %270 = sbr.rel (%p268) target = $region40
      $region39: #{denoising_ae_forward.1} parent=11 // pred_region
        _
      $region40: #{denoising_ae_forward.1} parent=11 // pred_fallthru
        _
      // Predicated region
      $region41: #{denoising_ae_forward.1} parent=11 // pred_check
        %p271 = pneg %p209
      $region42: #{denoising_ae_forward.1} parent=11 // pred_check_branch
        %273 = sbr.rel (%p271) target = $region44
      $region43: #{denoising_ae_forward.1} parent=11 // pred_region
        _
      $region44: #{denoising_ae_forward.1} parent=11 // pred_fallthru
        _
    $region12: #{denoising_ae_forward.1} parent=5 // pred_fallthru
      _
    %p274 = scmp.lt.s32.totalorder %s15, 2
    // Predicated region
    $region45: #{denoising_ae_forward.1} parent=5 // pred_check
      %p275 = pneg %p274
    $region46: #{denoising_ae_forward.1} parent=5 // pred_check_branch
      %277 = sbr.rel (%p275) target = $region48
    $region47: #{denoising_ae_forward.1} parent=5 // pred_region
      // Predicated region
      $region49: #{denoising_ae_forward.1} parent=47 // pred_check
        %p278 = pneg %p35
      $region50: #{denoising_ae_forward.1} parent=47 // pred_check_branch
        %280 = sbr.rel (%p278) target = $region52
      $region51: #{denoising_ae_forward.1} parent=47 // pred_region
        %p281 = scmp.lt.s32.totalorder %s15, 1
        %s282 = scalar_select %p281, %s15, 1
        %s283 = smul.addr %s282, 2
        %s284 = smul.addr %s283, 8
        %s285 = scalar_lea.vmem %s0, %s284
      $region52: #{denoising_ae_forward.1} parent=47 // pred_fallthru
        _
    $region48: #{denoising_ae_forward.1} parent=5 // pred_fallthru
      _
    %p286 = scmp.le.s32.totalorder 1, %s15
    %p287 = scmp.lt.s32.totalorder %s15, 3
    %p288 = pnand %p286, %p287
    %p289 = pneg %p288
    // Predicated region
    $region53: #{denoising_ae_forward.1} parent=5 // pred_check
      _
    $region54: #{denoising_ae_forward.1} parent=5 // pred_check_branch
      %291 = sbr.rel (%p288) target = $region56
    $region55: #{denoising_ae_forward.1} parent=5 // pred_region
      %s292 = ssub.s32 %s15, 1
      %p293 = scmp.lt.s32.totalorder %s20, 1
      %s294 = scalar_select %p293, %s20, 1
      %s295 = smul.addr %s294, 2
      %s296 = smul.addr %s295, 8
      %s297 = scalar_lea.vmem %s0, %s296
      %p298 = pneg %p41
      %p299 = pneg %p38
      %p300 = pneg %p62
      %p301 = pneg %p59
      %p302 = pneg %p83
      %p303 = pneg %p80
      %p304 = pneg %p104
      %p305 = pneg %p101
      %p306 = pneg %p125
      %p307 = pneg %p122
      %p308 = pneg %p146
      %p309 = pneg %p143
      %p310 = pneg %p167
      %p311 = pneg %p164
      %p312 = pneg %p188
      %p313 = pneg %p185
      %p314 = pneg %p209
      %p315 = pneg %p206
      %p316 = pneg %p235
      %p317 = pneg %p232
      %p318 = scmp.lt.s32.totalorder %s20, 1
      %s319 = scalar_select %p318, %s20, 1
      %s320 = smul.addr %s319, 2
      %s321 = smul.addr %s320, 8
      %s322 = scalar_lea.vmem %s9, %s321
      %p323 = scmp.lt.s32.totalorder %s20, 1
      %s324 = scalar_select %p323, %s20, 1
      %s325 = smul.addr %s324, 2
      %s326 = smul.addr %s325, 8
      %s327 = scalar_lea.vmem %s0, %s326
      %p328 = scmp.lt.s32.totalorder %s20, 1
      %s329 = scalar_select %p328, %s20, 1
      %s330 = smul.addr %s329, 2
      %s331 = smul.addr %s330, 8
      %s332 = scalar_lea.vmem %s9, %s331
      %v333 = vld [vmem:[%s327] sm:$0xff]
      %v334 = vld [vmem:[%s327 + $0x8] sm:$0xff]
      %v335 = vld [vmem:[%s2] sm:$0xff]
      %v336 = vld [vmem:[%s3] sm:$0xff]
      %v337 = vld [vmem:[%s1] sm:$0xff]
      %v338 = vld [vmem:[%s1 + $0x8] sm:$0xff]
      %v339 = vld [vmem:[%s1 + $0x10] sm:$0xff]
      %v340 = vld [vmem:[%s1 + $0x18] sm:$0xff]
      %v341 = vld [vmem:[%s1 + $0x20] sm:$0xff]
      %v342 = vld [vmem:[%s1 + $0x28] sm:$0xff]
      %v343 = vld [vmem:[%s1 + $0x30] sm:$0xff]
      %v344 = vld [vmem:[%s1 + $0x38] sm:$0xff]
      %v345 = vld [vmem:[%s1 + $0x40] sm:$0xff]
      %v346 = vld [vmem:[%s1 + $0x48] sm:$0xff]
      %v347 = vld [vmem:[%s1 + $0x50] sm:$0xff]
      %v348 = vld [vmem:[%s1 + $0x58] sm:$0xff]
      %v349 = vld [vmem:[%s1 + $0x60] sm:$0xff]
      %v350 = vld [vmem:[%s1 + $0x68] sm:$0xff]
      %v351 = vld [vmem:[%s1 + $0x70] sm:$0xff]
      %v352 = vld [vmem:[%s1 + $0x78] sm:$0xff]
      %v353 = vld [vmem:[%s1 + $0x80] sm:$0xff]
      %v354 = vld [vmem:[%s1 + $0x88] sm:$0xff]
      %v355 = vld [vmem:[%s1 + $0x90] sm:$0xff]
      %v356 = vld [vmem:[%s1 + $0x98] sm:$0xff]
      %v357 = vld [vmem:[%s1 + $0xa0] sm:$0xff]
      %v358 = vld [vmem:[%s1 + $0xa8] sm:$0xff]
      %v359 = vld [vmem:[%s1 + $0xb0] sm:$0xff]
      %v360 = vld [vmem:[%s1 + $0xb8] sm:$0xff]
      %v361 = vld [vmem:[%s1 + $0xc0] sm:$0xff]
      %v362 = vld [vmem:[%s1 + $0xc8] sm:$0xff]
      %v363 = vld [vmem:[%s1 + $0xd0] sm:$0xff]
      %v364 = vld [vmem:[%s1 + $0xd8] sm:$0xff]
      %v365 = vld [vmem:[%s1 + $0xe0] sm:$0xff]
      %v366 = vld [vmem:[%s1 + $0xe8] sm:$0xff]
      %v367 = vld [vmem:[%s1 + $0xf0] sm:$0xff]
      %v368 = vld [vmem:[%s1 + $0xf8] sm:$0xff]
      %v369 = vld [vmem:[%s1 + $0x100] sm:$0xff]
      %v370 = vld [vmem:[%s1 + $0x108] sm:$0xff]
      %v371 = vld [vmem:[%s1 + $0x110] sm:$0xff]
      %v372 = vld [vmem:[%s1 + $0x118] sm:$0xff]
      %v373 = vld [vmem:[%s1 + $0x120] sm:$0xff]
      %v374 = vld [vmem:[%s1 + $0x128] sm:$0xff]
      %v375 = vld [vmem:[%s1 + $0x130] sm:$0xff]
      %v376 = vld [vmem:[%s1 + $0x138] sm:$0xff]
      %v377 = vld [vmem:[%s1 + $0x140] sm:$0xff]
      %v378 = vld [vmem:[%s1 + $0x148] sm:$0xff]
      %v379 = vld [vmem:[%s1 + $0x150] sm:$0xff]
      %v380 = vld [vmem:[%s1 + $0x158] sm:$0xff]
      %v381 = vld [vmem:[%s1 + $0x160] sm:$0xff]
      %v382 = vld [vmem:[%s1 + $0x168] sm:$0xff]
      %v383 = vld [vmem:[%s1 + $0x170] sm:$0xff]
      %v384 = vld [vmem:[%s1 + $0x178] sm:$0xff]
      %v385 = vld [vmem:[%s1 + $0x180] sm:$0xff]
      %v386 = vld [vmem:[%s1 + $0x188] sm:$0xff]
      %v387 = vld [vmem:[%s1 + $0x190] sm:$0xff]
      %v388 = vld [vmem:[%s1 + $0x198] sm:$0xff]
      %v389 = vld [vmem:[%s1 + $0x1a0] sm:$0xff]
      %v390 = vld [vmem:[%s1 + $0x1a8] sm:$0xff]
      %v391 = vld [vmem:[%s1 + $0x1b0] sm:$0xff]
      %v392 = vld [vmem:[%s1 + $0x1b8] sm:$0xff]
      %v393 = vld [vmem:[%s1 + $0x1c0] sm:$0xff]
      %v394 = vld [vmem:[%s1 + $0x1c8] sm:$0xff]
      %v395 = vld [vmem:[%s1 + $0x1d0] sm:$0xff]
      %v396 = vld [vmem:[%s1 + $0x1d8] sm:$0xff]
      %v397 = vld [vmem:[%s1 + $0x1e0] sm:$0xff]
      %v398 = vld [vmem:[%s1 + $0x1e8] sm:$0xff]
      %v399 = vld [vmem:[%s1 + $0x1f0] sm:$0xff]
      %v400 = vld [vmem:[%s1 + $0x1f8] sm:$0xff]
      %401 = vmatprep.subr.mxu0 %v338
      %402 = vmatpush1.msra.mxu0 %v337
      %403 = vmatprep.subr.mxu0 %v340
      %404 = vmatpush1.msra.mxu0 %v339
      %405 = vmatprep.subr.mxu0 %v342
      %406 = vmatpush1.msra.mxu0 %v341
      %407 = vmatprep.subr.mxu0 %v344
      %408 = vmatpush1.msra.mxu0 %v343
      %409 = vmatprep.subr.mxu0 %v346
      %410 = vmatpush1.msra.mxu0 %v345
      %411 = vmatprep.subr.mxu0 %v348
      %412 = vmatpush1.msra.mxu0 %v347
      %413 = vmatprep.subr.mxu0 %v350
      %414 = vmatpush1.msra.mxu0 %v349
      %415 = vmatprep.subr.mxu0 %v352
      %416 = vmatpush1.msra.mxu0 %v351
      %417 = vmatprep.subr.mxu0 %v354
      %418 = vmatpush1.msra.mxu0 %v353
      %419 = vmatprep.subr.mxu0 %v356
      %420 = vmatpush1.msra.mxu0 %v355
      %421 = vmatprep.subr.mxu0 %v358
      %422 = vmatpush1.msra.mxu0 %v357
      %423 = vmatprep.subr.mxu0 %v360
      %424 = vmatpush1.msra.mxu0 %v359
      %425 = vmatprep.subr.mxu0 %v362
      %426 = vmatpush1.msra.mxu0 %v361
      %427 = vmatprep.subr.mxu0 %v364
      %428 = vmatpush1.msra.mxu0 %v363
      %429 = vmatprep.subr.mxu0 %v366
      %430 = vmatpush1.msra.mxu0 %v365
      %431 = vmatprep.subr.mxu0 %v368
      %432 = vmatpush1.msra.mxu0 %v367
      %433 = vmatprep.subr.mxu0 %v370
      %434 = vmatpush1.msra.mxu0 %v369
      %435 = vmatprep.subr.mxu0 %v372
      %436 = vmatpush1.msra.mxu0 %v371
      %437 = vmatprep.subr.mxu0 %v374
      %438 = vmatpush1.msra.mxu0 %v373
      %439 = vmatprep.subr.mxu0 %v376
      %440 = vmatpush1.msra.mxu0 %v375
      %441 = vmatprep.subr.mxu0 %v378
      %442 = vmatpush1.msra.mxu0 %v377
      %443 = vmatprep.subr.mxu0 %v380
      %444 = vmatpush1.msra.mxu0 %v379
      %445 = vmatprep.subr.mxu0 %v382
      %446 = vmatpush1.msra.mxu0 %v381
      %447 = vmatprep.subr.mxu0 %v384
      %448 = vmatpush1.msra.mxu0 %v383
      %449 = vmatprep.subr.mxu0 %v386
      %450 = vmatpush1.msra.mxu0 %v385
      %451 = vmatprep.subr.mxu0 %v388
      %452 = vmatpush1.msra.mxu0 %v387
      %453 = vmatprep.subr.mxu0 %v390
      %454 = vmatpush1.msra.mxu0 %v389
      %455 = vmatprep.subr.mxu0 %v392
      %456 = vmatpush1.msra.mxu0 %v391
      %457 = vmatprep.subr.mxu0 %v394
      %458 = vmatpush1.msra.mxu0 %v393
      %459 = vmatprep.subr.mxu0 %v396
      %460 = vmatpush1.msra.mxu0 %v395
      %461 = vmatprep.subr.mxu0 %v398
      %462 = vmatpush1.msra.mxu0 %v397
      %463 = vmatprep.subr.mxu0 %v400
      %464 = vmatpush1.msra.mxu0 %v399
      %465 = vmatprep.mubr.f32.mxu0 %v334
      %466 = vmatmul.mubr.f32.gmra.mrb[0].mxu0 %v333
      %v467 = vpop.f32.mrb[0].mxu0
      %v468 = vadd.f32 0.0, %v467
      %v469 = vpop.f32.mrb[0].mxu0
      %v470 = vadd.f32 0.0, %v469
      %471 = vdwg.mxu0
      %s472 = scalar_lea.vmem %s1, 512
      %v473 = vld [vmem:[%s472] sm:$0xff]
      %v474 = vld [vmem:[%s472 + $0x8] sm:$0xff]
      %v475 = vld [vmem:[%s472 + $0x10] sm:$0xff]
      %v476 = vld [vmem:[%s472 + $0x18] sm:$0xff]
      %v477 = vld [vmem:[%s472 + $0x20] sm:$0xff]
      %v478 = vld [vmem:[%s472 + $0x28] sm:$0xff]
      %v479 = vld [vmem:[%s472 + $0x30] sm:$0xff]
      %v480 = vld [vmem:[%s472 + $0x38] sm:$0xff]
      %v481 = vld [vmem:[%s472 + $0x40] sm:$0xff]
      %v482 = vld [vmem:[%s472 + $0x48] sm:$0xff]
      %v483 = vld [vmem:[%s472 + $0x50] sm:$0xff]
      %v484 = vld [vmem:[%s472 + $0x58] sm:$0xff]
      %v485 = vld [vmem:[%s472 + $0x60] sm:$0xff]
      %v486 = vld [vmem:[%s472 + $0x68] sm:$0xff]
      %v487 = vld [vmem:[%s472 + $0x70] sm:$0xff]
      %v488 = vld [vmem:[%s472 + $0x78] sm:$0xff]
      %v489 = vld [vmem:[%s472 + $0x80] sm:$0xff]
      %v490 = vld [vmem:[%s472 + $0x88] sm:$0xff]
      %v491 = vld [vmem:[%s472 + $0x90] sm:$0xff]
      %v492 = vld [vmem:[%s472 + $0x98] sm:$0xff]
      %v493 = vld [vmem:[%s472 + $0xa0] sm:$0xff]
      %v494 = vld [vmem:[%s472 + $0xa8] sm:$0xff]
      %v495 = vld [vmem:[%s472 + $0xb0] sm:$0xff]
      %v496 = vld [vmem:[%s472 + $0xb8] sm:$0xff]
      %v497 = vld [vmem:[%s472 + $0xc0] sm:$0xff]
      %v498 = vld [vmem:[%s472 + $0xc8] sm:$0xff]
      %v499 = vld [vmem:[%s472 + $0xd0] sm:$0xff]
      %v500 = vld [vmem:[%s472 + $0xd8] sm:$0xff]
      %v501 = vld [vmem:[%s472 + $0xe0] sm:$0xff]
      %v502 = vld [vmem:[%s472 + $0xe8] sm:$0xff]
      %v503 = vld [vmem:[%s472 + $0xf0] sm:$0xff]
      %v504 = vld [vmem:[%s472 + $0xf8] sm:$0xff]
      %v505 = vld [vmem:[%s472 + $0x100] sm:$0xff]
      %v506 = vld [vmem:[%s472 + $0x108] sm:$0xff]
      %v507 = vld [vmem:[%s472 + $0x110] sm:$0xff]
      %v508 = vld [vmem:[%s472 + $0x118] sm:$0xff]
      %v509 = vld [vmem:[%s472 + $0x120] sm:$0xff]
      %v510 = vld [vmem:[%s472 + $0x128] sm:$0xff]
      %v511 = vld [vmem:[%s472 + $0x130] sm:$0xff]
      %v512 = vld [vmem:[%s472 + $0x138] sm:$0xff]
      %v513 = vld [vmem:[%s472 + $0x140] sm:$0xff]
      %v514 = vld [vmem:[%s472 + $0x148] sm:$0xff]
      %v515 = vld [vmem:[%s472 + $0x150] sm:$0xff]
      %v516 = vld [vmem:[%s472 + $0x158] sm:$0xff]
      %v517 = vld [vmem:[%s472 + $0x160] sm:$0xff]
      %v518 = vld [vmem:[%s472 + $0x168] sm:$0xff]
      %v519 = vld [vmem:[%s472 + $0x170] sm:$0xff]
      %v520 = vld [vmem:[%s472 + $0x178] sm:$0xff]
      %v521 = vld [vmem:[%s472 + $0x180] sm:$0xff]
      %v522 = vld [vmem:[%s472 + $0x188] sm:$0xff]
      %v523 = vld [vmem:[%s472 + $0x190] sm:$0xff]
      %v524 = vld [vmem:[%s472 + $0x198] sm:$0xff]
      %v525 = vld [vmem:[%s472 + $0x1a0] sm:$0xff]
      %v526 = vld [vmem:[%s472 + $0x1a8] sm:$0xff]
      %v527 = vld [vmem:[%s472 + $0x1b0] sm:$0xff]
      %v528 = vld [vmem:[%s472 + $0x1b8] sm:$0xff]
      %v529 = vld [vmem:[%s472 + $0x1c0] sm:$0xff]
      %v530 = vld [vmem:[%s472 + $0x1c8] sm:$0xff]
      %v531 = vld [vmem:[%s472 + $0x1d0] sm:$0xff]
      %v532 = vld [vmem:[%s472 + $0x1d8] sm:$0xff]
      %v533 = vld [vmem:[%s472 + $0x1e0] sm:$0xff]
      %v534 = vld [vmem:[%s472 + $0x1e8] sm:$0xff]
      %v535 = vld [vmem:[%s472 + $0x1f0] sm:$0xff]
      %v536 = vld [vmem:[%s472 + $0x1f8] sm:$0xff]
      %537 = vmatprep.subr.mxu0 %v474
      %538 = vmatpush1.msra.mxu0 %v473
      %539 = vmatprep.subr.mxu0 %v476
      %540 = vmatpush1.msra.mxu0 %v475
      %541 = vmatprep.subr.mxu0 %v478
      %542 = vmatpush1.msra.mxu0 %v477
      %543 = vmatprep.subr.mxu0 %v480
      %544 = vmatpush1.msra.mxu0 %v479
      %545 = vmatprep.subr.mxu0 %v482
      %546 = vmatpush1.msra.mxu0 %v481
      %547 = vmatprep.subr.mxu0 %v484
      %548 = vmatpush1.msra.mxu0 %v483
      %549 = vmatprep.subr.mxu0 %v486
      %550 = vmatpush1.msra.mxu0 %v485
      %551 = vmatprep.subr.mxu0 %v488
      %552 = vmatpush1.msra.mxu0 %v487
      %553 = vmatprep.subr.mxu0 %v490
      %554 = vmatpush1.msra.mxu0 %v489
      %555 = vmatprep.subr.mxu0 %v492
      %556 = vmatpush1.msra.mxu0 %v491
      %557 = vmatprep.subr.mxu0 %v494
      %558 = vmatpush1.msra.mxu0 %v493
      %559 = vmatprep.subr.mxu0 %v496
      %560 = vmatpush1.msra.mxu0 %v495
      %561 = vmatprep.subr.mxu0 %v498
      %562 = vmatpush1.msra.mxu0 %v497
      %563 = vmatprep.subr.mxu0 %v500
      %564 = vmatpush1.msra.mxu0 %v499
      %565 = vmatprep.subr.mxu0 %v502
      %566 = vmatpush1.msra.mxu0 %v501
      %567 = vmatprep.subr.mxu0 %v504
      %568 = vmatpush1.msra.mxu0 %v503
      %569 = vmatprep.subr.mxu0 %v506
      %570 = vmatpush1.msra.mxu0 %v505
      %571 = vmatprep.subr.mxu0 %v508
      %572 = vmatpush1.msra.mxu0 %v507
      %573 = vmatprep.subr.mxu0 %v510
      %574 = vmatpush1.msra.mxu0 %v509
      %575 = vmatprep.subr.mxu0 %v512
      %576 = vmatpush1.msra.mxu0 %v511
      %577 = vmatprep.subr.mxu0 %v514
      %578 = vmatpush1.msra.mxu0 %v513
      %579 = vmatprep.subr.mxu0 %v516
      %580 = vmatpush1.msra.mxu0 %v515
      %581 = vmatprep.subr.mxu0 %v518
      %582 = vmatpush1.msra.mxu0 %v517
      %583 = vmatprep.subr.mxu0 %v520
      %584 = vmatpush1.msra.mxu0 %v519
      %585 = vmatprep.subr.mxu0 %v522
      %586 = vmatpush1.msra.mxu0 %v521
      %587 = vmatprep.subr.mxu0 %v524
      %588 = vmatpush1.msra.mxu0 %v523
      %589 = vmatprep.subr.mxu0 %v526
      %590 = vmatpush1.msra.mxu0 %v525
      %591 = vmatprep.subr.mxu0 %v528
      %592 = vmatpush1.msra.mxu0 %v527
      %593 = vmatprep.subr.mxu0 %v530
      %594 = vmatpush1.msra.mxu0 %v529
      %595 = vmatprep.subr.mxu0 %v532
      %596 = vmatpush1.msra.mxu0 %v531
      %597 = vmatprep.subr.mxu0 %v534
      %598 = vmatpush1.msra.mxu0 %v533
      %599 = vmatprep.subr.mxu0 %v536
      %600 = vmatpush1.msra.mxu0 %v535
      %601 = vmatprep.mubr.f32.mxu0 %v334
      %602 = vmatmul.mubr.f32.gmra.mrb[0].mxu0 %v333
      %v603 = vpop.f32.mrb[0].mxu0
      %v604 = vadd.f32 0.0, %v603
      %v605 = vpop.f32.mrb[0].mxu0
      %v606 = vadd.f32 0.0, %v605
      %607 = vdwg.mxu0
      %s608 = scalar_lea.vmem %s1, 1024
      %v609 = vld [vmem:[%s608] sm:$0xff]
      %v610 = vld [vmem:[%s608 + $0x8] sm:$0xff]
      %v611 = vld [vmem:[%s608 + $0x10] sm:$0xff]
      %v612 = vld [vmem:[%s608 + $0x18] sm:$0xff]
      %v613 = vld [vmem:[%s608 + $0x20] sm:$0xff]
      %v614 = vld [vmem:[%s608 + $0x28] sm:$0xff]
      %v615 = vld [vmem:[%s608 + $0x30] sm:$0xff]
      %v616 = vld [vmem:[%s608 + $0x38] sm:$0xff]
      %v617 = vld [vmem:[%s608 + $0x40] sm:$0xff]
      %v618 = vld [vmem:[%s608 + $0x48] sm:$0xff]
      %v619 = vld [vmem:[%s608 + $0x50] sm:$0xff]
      %v620 = vld [vmem:[%s608 + $0x58] sm:$0xff]
      %v621 = vld [vmem:[%s608 + $0x60] sm:$0xff]
      %v622 = vld [vmem:[%s608 + $0x68] sm:$0xff]
      %v623 = vld [vmem:[%s608 + $0x70] sm:$0xff]
      %v624 = vld [vmem:[%s608 + $0x78] sm:$0xff]
      %v625 = vld [vmem:[%s608 + $0x80] sm:$0xff]
      %v626 = vld [vmem:[%s608 + $0x88] sm:$0xff]
      %v627 = vld [vmem:[%s608 + $0x90] sm:$0xff]
      %v628 = vld [vmem:[%s608 + $0x98] sm:$0xff]
      %v629 = vld [vmem:[%s608 + $0xa0] sm:$0xff]
      %v630 = vld [vmem:[%s608 + $0xa8] sm:$0xff]
      %v631 = vld [vmem:[%s608 + $0xb0] sm:$0xff]
      %v632 = vld [vmem:[%s608 + $0xb8] sm:$0xff]
      %v633 = vld [vmem:[%s608 + $0xc0] sm:$0xff]
      %v634 = vld [vmem:[%s608 + $0xc8] sm:$0xff]
      %v635 = vld [vmem:[%s608 + $0xd0] sm:$0xff]
      %v636 = vld [vmem:[%s608 + $0xd8] sm:$0xff]
      %v637 = vld [vmem:[%s608 + $0xe0] sm:$0xff]
      %v638 = vld [vmem:[%s608 + $0xe8] sm:$0xff]
      %v639 = vld [vmem:[%s608 + $0xf0] sm:$0xff]
      %v640 = vld [vmem:[%s608 + $0xf8] sm:$0xff]
      %v641 = vld [vmem:[%s608 + $0x100] sm:$0xff]
      %v642 = vld [vmem:[%s608 + $0x108] sm:$0xff]
      %v643 = vld [vmem:[%s608 + $0x110] sm:$0xff]
      %v644 = vld [vmem:[%s608 + $0x118] sm:$0xff]
      %v645 = vld [vmem:[%s608 + $0x120] sm:$0xff]
      %v646 = vld [vmem:[%s608 + $0x128] sm:$0xff]
      %v647 = vld [vmem:[%s608 + $0x130] sm:$0xff]
      %v648 = vld [vmem:[%s608 + $0x138] sm:$0xff]
      %v649 = vld [vmem:[%s608 + $0x140] sm:$0xff]
      %v650 = vld [vmem:[%s608 + $0x148] sm:$0xff]
      %v651 = vld [vmem:[%s608 + $0x150] sm:$0xff]
      %v652 = vld [vmem:[%s608 + $0x158] sm:$0xff]
      %v653 = vld [vmem:[%s608 + $0x160] sm:$0xff]
      %v654 = vld [vmem:[%s608 + $0x168] sm:$0xff]
      %v655 = vld [vmem:[%s608 + $0x170] sm:$0xff]
      %v656 = vld [vmem:[%s608 + $0x178] sm:$0xff]
      %v657 = vld [vmem:[%s608 + $0x180] sm:$0xff]
      %v658 = vld [vmem:[%s608 + $0x188] sm:$0xff]
      %v659 = vld [vmem:[%s608 + $0x190] sm:$0xff]
      %v660 = vld [vmem:[%s608 + $0x198] sm:$0xff]
      %v661 = vld [vmem:[%s608 + $0x1a0] sm:$0xff]
      %v662 = vld [vmem:[%s608 + $0x1a8] sm:$0xff]
      %v663 = vld [vmem:[%s608 + $0x1b0] sm:$0xff]
      %v664 = vld [vmem:[%s608 + $0x1b8] sm:$0xff]
      %v665 = vld [vmem:[%s608 + $0x1c0] sm:$0xff]
      %v666 = vld [vmem:[%s608 + $0x1c8] sm:$0xff]
      %v667 = vld [vmem:[%s608 + $0x1d0] sm:$0xff]
      %v668 = vld [vmem:[%s608 + $0x1d8] sm:$0xff]
      %v669 = vld [vmem:[%s608 + $0x1e0] sm:$0xff]
      %v670 = vld [vmem:[%s608 + $0x1e8] sm:$0xff]
      %v671 = vld [vmem:[%s608 + $0x1f0] sm:$0xff]
      %v672 = vld [vmem:[%s608 + $0x1f8] sm:$0xff]
      %673 = vmatprep.subr.mxu0 %v610
      %674 = vmatpush1.msra.mxu0 %v609
      %675 = vmatprep.subr.mxu0 %v612
      %676 = vmatpush1.msra.mxu0 %v611
      %677 = vmatprep.subr.mxu0 %v614
      %678 = vmatpush1.msra.mxu0 %v613
      %679 = vmatprep.subr.mxu0 %v616
      %680 = vmatpush1.msra.mxu0 %v615
      %681 = vmatprep.subr.mxu0 %v618
      %682 = vmatpush1.msra.mxu0 %v617
      %683 = vmatprep.subr.mxu0 %v620
      %684 = vmatpush1.msra.mxu0 %v619
      %685 = vmatprep.subr.mxu0 %v622
      %686 = vmatpush1.msra.mxu0 %v621
      %687 = vmatprep.subr.mxu0 %v624
      %688 = vmatpush1.msra.mxu0 %v623
      %689 = vmatprep.subr.mxu0 %v626
      %690 = vmatpush1.msra.mxu0 %v625
      %691 = vmatprep.subr.mxu0 %v628
      %692 = vmatpush1.msra.mxu0 %v627
      %693 = vmatprep.subr.mxu0 %v630
      %694 = vmatpush1.msra.mxu0 %v629
      %695 = vmatprep.subr.mxu0 %v632
      %696 = vmatpush1.msra.mxu0 %v631
      %697 = vmatprep.subr.mxu0 %v634
      %698 = vmatpush1.msra.mxu0 %v633
      %699 = vmatprep.subr.mxu0 %v636
      %700 = vmatpush1.msra.mxu0 %v635
      %701 = vmatprep.subr.mxu0 %v638
      %702 = vmatpush1.msra.mxu0 %v637
      %703 = vmatprep.subr.mxu0 %v640
      %704 = vmatpush1.msra.mxu0 %v639
      %705 = vmatprep.subr.mxu0 %v642
      %706 = vmatpush1.msra.mxu0 %v641
      %707 = vmatprep.subr.mxu0 %v644
      %708 = vmatpush1.msra.mxu0 %v643
      %709 = vmatprep.subr.mxu0 %v646
      %710 = vmatpush1.msra.mxu0 %v645
      %711 = vmatprep.subr.mxu0 %v648
      %712 = vmatpush1.msra.mxu0 %v647
      %713 = vmatprep.subr.mxu0 %v650
      %714 = vmatpush1.msra.mxu0 %v649
      %715 = vmatprep.subr.mxu0 %v652
      %716 = vmatpush1.msra.mxu0 %v651
      %717 = vmatprep.subr.mxu0 %v654
      %718 = vmatpush1.msra.mxu0 %v653
      %719 = vmatprep.subr.mxu0 %v656
      %720 = vmatpush1.msra.mxu0 %v655
      %721 = vmatprep.subr.mxu0 %v658
      %722 = vmatpush1.msra.mxu0 %v657
      %723 = vmatprep.subr.mxu0 %v660
      %724 = vmatpush1.msra.mxu0 %v659
      %725 = vmatprep.subr.mxu0 %v662
      %726 = vmatpush1.msra.mxu0 %v661
      %727 = vmatprep.subr.mxu0 %v664
      %728 = vmatpush1.msra.mxu0 %v663
      %729 = vmatprep.subr.mxu0 %v666
      %730 = vmatpush1.msra.mxu0 %v665
      %731 = vmatprep.subr.mxu0 %v668
      %732 = vmatpush1.msra.mxu0 %v667
      %733 = vmatprep.subr.mxu0 %v670
      %734 = vmatpush1.msra.mxu0 %v669
      %735 = vmatprep.subr.mxu0 %v672
      %736 = vmatpush1.msra.mxu0 %v671
      %737 = vmatprep.mubr.f32.mxu0 %v334
      %738 = vmatmul.mubr.f32.gmra.mrb[0].mxu0 %v333
      %v739 = vpop.f32.mrb[0].mxu0
      %v740 = vadd.f32 0.0, %v739
      %v741 = vpop.f32.mrb[0].mxu0
      %v742 = vadd.f32 0.0, %v741
      %743 = vdwg.mxu0
      %s744 = scalar_lea.vmem %s1, 1536
      %v745 = vld [vmem:[%s744] sm:$0xff]
      %v746 = vld [vmem:[%s744 + $0x8] sm:$0xff]
      %v747 = vld [vmem:[%s744 + $0x10] sm:$0xff]
      %v748 = vld [vmem:[%s744 + $0x18] sm:$0xff]
      %v749 = vld [vmem:[%s744 + $0x20] sm:$0xff]
      %v750 = vld [vmem:[%s744 + $0x28] sm:$0xff]
      %v751 = vld [vmem:[%s744 + $0x30] sm:$0xff]
      %v752 = vld [vmem:[%s744 + $0x38] sm:$0xff]
      %v753 = vld [vmem:[%s744 + $0x40] sm:$0xff]
      %v754 = vld [vmem:[%s744 + $0x48] sm:$0xff]
      %v755 = vld [vmem:[%s744 + $0x50] sm:$0xff]
      %v756 = vld [vmem:[%s744 + $0x58] sm:$0xff]
      %v757 = vld [vmem:[%s744 + $0x60] sm:$0xff]
      %v758 = vld [vmem:[%s744 + $0x68] sm:$0xff]
      %v759 = vld [vmem:[%s744 + $0x70] sm:$0xff]
      %v760 = vld [vmem:[%s744 + $0x78] sm:$0xff]
      %v761 = vld [vmem:[%s744 + $0x80] sm:$0xff]
      %v762 = vld [vmem:[%s744 + $0x88] sm:$0xff]
      %v763 = vld [vmem:[%s744 + $0x90] sm:$0xff]
      %v764 = vld [vmem:[%s744 + $0x98] sm:$0xff]
      %v765 = vld [vmem:[%s744 + $0xa0] sm:$0xff]
      %v766 = vld [vmem:[%s744 + $0xa8] sm:$0xff]
      %v767 = vld [vmem:[%s744 + $0xb0] sm:$0xff]
      %v768 = vld [vmem:[%s744 + $0xb8] sm:$0xff]
      %v769 = vld [vmem:[%s744 + $0xc0] sm:$0xff]
      %v770 = vld [vmem:[%s744 + $0xc8] sm:$0xff]
      %v771 = vld [vmem:[%s744 + $0xd0] sm:$0xff]
      %v772 = vld [vmem:[%s744 + $0xd8] sm:$0xff]
      %v773 = vld [vmem:[%s744 + $0xe0] sm:$0xff]
      %v774 = vld [vmem:[%s744 + $0xe8] sm:$0xff]
      %v775 = vld [vmem:[%s744 + $0xf0] sm:$0xff]
      %v776 = vld [vmem:[%s744 + $0xf8] sm:$0xff]
      %v777 = vld [vmem:[%s744 + $0x100] sm:$0xff]
      %v778 = vld [vmem:[%s744 + $0x108] sm:$0xff]
      %v779 = vld [vmem:[%s744 + $0x110] sm:$0xff]
      %v780 = vld [vmem:[%s744 + $0x118] sm:$0xff]
      %v781 = vld [vmem:[%s744 + $0x120] sm:$0xff]
      %v782 = vld [vmem:[%s744 + $0x128] sm:$0xff]
      %v783 = vld [vmem:[%s744 + $0x130] sm:$0xff]
      %v784 = vld [vmem:[%s744 + $0x138] sm:$0xff]
      %v785 = vld [vmem:[%s744 + $0x140] sm:$0xff]
      %v786 = vld [vmem:[%s744 + $0x148] sm:$0xff]
      %v787 = vld [vmem:[%s744 + $0x150] sm:$0xff]
      %v788 = vld [vmem:[%s744 + $0x158] sm:$0xff]
      %v789 = vld [vmem:[%s744 + $0x160] sm:$0xff]
      %v790 = vld [vmem:[%s744 + $0x168] sm:$0xff]
      %v791 = vld [vmem:[%s744 + $0x170] sm:$0xff]
      %v792 = vld [vmem:[%s744 + $0x178] sm:$0xff]
      %v793 = vld [vmem:[%s744 + $0x180] sm:$0xff]
      %v794 = vld [vmem:[%s744 + $0x188] sm:$0xff]
      %v795 = vld [vmem:[%s744 + $0x190] sm:$0xff]
      %v796 = vld [vmem:[%s744 + $0x198] sm:$0xff]
      %v797 = vld [vmem:[%s744 + $0x1a0] sm:$0xff]
      %v798 = vld [vmem:[%s744 + $0x1a8] sm:$0xff]
      %v799 = vld [vmem:[%s744 + $0x1b0] sm:$0xff]
      %v800 = vld [vmem:[%s744 + $0x1b8] sm:$0xff]
      %v801 = vld [vmem:[%s744 + $0x1c0] sm:$0xff]
      %v802 = vld [vmem:[%s744 + $0x1c8] sm:$0xff]
      %v803 = vld [vmem:[%s744 + $0x1d0] sm:$0xff]
      %v804 = vld [vmem:[%s744 + $0x1d8] sm:$0xff]
      %v805 = vld [vmem:[%s744 + $0x1e0] sm:$0xff]
      %v806 = vld [vmem:[%s744 + $0x1e8] sm:$0xff]
      %v807 = vld [vmem:[%s744 + $0x1f0] sm:$0xff]
      %v808 = vld [vmem:[%s744 + $0x1f8] sm:$0xff]
      %809 = vmatprep.subr.mxu0 %v746
      %810 = vmatpush1.msra.mxu0 %v745
      %811 = vmatprep.subr.mxu0 %v748
      %812 = vmatpush1.msra.mxu0 %v747
      %813 = vmatprep.subr.mxu0 %v750
      %814 = vmatpush1.msra.mxu0 %v749
      %815 = vmatprep.subr.mxu0 %v752
      %816 = vmatpush1.msra.mxu0 %v751
      %817 = vmatprep.subr.mxu0 %v754
      %818 = vmatpush1.msra.mxu0 %v753
      %819 = vmatprep.subr.mxu0 %v756
      %820 = vmatpush1.msra.mxu0 %v755
      %821 = vmatprep.subr.mxu0 %v758
      %822 = vmatpush1.msra.mxu0 %v757
      %823 = vmatprep.subr.mxu0 %v760
      %824 = vmatpush1.msra.mxu0 %v759
      %825 = vmatprep.subr.mxu0 %v762
      %826 = vmatpush1.msra.mxu0 %v761
      %827 = vmatprep.subr.mxu0 %v764
      %828 = vmatpush1.msra.mxu0 %v763
      %829 = vmatprep.subr.mxu0 %v766
      %830 = vmatpush1.msra.mxu0 %v765
      %831 = vmatprep.subr.mxu0 %v768
      %832 = vmatpush1.msra.mxu0 %v767
      %833 = vmatprep.subr.mxu0 %v770
      %834 = vmatpush1.msra.mxu0 %v769
      %835 = vmatprep.subr.mxu0 %v772
      %836 = vmatpush1.msra.mxu0 %v771
      %837 = vmatprep.subr.mxu0 %v774
      %838 = vmatpush1.msra.mxu0 %v773
      %839 = vmatprep.subr.mxu0 %v776
      %840 = vmatpush1.msra.mxu0 %v775
      %841 = vmatprep.subr.mxu0 %v778
      %842 = vmatpush1.msra.mxu0 %v777
      %843 = vmatprep.subr.mxu0 %v780
      %844 = vmatpush1.msra.mxu0 %v779
      %845 = vmatprep.subr.mxu0 %v782
      %846 = vmatpush1.msra.mxu0 %v781
      %847 = vmatprep.subr.mxu0 %v784
      %848 = vmatpush1.msra.mxu0 %v783
      %849 = vmatprep.subr.mxu0 %v786
      %850 = vmatpush1.msra.mxu0 %v785
      %851 = vmatprep.subr.mxu0 %v788
      %852 = vmatpush1.msra.mxu0 %v787
      %853 = vmatprep.subr.mxu0 %v790
      %854 = vmatpush1.msra.mxu0 %v789
      %855 = vmatprep.subr.mxu0 %v792
      %856 = vmatpush1.msra.mxu0 %v791
      %857 = vmatprep.subr.mxu0 %v794
      %858 = vmatpush1.msra.mxu0 %v793
      %859 = vmatprep.subr.mxu0 %v796
      %860 = vmatpush1.msra.mxu0 %v795
      %861 = vmatprep.subr.mxu0 %v798
      %862 = vmatpush1.msra.mxu0 %v797
      %863 = vmatprep.subr.mxu0 %v800
      %864 = vmatpush1.msra.mxu0 %v799
      %865 = vmatprep.subr.mxu0 %v802
      %866 = vmatpush1.msra.mxu0 %v801
      %867 = vmatprep.subr.mxu0 %v804
      %868 = vmatpush1.msra.mxu0 %v803
      %869 = vmatprep.subr.mxu0 %v806
      %870 = vmatpush1.msra.mxu0 %v805
      %871 = vmatprep.subr.mxu0 %v808
      %872 = vmatpush1.msra.mxu0 %v807
      %873 = vmatprep.mubr.f32.mxu0 %v334
      %874 = vmatmul.mubr.f32.gmra.mrb[0].mxu0 %v333
      %v875 = vpop.f32.mrb[0].mxu0
      %v876 = vadd.f32 0.0, %v875
      %v877 = vpop.f32.mrb[0].mxu0
      %v878 = vadd.f32 0.0, %v877
      %879 = vdwg.mxu0
      %s880 = scalar_lea.vmem %s1, 2048
      %v881 = vld [vmem:[%s880] sm:$0xff]
      %v882 = vld [vmem:[%s880 + $0x8] sm:$0xff]
      %v883 = vld [vmem:[%s880 + $0x10] sm:$0xff]
      %v884 = vld [vmem:[%s880 + $0x18] sm:$0xff]
      %v885 = vld [vmem:[%s880 + $0x20] sm:$0xff]
      %v886 = vld [vmem:[%s880 + $0x28] sm:$0xff]
      %v887 = vld [vmem:[%s880 + $0x30] sm:$0xff]
      %v888 = vld [vmem:[%s880 + $0x38] sm:$0xff]
      %v889 = vld [vmem:[%s880 + $0x40] sm:$0xff]
      %v890 = vld [vmem:[%s880 + $0x48] sm:$0xff]
      %v891 = vld [vmem:[%s880 + $0x50] sm:$0xff]
      %v892 = vld [vmem:[%s880 + $0x58] sm:$0xff]
      %v893 = vld [vmem:[%s880 + $0x60] sm:$0xff]
      %v894 = vld [vmem:[%s880 + $0x68] sm:$0xff]
      %v895 = vld [vmem:[%s880 + $0x70] sm:$0xff]
      %v896 = vld [vmem:[%s880 + $0x78] sm:$0xff]
      %v897 = vld [vmem:[%s880 + $0x80] sm:$0xff]
      %v898 = vld [vmem:[%s880 + $0x88] sm:$0xff]
      %v899 = vld [vmem:[%s880 + $0x90] sm:$0xff]
      %v900 = vld [vmem:[%s880 + $0x98] sm:$0xff]
      %v901 = vld [vmem:[%s880 + $0xa0] sm:$0xff]
      %v902 = vld [vmem:[%s880 + $0xa8] sm:$0xff]
      %v903 = vld [vmem:[%s880 + $0xb0] sm:$0xff]
      %v904 = vld [vmem:[%s880 + $0xb8] sm:$0xff]
      %v905 = vld [vmem:[%s880 + $0xc0] sm:$0xff]
      %v906 = vld [vmem:[%s880 + $0xc8] sm:$0xff]
      %v907 = vld [vmem:[%s880 + $0xd0] sm:$0xff]
      %v908 = vld [vmem:[%s880 + $0xd8] sm:$0xff]
      %v909 = vld [vmem:[%s880 + $0xe0] sm:$0xff]
      %v910 = vld [vmem:[%s880 + $0xe8] sm:$0xff]
      %v911 = vld [vmem:[%s880 + $0xf0] sm:$0xff]
      %v912 = vld [vmem:[%s880 + $0xf8] sm:$0xff]
      %v913 = vld [vmem:[%s880 + $0x100] sm:$0xff]
      %v914 = vld [vmem:[%s880 + $0x108] sm:$0xff]
      %v915 = vld [vmem:[%s880 + $0x110] sm:$0xff]
      %v916 = vld [vmem:[%s880 + $0x118] sm:$0xff]
      %v917 = vld [vmem:[%s880 + $0x120] sm:$0xff]
      %v918 = vld [vmem:[%s880 + $0x128] sm:$0xff]
      %v919 = vld [vmem:[%s880 + $0x130] sm:$0xff]
      %v920 = vld [vmem:[%s880 + $0x138] sm:$0xff]
      %v921 = vld [vmem:[%s880 + $0x140] sm:$0xff]
      %v922 = vld [vmem:[%s880 + $0x148] sm:$0xff]
      %v923 = vld [vmem:[%s880 + $0x150] sm:$0xff]
      %v924 = vld [vmem:[%s880 + $0x158] sm:$0xff]
      %v925 = vld [vmem:[%s880 + $0x160] sm:$0xff]
      %v926 = vld [vmem:[%s880 + $0x168] sm:$0xff]
      %v927 = vld [vmem:[%s880 + $0x170] sm:$0xff]
      %v928 = vld [vmem:[%s880 + $0x178] sm:$0xff]
      %v929 = vld [vmem:[%s880 + $0x180] sm:$0xff]
      %v930 = vld [vmem:[%s880 + $0x188] sm:$0xff]
      %v931 = vld [vmem:[%s880 + $0x190] sm:$0xff]
      %v932 = vld [vmem:[%s880 + $0x198] sm:$0xff]
      %v933 = vld [vmem:[%s880 + $0x1a0] sm:$0xff]
      %v934 = vld [vmem:[%s880 + $0x1a8] sm:$0xff]
      %v935 = vld [vmem:[%s880 + $0x1b0] sm:$0xff]
      %v936 = vld [vmem:[%s880 + $0x1b8] sm:$0xff]
      %v937 = vld [vmem:[%s880 + $0x1c0] sm:$0xff]
      %v938 = vld [vmem:[%s880 + $0x1c8] sm:$0xff]
      %v939 = vld [vmem:[%s880 + $0x1d0] sm:$0xff]
      %v940 = vld [vmem:[%s880 + $0x1d8] sm:$0xff]
      %v941 = vld [vmem:[%s880 + $0x1e0] sm:$0xff]
      %v942 = vld [vmem:[%s880 + $0x1e8] sm:$0xff]
      %v943 = vld [vmem:[%s880 + $0x1f0] sm:$0xff]
      %v944 = vld [vmem:[%s880 + $0x1f8] sm:$0xff]
      %945 = vmatprep.subr.mxu0 %v882
      %946 = vmatpush1.msra.mxu0 %v881
      %947 = vmatprep.subr.mxu0 %v884
      %948 = vmatpush1.msra.mxu0 %v883
      %949 = vmatprep.subr.mxu0 %v886
      %950 = vmatpush1.msra.mxu0 %v885
      %951 = vmatprep.subr.mxu0 %v888
      %952 = vmatpush1.msra.mxu0 %v887
      %953 = vmatprep.subr.mxu0 %v890
      %954 = vmatpush1.msra.mxu0 %v889
      %955 = vmatprep.subr.mxu0 %v892
      %956 = vmatpush1.msra.mxu0 %v891
      %957 = vmatprep.subr.mxu0 %v894
      %958 = vmatpush1.msra.mxu0 %v893
      %959 = vmatprep.subr.mxu0 %v896
      %960 = vmatpush1.msra.mxu0 %v895
      %961 = vmatprep.subr.mxu0 %v898
      %962 = vmatpush1.msra.mxu0 %v897
      %963 = vmatprep.subr.mxu0 %v900
      %964 = vmatpush1.msra.mxu0 %v899
      %965 = vmatprep.subr.mxu0 %v902
      %966 = vmatpush1.msra.mxu0 %v901
      %967 = vmatprep.subr.mxu0 %v904
      %968 = vmatpush1.msra.mxu0 %v903
      %969 = vmatprep.subr.mxu0 %v906
      %970 = vmatpush1.msra.mxu0 %v905
      %971 = vmatprep.subr.mxu0 %v908
      %972 = vmatpush1.msra.mxu0 %v907
      %973 = vmatprep.subr.mxu0 %v910
      %974 = vmatpush1.msra.mxu0 %v909
      %975 = vmatprep.subr.mxu0 %v912
      %976 = vmatpush1.msra.mxu0 %v911
      %977 = vmatprep.subr.mxu0 %v914
      %978 = vmatpush1.msra.mxu0 %v913
      %979 = vmatprep.subr.mxu0 %v916
      %980 = vmatpush1.msra.mxu0 %v915
      %981 = vmatprep.subr.mxu0 %v918
      %982 = vmatpush1.msra.mxu0 %v917
      %983 = vmatprep.subr.mxu0 %v920
      %984 = vmatpush1.msra.mxu0 %v919
      %985 = vmatprep.subr.mxu0 %v922
      %986 = vmatpush1.msra.mxu0 %v921
      %987 = vmatprep.subr.mxu0 %v924
      %988 = vmatpush1.msra.mxu0 %v923
      %989 = vmatprep.subr.mxu0 %v926
      %990 = vmatpush1.msra.mxu0 %v925
      %991 = vmatprep.subr.mxu0 %v928
      %992 = vmatpush1.msra.mxu0 %v927
      %993 = vmatprep.subr.mxu0 %v930
      %994 = vmatpush1.msra.mxu0 %v929
      %995 = vmatprep.subr.mxu0 %v932
      %996 = vmatpush1.msra.mxu0 %v931
      %997 = vmatprep.subr.mxu0 %v934
      %998 = vmatpush1.msra.mxu0 %v933
      %999 = vmatprep.subr.mxu0 %v936
      %1000 = vmatpush1.msra.mxu0 %v935
      %1001 = vmatprep.subr.mxu0 %v938
      %1002 = vmatpush1.msra.mxu0 %v937
      %1003 = vmatprep.subr.mxu0 %v940
      %1004 = vmatpush1.msra.mxu0 %v939
      %1005 = vmatprep.subr.mxu0 %v942
      %1006 = vmatpush1.msra.mxu0 %v941
      %1007 = vmatprep.subr.mxu0 %v944
      %1008 = vmatpush1.msra.mxu0 %v943
      %1009 = vmatprep.mubr.f32.mxu0 %v334
      %1010 = vmatmul.mubr.f32.gmra.mrb[0].mxu0 %v333
      %v1011 = vpop.f32.mrb[0].mxu0
      %v1012 = vadd.f32 0.0, %v1011
      %v1013 = vpop.f32.mrb[0].mxu0
      %v1014 = vadd.f32 0.0, %v1013
      %1015 = vdwg.mxu0
      %s1016 = scalar_lea.vmem %s1, 2560
      %v1017 = vld [vmem:[%s1016] sm:$0xff]
      %v1018 = vld [vmem:[%s1016 + $0x8] sm:$0xff]
      %v1019 = vld [vmem:[%s1016 + $0x10] sm:$0xff]
      %v1020 = vld [vmem:[%s1016 + $0x18] sm:$0xff]
      %v1021 = vld [vmem:[%s1016 + $0x20] sm:$0xff]
      %v1022 = vld [vmem:[%s1016 + $0x28] sm:$0xff]
      %v1023 = vld [vmem:[%s1016 + $0x30] sm:$0xff]
      %v1024 = vld [vmem:[%s1016 + $0x38] sm:$0xff]
      %v1025 = vld [vmem:[%s1016 + $0x40] sm:$0xff]
      %v1026 = vld [vmem:[%s1016 + $0x48] sm:$0xff]
      %v1027 = vld [vmem:[%s1016 + $0x50] sm:$0xff]
      %v1028 = vld [vmem:[%s1016 + $0x58] sm:$0xff]
      %v1029 = vld [vmem:[%s1016 + $0x60] sm:$0xff]
      %v1030 = vld [vmem:[%s1016 + $0x68] sm:$0xff]
      %v1031 = vld [vmem:[%s1016 + $0x70] sm:$0xff]
      %v1032 = vld [vmem:[%s1016 + $0x78] sm:$0xff]
      %v1033 = vld [vmem:[%s1016 + $0x80] sm:$0xff]
      %v1034 = vld [vmem:[%s1016 + $0x88] sm:$0xff]
      %v1035 = vld [vmem:[%s1016 + $0x90] sm:$0xff]
      %v1036 = vld [vmem:[%s1016 + $0x98] sm:$0xff]
      %v1037 = vld [vmem:[%s1016 + $0xa0] sm:$0xff]
      %v1038 = vld [vmem:[%s1016 + $0xa8] sm:$0xff]
      %v1039 = vld [vmem:[%s1016 + $0xb0] sm:$0xff]
      %v1040 = vld [vmem:[%s1016 + $0xb8] sm:$0xff]
      %v1041 = vld [vmem:[%s1016 + $0xc0] sm:$0xff]
      %v1042 = vld [vmem:[%s1016 + $0xc8] sm:$0xff]
      %v1043 = vld [vmem:[%s1016 + $0xd0] sm:$0xff]
      %v1044 = vld [vmem:[%s1016 + $0xd8] sm:$0xff]
      %v1045 = vld [vmem:[%s1016 + $0xe0] sm:$0xff]
      %v1046 = vld [vmem:[%s1016 + $0xe8] sm:$0xff]
      %v1047 = vld [vmem:[%s1016 + $0xf0] sm:$0xff]
      %v1048 = vld [vmem:[%s1016 + $0xf8] sm:$0xff]
      %v1049 = vld [vmem:[%s1016 + $0x100] sm:$0xff]
      %v1050 = vld [vmem:[%s1016 + $0x108] sm:$0xff]
      %v1051 = vld [vmem:[%s1016 + $0x110] sm:$0xff]
      %v1052 = vld [vmem:[%s1016 + $0x118] sm:$0xff]
      %v1053 = vld [vmem:[%s1016 + $0x120] sm:$0xff]
      %v1054 = vld [vmem:[%s1016 + $0x128] sm:$0xff]
      %v1055 = vld [vmem:[%s1016 + $0x130] sm:$0xff]
      %v1056 = vld [vmem:[%s1016 + $0x138] sm:$0xff]
      %v1057 = vld [vmem:[%s1016 + $0x140] sm:$0xff]
      %v1058 = vld [vmem:[%s1016 + $0x148] sm:$0xff]
      %v1059 = vld [vmem:[%s1016 + $0x150] sm:$0xff]
      %v1060 = vld [vmem:[%s1016 + $0x158] sm:$0xff]
      %v1061 = vld [vmem:[%s1016 + $0x160] sm:$0xff]
      %v1062 = vld [vmem:[%s1016 + $0x168] sm:$0xff]
      %v1063 = vld [vmem:[%s1016 + $0x170] sm:$0xff]
      %v1064 = vld [vmem:[%s1016 + $0x178] sm:$0xff]
      %v1065 = vld [vmem:[%s1016 + $0x180] sm:$0xff]
      %v1066 = vld [vmem:[%s1016 + $0x188] sm:$0xff]
      %v1067 = vld [vmem:[%s1016 + $0x190] sm:$0xff]
      %v1068 = vld [vmem:[%s1016 + $0x198] sm:$0xff]
      %v1069 = vld [vmem:[%s1016 + $0x1a0] sm:$0xff]
      %v1070 = vld [vmem:[%s1016 + $0x1a8] sm:$0xff]
      %v1071 = vld [vmem:[%s1016 + $0x1b0] sm:$0xff]
      %v1072 = vld [vmem:[%s1016 + $0x1b8] sm:$0xff]
      %v1073 = vld [vmem:[%s1016 + $0x1c0] sm:$0xff]
      %v1074 = vld [vmem:[%s1016 + $0x1c8] sm:$0xff]
      %v1075 = vld [vmem:[%s1016 + $0x1d0] sm:$0xff]
      %v1076 = vld [vmem:[%s1016 + $0x1d8] sm:$0xff]
      %v1077 = vld [vmem:[%s1016 + $0x1e0] sm:$0xff]
      %v1078 = vld [vmem:[%s1016 + $0x1e8] sm:$0xff]
      %v1079 = vld [vmem:[%s1016 + $0x1f0] sm:$0xff]
      %v1080 = vld [vmem:[%s1016 + $0x1f8] sm:$0xff]
      %1081 = vmatprep.subr.mxu0 %v1018
      %1082 = vmatpush1.msra.mxu0 %v1017
      %1083 = vmatprep.subr.mxu0 %v1020
      %1084 = vmatpush1.msra.mxu0 %v1019
      %1085 = vmatprep.subr.mxu0 %v1022
      %1086 = vmatpush1.msra.mxu0 %v1021
      %1087 = vmatprep.subr.mxu0 %v1024
      %1088 = vmatpush1.msra.mxu0 %v1023
      %1089 = vmatprep.subr.mxu0 %v1026
      %1090 = vmatpush1.msra.mxu0 %v1025
      %1091 = vmatprep.subr.mxu0 %v1028
      %1092 = vmatpush1.msra.mxu0 %v1027
      %1093 = vmatprep.subr.mxu0 %v1030
      %1094 = vmatpush1.msra.mxu0 %v1029
      %1095 = vmatprep.subr.mxu0 %v1032
      %1096 = vmatpush1.msra.mxu0 %v1031
      %1097 = vmatprep.subr.mxu0 %v1034
      %1098 = vmatpush1.msra.mxu0 %v1033
      %1099 = vmatprep.subr.mxu0 %v1036
      %1100 = vmatpush1.msra.mxu0 %v1035
      %1101 = vmatprep.subr.mxu0 %v1038
      %1102 = vmatpush1.msra.mxu0 %v1037
      %1103 = vmatprep.subr.mxu0 %v1040
      %1104 = vmatpush1.msra.mxu0 %v1039
      %1105 = vmatprep.subr.mxu0 %v1042
      %1106 = vmatpush1.msra.mxu0 %v1041
      %1107 = vmatprep.subr.mxu0 %v1044
      %1108 = vmatpush1.msra.mxu0 %v1043
      %1109 = vmatprep.subr.mxu0 %v1046
      %1110 = vmatpush1.msra.mxu0 %v1045
      %1111 = vmatprep.subr.mxu0 %v1048
      %1112 = vmatpush1.msra.mxu0 %v1047
      %1113 = vmatprep.subr.mxu0 %v1050
      %1114 = vmatpush1.msra.mxu0 %v1049
      %1115 = vmatprep.subr.mxu0 %v1052
      %1116 = vmatpush1.msra.mxu0 %v1051
      %1117 = vmatprep.subr.mxu0 %v1054
      %1118 = vmatpush1.msra.mxu0 %v1053
      %1119 = vmatprep.subr.mxu0 %v1056
      %1120 = vmatpush1.msra.mxu0 %v1055
      %1121 = vmatprep.subr.mxu0 %v1058
      %1122 = vmatpush1.msra.mxu0 %v1057
      %1123 = vmatprep.subr.mxu0 %v1060
      %1124 = vmatpush1.msra.mxu0 %v1059
      %1125 = vmatprep.subr.mxu0 %v1062
      %1126 = vmatpush1.msra.mxu0 %v1061
      %1127 = vmatprep.subr.mxu0 %v1064
      %1128 = vmatpush1.msra.mxu0 %v1063
      %1129 = vmatprep.subr.mxu0 %v1066
      %1130 = vmatpush1.msra.mxu0 %v1065
      %1131 = vmatprep.subr.mxu0 %v1068
      %1132 = vmatpush1.msra.mxu0 %v1067
      %1133 = vmatprep.subr.mxu0 %v1070
      %1134 = vmatpush1.msra.mxu0 %v1069
      %1135 = vmatprep.subr.mxu0 %v1072
      %1136 = vmatpush1.msra.mxu0 %v1071
      %1137 = vmatprep.subr.mxu0 %v1074
      %1138 = vmatpush1.msra.mxu0 %v1073
      %1139 = vmatprep.subr.mxu0 %v1076
      %1140 = vmatpush1.msra.mxu0 %v1075
      %1141 = vmatprep.subr.mxu0 %v1078
      %1142 = vmatpush1.msra.mxu0 %v1077
      %1143 = vmatprep.subr.mxu0 %v1080
      %1144 = vmatpush1.msra.mxu0 %v1079
      %1145 = vmatprep.mubr.f32.mxu0 %v334
      %1146 = vmatmul.mubr.f32.gmra.mrb[0].mxu0 %v333
      %v1147 = vpop.f32.mrb[0].mxu0
      %v1148 = vadd.f32 0.0, %v1147
      %v1149 = vpop.f32.mrb[0].mxu0
      %v1150 = vadd.f32 0.0, %v1149
      %1151 = vdwg.mxu0
      %s1152 = scalar_lea.vmem %s1, 3072
      %v1153 = vld [vmem:[%s1152] sm:$0xff]
      %v1154 = vld [vmem:[%s1152 + $0x8] sm:$0xff]
      %v1155 = vld [vmem:[%s1152 + $0x10] sm:$0xff]
      %v1156 = vld [vmem:[%s1152 + $0x18] sm:$0xff]
      %v1157 = vld [vmem:[%s1152 + $0x20] sm:$0xff]
      %v1158 = vld [vmem:[%s1152 + $0x28] sm:$0xff]
      %v1159 = vld [vmem:[%s1152 + $0x30] sm:$0xff]
      %v1160 = vld [vmem:[%s1152 + $0x38] sm:$0xff]
      %v1161 = vld [vmem:[%s1152 + $0x40] sm:$0xff]
      %v1162 = vld [vmem:[%s1152 + $0x48] sm:$0xff]
      %v1163 = vld [vmem:[%s1152 + $0x50] sm:$0xff]
      %v1164 = vld [vmem:[%s1152 + $0x58] sm:$0xff]
      %v1165 = vld [vmem:[%s1152 + $0x60] sm:$0xff]
      %v1166 = vld [vmem:[%s1152 + $0x68] sm:$0xff]
      %v1167 = vld [vmem:[%s1152 + $0x70] sm:$0xff]
      %v1168 = vld [vmem:[%s1152 + $0x78] sm:$0xff]
      %v1169 = vld [vmem:[%s1152 + $0x80] sm:$0xff]
      %v1170 = vld [vmem:[%s1152 + $0x88] sm:$0xff]
      %v1171 = vld [vmem:[%s1152 + $0x90] sm:$0xff]
      %v1172 = vld [vmem:[%s1152 + $0x98] sm:$0xff]
      %v1173 = vld [vmem:[%s1152 + $0xa0] sm:$0xff]
      %v1174 = vld [vmem:[%s1152 + $0xa8] sm:$0xff]
      %v1175 = vld [vmem:[%s1152 + $0xb0] sm:$0xff]
      %v1176 = vld [vmem:[%s1152 + $0xb8] sm:$0xff]
      %v1177 = vld [vmem:[%s1152 + $0xc0] sm:$0xff]
      %v1178 = vld [vmem:[%s1152 + $0xc8] sm:$0xff]
      %v1179 = vld [vmem:[%s1152 + $0xd0] sm:$0xff]
      %v1180 = vld [vmem:[%s1152 + $0xd8] sm:$0xff]
      %v1181 = vld [vmem:[%s1152 + $0xe0] sm:$0xff]
      %v1182 = vld [vmem:[%s1152 + $0xe8] sm:$0xff]
      %v1183 = vld [vmem:[%s1152 + $0xf0] sm:$0xff]
      %v1184 = vld [vmem:[%s1152 + $0xf8] sm:$0xff]
      %v1185 = vld [vmem:[%s1152 + $0x100] sm:$0xff]
      %v1186 = vld [vmem:[%s1152 + $0x108] sm:$0xff]
      %v1187 = vld [vmem:[%s1152 + $0x110] sm:$0xff]
      %v1188 = vld [vmem:[%s1152 + $0x118] sm:$0xff]
      %v1189 = vld [vmem:[%s1152 + $0x120] sm:$0xff]
      %v1190 = vld [vmem:[%s1152 + $0x128] sm:$0xff]
      %v1191 = vld [vmem:[%s1152 + $0x130] sm:$0xff]
      %v1192 = vld [vmem:[%s1152 + $0x138] sm:$0xff]
      %v1193 = vld [vmem:[%s1152 + $0x140] sm:$0xff]
      %v1194 = vld [vmem:[%s1152 + $0x148] sm:$0xff]
      %v1195 = vld [vmem:[%s1152 + $0x150] sm:$0xff]
      %v1196 = vld [vmem:[%s1152 + $0x158] sm:$0xff]
      %v1197 = vld [vmem:[%s1152 + $0x160] sm:$0xff]
      %v1198 = vld [vmem:[%s1152 + $0x168] sm:$0xff]
      %v1199 = vld [vmem:[%s1152 + $0x170] sm:$0xff]
      %v1200 = vld [vmem:[%s1152 + $0x178] sm:$0xff]
      %v1201 = vld [vmem:[%s1152 + $0x180] sm:$0xff]
      %v1202 = vld [vmem:[%s1152 + $0x188] sm:$0xff]
      %v1203 = vld [vmem:[%s1152 + $0x190] sm:$0xff]
      %v1204 = vld [vmem:[%s1152 + $0x198] sm:$0xff]
      %v1205 = vld [vmem:[%s1152 + $0x1a0] sm:$0xff]
      %v1206 = vld [vmem:[%s1152 + $0x1a8] sm:$0xff]
      %v1207 = vld [vmem:[%s1152 + $0x1b0] sm:$0xff]
      %v1208 = vld [vmem:[%s1152 + $0x1b8] sm:$0xff]
      %v1209 = vld [vmem:[%s1152 + $0x1c0] sm:$0xff]
      %v1210 = vld [vmem:[%s1152 + $0x1c8] sm:$0xff]
      %v1211 = vld [vmem:[%s1152 + $0x1d0] sm:$0xff]
      %v1212 = vld [vmem:[%s1152 + $0x1d8] sm:$0xff]
      %v1213 = vld [vmem:[%s1152 + $0x1e0] sm:$0xff]
      %v1214 = vld [vmem:[%s1152 + $0x1e8] sm:$0xff]
      %v1215 = vld [vmem:[%s1152 + $0x1f0] sm:$0xff]
      %v1216 = vld [vmem:[%s1152 + $0x1f8] sm:$0xff]
      %1217 = vmatprep.subr.mxu0 %v1154
      %1218 = vmatpush1.msra.mxu0 %v1153
      %1219 = vmatprep.subr.mxu0 %v1156
      %1220 = vmatpush1.msra.mxu0 %v1155
      %1221 = vmatprep.subr.mxu0 %v1158
      %1222 = vmatpush1.msra.mxu0 %v1157
      %1223 = vmatprep.subr.mxu0 %v1160
      %1224 = vmatpush1.msra.mxu0 %v1159
      %1225 = vmatprep.subr.mxu0 %v1162
      %1226 = vmatpush1.msra.mxu0 %v1161
      %1227 = vmatprep.subr.mxu0 %v1164
      %1228 = vmatpush1.msra.mxu0 %v1163
      %1229 = vmatprep.subr.mxu0 %v1166
      %1230 = vmatpush1.msra.mxu0 %v1165
      %1231 = vmatprep.subr.mxu0 %v1168
      %1232 = vmatpush1.msra.mxu0 %v1167
      %1233 = vmatprep.subr.mxu0 %v1170
      %1234 = vmatpush1.msra.mxu0 %v1169
      %1235 = vmatprep.subr.mxu0 %v1172
      %1236 = vmatpush1.msra.mxu0 %v1171
      %1237 = vmatprep.subr.mxu0 %v1174
      %1238 = vmatpush1.msra.mxu0 %v1173
      %1239 = vmatprep.subr.mxu0 %v1176
      %1240 = vmatpush1.msra.mxu0 %v1175
      %1241 = vmatprep.subr.mxu0 %v1178
      %1242 = vmatpush1.msra.mxu0 %v1177
      %1243 = vmatprep.subr.mxu0 %v1180
      %1244 = vmatpush1.msra.mxu0 %v1179
      %1245 = vmatprep.subr.mxu0 %v1182
      %1246 = vmatpush1.msra.mxu0 %v1181
      %1247 = vmatprep.subr.mxu0 %v1184
      %1248 = vmatpush1.msra.mxu0 %v1183
      %1249 = vmatprep.subr.mxu0 %v1186
      %1250 = vmatpush1.msra.mxu0 %v1185
      %1251 = vmatprep.subr.mxu0 %v1188
      %1252 = vmatpush1.msra.mxu0 %v1187
      %1253 = vmatprep.subr.mxu0 %v1190
      %1254 = vmatpush1.msra.mxu0 %v1189
      %1255 = vmatprep.subr.mxu0 %v1192
      %1256 = vmatpush1.msra.mxu0 %v1191
      %1257 = vmatprep.subr.mxu0 %v1194
      %1258 = vmatpush1.msra.mxu0 %v1193
      %1259 = vmatprep.subr.mxu0 %v1196
      %1260 = vmatpush1.msra.mxu0 %v1195
      %1261 = vmatprep.subr.mxu0 %v1198
      %1262 = vmatpush1.msra.mxu0 %v1197
      %1263 = vmatprep.subr.mxu0 %v1200
      %1264 = vmatpush1.msra.mxu0 %v1199
      %1265 = vmatprep.subr.mxu0 %v1202
      %1266 = vmatpush1.msra.mxu0 %v1201
      %1267 = vmatprep.subr.mxu0 %v1204
      %1268 = vmatpush1.msra.mxu0 %v1203
      %1269 = vmatprep.subr.mxu0 %v1206
      %1270 = vmatpush1.msra.mxu0 %v1205
      %1271 = vmatprep.subr.mxu0 %v1208
      %1272 = vmatpush1.msra.mxu0 %v1207
      %1273 = vmatprep.subr.mxu0 %v1210
      %1274 = vmatpush1.msra.mxu0 %v1209
      %1275 = vmatprep.subr.mxu0 %v1212
      %1276 = vmatpush1.msra.mxu0 %v1211
      %1277 = vmatprep.subr.mxu0 %v1214
      %1278 = vmatpush1.msra.mxu0 %v1213
      %1279 = vmatprep.subr.mxu0 %v1216
      %1280 = vmatpush1.msra.mxu0 %v1215
      %1281 = vmatprep.mubr.f32.mxu0 %v334
      %1282 = vmatmul.mubr.f32.gmra.mrb[0].mxu0 %v333
      %v1283 = vpop.f32.mrb[0].mxu0
      %v1284 = vadd.f32 0.0, %v1283
      %v1285 = vpop.f32.mrb[0].mxu0
      %v1286 = vadd.f32 0.0, %v1285
      %1287 = vdwg.mxu0
      %s1288 = scalar_lea.vmem %s1, 3584
      %v1289 = vld [vmem:[%s1288] sm:$0xff]
      %v1290 = vld [vmem:[%s1288 + $0x8] sm:$0xff]
      %v1291 = vld [vmem:[%s1288 + $0x10] sm:$0xff]
      %v1292 = vld [vmem:[%s1288 + $0x18] sm:$0xff]
      %v1293 = vld [vmem:[%s1288 + $0x20] sm:$0xff]
      %v1294 = vld [vmem:[%s1288 + $0x28] sm:$0xff]
      %v1295 = vld [vmem:[%s1288 + $0x30] sm:$0xff]
      %v1296 = vld [vmem:[%s1288 + $0x38] sm:$0xff]
      %v1297 = vld [vmem:[%s1288 + $0x40] sm:$0xff]
      %v1298 = vld [vmem:[%s1288 + $0x48] sm:$0xff]
      %v1299 = vld [vmem:[%s1288 + $0x50] sm:$0xff]
      %v1300 = vld [vmem:[%s1288 + $0x58] sm:$0xff]
      %v1301 = vld [vmem:[%s1288 + $0x60] sm:$0xff]
      %v1302 = vld [vmem:[%s1288 + $0x68] sm:$0xff]
      %v1303 = vld [vmem:[%s1288 + $0x70] sm:$0xff]
      %v1304 = vld [vmem:[%s1288 + $0x78] sm:$0xff]
      %v1305 = vld [vmem:[%s1288 + $0x80] sm:$0xff]
      %v1306 = vld [vmem:[%s1288 + $0x88] sm:$0xff]
      %v1307 = vld [vmem:[%s1288 + $0x90] sm:$0xff]
      %v1308 = vld [vmem:[%s1288 + $0x98] sm:$0xff]
      %v1309 = vld [vmem:[%s1288 + $0xa0] sm:$0xff]
      %v1310 = vld [vmem:[%s1288 + $0xa8] sm:$0xff]
      %v1311 = vld [vmem:[%s1288 + $0xb0] sm:$0xff]
      %v1312 = vld [vmem:[%s1288 + $0xb8] sm:$0xff]
      %v1313 = vld [vmem:[%s1288 + $0xc0] sm:$0xff]
      %v1314 = vld [vmem:[%s1288 + $0xc8] sm:$0xff]
      %v1315 = vld [vmem:[%s1288 + $0xd0] sm:$0xff]
      %v1316 = vld [vmem:[%s1288 + $0xd8] sm:$0xff]
      %v1317 = vld [vmem:[%s1288 + $0xe0] sm:$0xff]
      %v1318 = vld [vmem:[%s1288 + $0xe8] sm:$0xff]
      %v1319 = vld [vmem:[%s1288 + $0xf0] sm:$0xff]
      %v1320 = vld [vmem:[%s1288 + $0xf8] sm:$0xff]
      %v1321 = vld [vmem:[%s1288 + $0x100] sm:$0xff]
      %v1322 = vld [vmem:[%s1288 + $0x108] sm:$0xff]
      %v1323 = vld [vmem:[%s1288 + $0x110] sm:$0xff]
      %v1324 = vld [vmem:[%s1288 + $0x118] sm:$0xff]
      %v1325 = vld [vmem:[%s1288 + $0x120] sm:$0xff]
      %v1326 = vld [vmem:[%s1288 + $0x128] sm:$0xff]
      %v1327 = vld [vmem:[%s1288 + $0x130] sm:$0xff]
      %v1328 = vld [vmem:[%s1288 + $0x138] sm:$0xff]
      %v1329 = vld [vmem:[%s1288 + $0x140] sm:$0xff]
      %v1330 = vld [vmem:[%s1288 + $0x148] sm:$0xff]
      %v1331 = vld [vmem:[%s1288 + $0x150] sm:$0xff]
      %v1332 = vld [vmem:[%s1288 + $0x158] sm:$0xff]
      %v1333 = vld [vmem:[%s1288 + $0x160] sm:$0xff]
      %v1334 = vld [vmem:[%s1288 + $0x168] sm:$0xff]
      %v1335 = vld [vmem:[%s1288 + $0x170] sm:$0xff]
      %v1336 = vld [vmem:[%s1288 + $0x178] sm:$0xff]
      %v1337 = vld [vmem:[%s1288 + $0x180] sm:$0xff]
      %v1338 = vld [vmem:[%s1288 + $0x188] sm:$0xff]
      %v1339 = vld [vmem:[%s1288 + $0x190] sm:$0xff]
      %v1340 = vld [vmem:[%s1288 + $0x198] sm:$0xff]
      %v1341 = vld [vmem:[%s1288 + $0x1a0] sm:$0xff]
      %v1342 = vld [vmem:[%s1288 + $0x1a8] sm:$0xff]
      %v1343 = vld [vmem:[%s1288 + $0x1b0] sm:$0xff]
      %v1344 = vld [vmem:[%s1288 + $0x1b8] sm:$0xff]
      %v1345 = vld [vmem:[%s1288 + $0x1c0] sm:$0xff]
      %v1346 = vld [vmem:[%s1288 + $0x1c8] sm:$0xff]
      %v1347 = vld [vmem:[%s1288 + $0x1d0] sm:$0xff]
      %v1348 = vld [vmem:[%s1288 + $0x1d8] sm:$0xff]
      %v1349 = vld [vmem:[%s1288 + $0x1e0] sm:$0xff]
      %v1350 = vld [vmem:[%s1288 + $0x1e8] sm:$0xff]
      %v1351 = vld [vmem:[%s1288 + $0x1f0] sm:$0xff]
      %v1352 = vld [vmem:[%s1288 + $0x1f8] sm:$0xff]
      %1353 = vmatprep.subr.mxu0 %v1290
      %1354 = vmatpush1.msra.mxu0 %v1289
      %1355 = vmatprep.subr.mxu0 %v1292
      %1356 = vmatpush1.msra.mxu0 %v1291
      %1357 = vmatprep.subr.mxu0 %v1294
      %1358 = vmatpush1.msra.mxu0 %v1293
      %1359 = vmatprep.subr.mxu0 %v1296
      %1360 = vmatpush1.msra.mxu0 %v1295
      %1361 = vmatprep.subr.mxu0 %v1298
      %1362 = vmatpush1.msra.mxu0 %v1297
      %1363 = vmatprep.subr.mxu0 %v1300
      %1364 = vmatpush1.msra.mxu0 %v1299
      %1365 = vmatprep.subr.mxu0 %v1302
      %1366 = vmatpush1.msra.mxu0 %v1301
      %1367 = vmatprep.subr.mxu0 %v1304
      %1368 = vmatpush1.msra.mxu0 %v1303
      %1369 = vmatprep.subr.mxu0 %v1306
      %1370 = vmatpush1.msra.mxu0 %v1305
      %1371 = vmatprep.subr.mxu0 %v1308
      %1372 = vmatpush1.msra.mxu0 %v1307
      %1373 = vmatprep.subr.mxu0 %v1310
      %1374 = vmatpush1.msra.mxu0 %v1309
      %1375 = vmatprep.subr.mxu0 %v1312
      %1376 = vmatpush1.msra.mxu0 %v1311
      %1377 = vmatprep.subr.mxu0 %v1314
      %1378 = vmatpush1.msra.mxu0 %v1313
      %1379 = vmatprep.subr.mxu0 %v1316
      %1380 = vmatpush1.msra.mxu0 %v1315
      %1381 = vmatprep.subr.mxu0 %v1318
      %1382 = vmatpush1.msra.mxu0 %v1317
      %1383 = vmatprep.subr.mxu0 %v1320
      %1384 = vmatpush1.msra.mxu0 %v1319
      %1385 = vmatprep.subr.mxu0 %v1322
      %1386 = vmatpush1.msra.mxu0 %v1321
      %1387 = vmatprep.subr.mxu0 %v1324
      %1388 = vmatpush1.msra.mxu0 %v1323
      %1389 = vmatprep.subr.mxu0 %v1326
      %1390 = vmatpush1.msra.mxu0 %v1325
      %1391 = vmatprep.subr.mxu0 %v1328
      %1392 = vmatpush1.msra.mxu0 %v1327
      %1393 = vmatprep.subr.mxu0 %v1330
      %1394 = vmatpush1.msra.mxu0 %v1329
      %1395 = vmatprep.subr.mxu0 %v1332
      %1396 = vmatpush1.msra.mxu0 %v1331
      %1397 = vmatprep.subr.mxu0 %v1334
      %1398 = vmatpush1.msra.mxu0 %v1333
      %1399 = vmatprep.subr.mxu0 %v1336
      %1400 = vmatpush1.msra.mxu0 %v1335
      %1401 = vmatprep.subr.mxu0 %v1338
      %1402 = vmatpush1.msra.mxu0 %v1337
      %1403 = vmatprep.subr.mxu0 %v1340
      %1404 = vmatpush1.msra.mxu0 %v1339
      %1405 = vmatprep.subr.mxu0 %v1342
      %1406 = vmatpush1.msra.mxu0 %v1341
      %1407 = vmatprep.subr.mxu0 %v1344
      %1408 = vmatpush1.msra.mxu0 %v1343
      %1409 = vmatprep.subr.mxu0 %v1346
      %1410 = vmatpush1.msra.mxu0 %v1345
      %1411 = vmatprep.subr.mxu0 %v1348
      %1412 = vmatpush1.msra.mxu0 %v1347
      %1413 = vmatprep.subr.mxu0 %v1350
      %1414 = vmatpush1.msra.mxu0 %v1349
      %1415 = vmatprep.subr.mxu0 %v1352
      %1416 = vmatpush1.msra.mxu0 %v1351
      %1417 = vmatprep.mubr.f32.mxu0 %v334
      %1418 = vmatmul.mubr.f32.gmra.mrb[0].mxu0 %v333
      %v1419 = vpop.f32.mrb[0].mxu0
      %v1420 = vadd.f32 0.0, %v1419
      %v1421 = vpop.f32.mrb[0].mxu0
      %v1422 = vadd.f32 0.0, %v1421
      %1423 = vdwg.mxu0
      %s1424 = scalar_lea.vmem %s1, 4096
      %v1425 = vld [vmem:[%s1424] sm:$0xff]
      %v1426 = vld [vmem:[%s1424 + $0x8] sm:$0xff]
      %v1427 = vld [vmem:[%s1424 + $0x10] sm:$0xff]
      %v1428 = vld [vmem:[%s1424 + $0x18] sm:$0xff]
      %v1429 = vld [vmem:[%s1424 + $0x20] sm:$0xff]
      %v1430 = vld [vmem:[%s1424 + $0x28] sm:$0xff]
      %v1431 = vld [vmem:[%s1424 + $0x30] sm:$0xff]
      %v1432 = vld [vmem:[%s1424 + $0x38] sm:$0xff]
      %v1433 = vld [vmem:[%s1424 + $0x40] sm:$0xff]
      %v1434 = vld [vmem:[%s1424 + $0x48] sm:$0xff]
      %v1435 = vld [vmem:[%s1424 + $0x50] sm:$0xff]
      %v1436 = vld [vmem:[%s1424 + $0x58] sm:$0xff]
      %v1437 = vld [vmem:[%s1424 + $0x60] sm:$0xff]
      %v1438 = vld [vmem:[%s1424 + $0x68] sm:$0xff]
      %v1439 = vld [vmem:[%s1424 + $0x70] sm:$0xff]
      %v1440 = vld [vmem:[%s1424 + $0x78] sm:$0xff]
      %v1441 = vld [vmem:[%s1424 + $0x80] sm:$0xff]
      %v1442 = vld [vmem:[%s1424 + $0x88] sm:$0xff]
      %v1443 = vld [vmem:[%s1424 + $0x90] sm:$0xff]
      %v1444 = vld [vmem:[%s1424 + $0x98] sm:$0xff]
      %v1445 = vld [vmem:[%s1424 + $0xa0] sm:$0xff]
      %v1446 = vld [vmem:[%s1424 + $0xa8] sm:$0xff]
      %v1447 = vld [vmem:[%s1424 + $0xb0] sm:$0xff]
      %v1448 = vld [vmem:[%s1424 + $0xb8] sm:$0xff]
      %v1449 = vld [vmem:[%s1424 + $0xc0] sm:$0xff]
      %v1450 = vld [vmem:[%s1424 + $0xc8] sm:$0xff]
      %v1451 = vld [vmem:[%s1424 + $0xd0] sm:$0xff]
      %v1452 = vld [vmem:[%s1424 + $0xd8] sm:$0xff]
      %v1453 = vld [vmem:[%s1424 + $0xe0] sm:$0xff]
      %v1454 = vld [vmem:[%s1424 + $0xe8] sm:$0xff]
      %v1455 = vld [vmem:[%s1424 + $0xf0] sm:$0xff]
      %v1456 = vld [vmem:[%s1424 + $0xf8] sm:$0xff]
      %v1457 = vld [vmem:[%s1424 + $0x100] sm:$0xff]
      %v1458 = vld [vmem:[%s1424 + $0x108] sm:$0xff]
      %v1459 = vld [vmem:[%s1424 + $0x110] sm:$0xff]
      %v1460 = vld [vmem:[%s1424 + $0x118] sm:$0xff]
      %v1461 = vld [vmem:[%s1424 + $0x120] sm:$0xff]
      %v1462 = vld [vmem:[%s1424 + $0x128] sm:$0xff]
      %v1463 = vld [vmem:[%s1424 + $0x130] sm:$0xff]
      %v1464 = vld [vmem:[%s1424 + $0x138] sm:$0xff]
      %v1465 = vld [vmem:[%s1424 + $0x140] sm:$0xff]
      %v1466 = vld [vmem:[%s1424 + $0x148] sm:$0xff]
      %v1467 = vld [vmem:[%s1424 + $0x150] sm:$0xff]
      %v1468 = vld [vmem:[%s1424 + $0x158] sm:$0xff]
      %v1469 = vld [vmem:[%s1424 + $0x160] sm:$0xff]
      %v1470 = vld [vmem:[%s1424 + $0x168] sm:$0xff]
      %v1471 = vld [vmem:[%s1424 + $0x170] sm:$0xff]
      %v1472 = vld [vmem:[%s1424 + $0x178] sm:$0xff]
      %v1473 = vld [vmem:[%s1424 + $0x180] sm:$0xff]
      %v1474 = vld [vmem:[%s1424 + $0x188] sm:$0xff]
      %v1475 = vld [vmem:[%s1424 + $0x190] sm:$0xff]
      %v1476 = vld [vmem:[%s1424 + $0x198] sm:$0xff]
      %v1477 = vld [vmem:[%s1424 + $0x1a0] sm:$0xff]
      %v1478 = vld [vmem:[%s1424 + $0x1a8] sm:$0xff]
      %v1479 = vld [vmem:[%s1424 + $0x1b0] sm:$0xff]
      %v1480 = vld [vmem:[%s1424 + $0x1b8] sm:$0xff]
      %v1481 = vld [vmem:[%s1424 + $0x1c0] sm:$0xff]
      %v1482 = vld [vmem:[%s1424 + $0x1c8] sm:$0xff]
      %v1483 = vld [vmem:[%s1424 + $0x1d0] sm:$0xff]
      %v1484 = vld [vmem:[%s1424 + $0x1d8] sm:$0xff]
      %v1485 = vld [vmem:[%s1424 + $0x1e0] sm:$0xff]
      %v1486 = vld [vmem:[%s1424 + $0x1e8] sm:$0xff]
      %v1487 = vld [vmem:[%s1424 + $0x1f0] sm:$0xff]
      %v1488 = vld [vmem:[%s1424 + $0x1f8] sm:$0xff]
      %1489 = vmatprep.subr.mxu0 %v1426
      %1490 = vmatpush1.msra.mxu0 %v1425
      %1491 = vmatprep.subr.mxu0 %v1428
      %1492 = vmatpush1.msra.mxu0 %v1427
      %1493 = vmatprep.subr.mxu0 %v1430
      %1494 = vmatpush1.msra.mxu0 %v1429
      %1495 = vmatprep.subr.mxu0 %v1432
      %1496 = vmatpush1.msra.mxu0 %v1431
      %1497 = vmatprep.subr.mxu0 %v1434
      %1498 = vmatpush1.msra.mxu0 %v1433
      %1499 = vmatprep.subr.mxu0 %v1436
      %1500 = vmatpush1.msra.mxu0 %v1435
      %1501 = vmatprep.subr.mxu0 %v1438
      %1502 = vmatpush1.msra.mxu0 %v1437
      %1503 = vmatprep.subr.mxu0 %v1440
      %1504 = vmatpush1.msra.mxu0 %v1439
      %1505 = vmatprep.subr.mxu0 %v1442
      %1506 = vmatpush1.msra.mxu0 %v1441
      %1507 = vmatprep.subr.mxu0 %v1444
      %1508 = vmatpush1.msra.mxu0 %v1443
      %1509 = vmatprep.subr.mxu0 %v1446
      %1510 = vmatpush1.msra.mxu0 %v1445
      %1511 = vmatprep.subr.mxu0 %v1448
      %1512 = vmatpush1.msra.mxu0 %v1447
      %1513 = vmatprep.subr.mxu0 %v1450
      %1514 = vmatpush1.msra.mxu0 %v1449
      %1515 = vmatprep.subr.mxu0 %v1452
      %1516 = vmatpush1.msra.mxu0 %v1451
      %1517 = vmatprep.subr.mxu0 %v1454
      %1518 = vmatpush1.msra.mxu0 %v1453
      %1519 = vmatprep.subr.mxu0 %v1456
      %1520 = vmatpush1.msra.mxu0 %v1455
      %1521 = vmatprep.subr.mxu0 %v1458
      %1522 = vmatpush1.msra.mxu0 %v1457
      %1523 = vmatprep.subr.mxu0 %v1460
      %1524 = vmatpush1.msra.mxu0 %v1459
      %1525 = vmatprep.subr.mxu0 %v1462
      %1526 = vmatpush1.msra.mxu0 %v1461
      %1527 = vmatprep.subr.mxu0 %v1464
      %1528 = vmatpush1.msra.mxu0 %v1463
      %1529 = vmatprep.subr.mxu0 %v1466
      %1530 = vmatpush1.msra.mxu0 %v1465
      %1531 = vmatprep.subr.mxu0 %v1468
      %1532 = vmatpush1.msra.mxu0 %v1467
      %1533 = vmatprep.subr.mxu0 %v1470
      %1534 = vmatpush1.msra.mxu0 %v1469
      %1535 = vmatprep.subr.mxu0 %v1472
      %1536 = vmatpush1.msra.mxu0 %v1471
      %1537 = vmatprep.subr.mxu0 %v1474
      %1538 = vmatpush1.msra.mxu0 %v1473
      %1539 = vmatprep.subr.mxu0 %v1476
      %1540 = vmatpush1.msra.mxu0 %v1475
      %1541 = vmatprep.subr.mxu0 %v1478
      %1542 = vmatpush1.msra.mxu0 %v1477
      %1543 = vmatprep.subr.mxu0 %v1480
      %1544 = vmatpush1.msra.mxu0 %v1479
      %1545 = vmatprep.subr.mxu0 %v1482
      %1546 = vmatpush1.msra.mxu0 %v1481
      %1547 = vmatprep.subr.mxu0 %v1484
      %1548 = vmatpush1.msra.mxu0 %v1483
      %1549 = vmatprep.subr.mxu0 %v1486
      %1550 = vmatpush1.msra.mxu0 %v1485
      %1551 = vmatprep.subr.mxu0 %v1488
      %1552 = vmatpush1.msra.mxu0 %v1487
      %1553 = vmatprep.mubr.f32.mxu0 %v334
      %1554 = vmatmul.mubr.f32.gmra.mrb[0].mxu0 %v333
      %v1555 = vpop.f32.mrb[0].mxu0
      %v1556 = vadd.f32 0.0, %v1555
      %v1557 = vpop.f32.mrb[0].mxu0
      %v1558 = vadd.f32 0.0, %v1557
      %1559 = vdwg.mxu0
      %1561 = vset.pattern.permute.xlu0 0
      %1562 = vperm.xlu0 %1561, %v336
      %v1563 = vpop.permute.xlu0 %1562
      %vm1565 = vcmask 588800
      %v1567 = vsel %vm1565, %v335, 0
      %1569 = vmatprep.subr.mxu0 %v470
      %1570 = vmatpush1.msra.mxu0 %v468
      %1571 = vmatprep.subr.mxu0 %v606
      %1572 = vmatpush1.msra.mxu0 %v604
      %1573 = vmatprep.subr.mxu0 %v742
      %1574 = vmatpush1.msra.mxu0 %v740
      %1575 = vmatprep.subr.mxu0 %v878
      %1576 = vmatpush1.msra.mxu0 %v876
      %1577 = vmatprep.subr.mxu0 %v1014
      %1578 = vmatpush1.msra.mxu0 %v1012
      %1579 = vmatprep.subr.mxu0 %v1150
      %1580 = vmatpush1.msra.mxu0 %v1148
      %1581 = vmatprep.subr.mxu0 %v1286
      %1582 = vmatpush1.msra.mxu0 %v1284
      %1583 = vmatprep.subr.mxu0 %v1422
      %1584 = vmatpush1.msra.mxu0 %v1420
      %1585 = vmatprep.subr.mxu0 %v1558
      %1586 = vmatpush1.msra.mxu0 %v1556
      %1587 = vmatprep.subr.mxu0 0.0
      %1588 = vmatpush1.msra.mxu0 0.0
      %1589 = vmatprep.subr.mxu0 0.0
      %1590 = vmatpush1.msra.mxu0 0.0
      %1591 = vmatprep.subr.mxu0 0.0
      %1592 = vmatpush1.msra.mxu0 0.0
      %1593 = vmatprep.subr.mxu0 0.0
      %1594 = vmatpush1.msra.mxu0 0.0
      %1595 = vmatprep.subr.mxu0 0.0
      %1596 = vmatpush1.msra.mxu0 0.0
      %1597 = vmatprep.subr.mxu0 0.0
      %1598 = vmatpush1.msra.mxu0 0.0
      %1599 = vmatprep.subr.mxu0 0.0
      %1600 = vmatpush1.msra.mxu0 0.0
      %1601 = vmatprep.subr.mxu0 0.0
      %1602 = vmatpush1.msra.mxu0 0.0
      %1603 = vmatprep.subr.mxu0 0.0
      %1604 = vmatpush1.msra.mxu0 0.0
      %1605 = vmatprep.subr.mxu0 0.0
      %1606 = vmatpush1.msra.mxu0 0.0
      %1607 = vmatprep.subr.mxu0 0.0
      %1608 = vmatpush1.msra.mxu0 0.0
      %1609 = vmatprep.subr.mxu0 0.0
      %1610 = vmatpush1.msra.mxu0 0.0
      %1611 = vmatprep.subr.mxu0 0.0
      %1612 = vmatpush1.msra.mxu0 0.0
      %1613 = vmatprep.subr.mxu0 0.0
      %1614 = vmatpush1.msra.mxu0 0.0
      %1615 = vmatprep.subr.mxu0 0.0
      %1616 = vmatpush1.msra.mxu0 0.0
      %1617 = vmatprep.subr.mxu0 0.0
      %1618 = vmatpush1.msra.mxu0 0.0
      %1619 = vmatprep.subr.mxu0 0.0
      %1620 = vmatpush1.msra.mxu0 0.0
      %1621 = vmatprep.subr.mxu0 0.0
      %1622 = vmatpush1.msra.mxu0 0.0
      %1623 = vmatprep.subr.mxu0 0.0
      %1624 = vmatpush1.msra.mxu0 0.0
      %1625 = vmatprep.subr.mxu0 0.0
      %1626 = vmatpush1.msra.mxu0 0.0
      %1627 = vmatprep.subr.mxu0 0.0
      %1628 = vmatpush1.msra.mxu0 0.0
      %1629 = vmatprep.subr.mxu0 0.0
      %1630 = vmatpush1.msra.mxu0 0.0
      %1631 = vmatprep.subr.mxu0 0.0
      %1632 = vmatpush1.msra.mxu0 0.0
      %1633 = vmatprep.mubr.f32.mxu0 0.0
      %1634 = vmatmul.mubr.f32.gmra.mrb[0].mxu0 %v1567
      %v1635 = vpop.f32.mrb[0].mxu0
      %v1636 = vadd.f32 %v1563, %v1635
      %v1637 = vpop.f32.mrb[0].mxu0
      %v1638 = vadd.f32 %v1563, %v1637
      %1639 = vdwg.mxu0
      %v1640 = vtanh.pop %v1636
      %v1641 = vtanh.pop %v1638
      %v1642 = vld [vmem:[%s4] sm:$0xff]
      %v1643 = vld [vmem:[%s5] sm:$0xff]
      %1644 = vmatprep.subr.mxu0 %v338
      %1645 = vmatpush1.msra.mxu0 %v337
      %1646 = vmatprep.subr.mxu0 %v340
      %1647 = vmatpush1.msra.mxu0 %v339
      %1648 = vmatprep.subr.mxu0 %v342
      %1649 = vmatpush1.msra.mxu0 %v341
      %1650 = vmatprep.subr.mxu0 %v344
      %1651 = vmatpush1.msra.mxu0 %v343
      %1652 = vmatprep.subr.mxu0 %v346
      %1653 = vmatpush1.msra.mxu0 %v345
      %1654 = vmatprep.subr.mxu0 %v348
      %1655 = vmatpush1.msra.mxu0 %v347
      %1656 = vmatprep.subr.mxu0 %v350
      %1657 = vmatpush1.msra.mxu0 %v349
      %1658 = vmatprep.subr.mxu0 %v352
      %1659 = vmatpush1.msra.mxu0 %v351
      %1660 = vmatprep.subr.mxu0 %v354
      %1661 = vmatpush1.msra.mxu0 %v353
      %1662 = vmatprep.subr.mxu0 %v356
      %1663 = vmatpush1.msra.mxu0 %v355
      %1664 = vmatprep.subr.mxu0 %v358
      %1665 = vmatpush1.msra.mxu0 %v357
      %1666 = vmatprep.subr.mxu0 %v360
      %1667 = vmatpush1.msra.mxu0 %v359
      %1668 = vmatprep.subr.mxu0 %v362
      %1669 = vmatpush1.msra.mxu0 %v361
      %1670 = vmatprep.subr.mxu0 %v364
      %1671 = vmatpush1.msra.mxu0 %v363
      %1672 = vmatprep.subr.mxu0 %v366
      %1673 = vmatpush1.msra.mxu0 %v365
      %1674 = vmatprep.subr.mxu0 %v368
      %1675 = vmatpush1.msra.mxu0 %v367
      %1676 = vmatprep.subr.mxu0 %v370
      %1677 = vmatpush1.msra.mxu0 %v369
      %1678 = vmatprep.subr.mxu0 %v372
      %1679 = vmatpush1.msra.mxu0 %v371
      %1680 = vmatprep.subr.mxu0 %v374
      %1681 = vmatpush1.msra.mxu0 %v373
      %1682 = vmatprep.subr.mxu0 %v376
      %1683 = vmatpush1.msra.mxu0 %v375
      %1684 = vmatprep.subr.mxu0 %v378
      %1685 = vmatpush1.msra.mxu0 %v377
      %1686 = vmatprep.subr.mxu0 %v380
      %1687 = vmatpush1.msra.mxu0 %v379
      %1688 = vmatprep.subr.mxu0 %v382
      %1689 = vmatpush1.msra.mxu0 %v381
      %1690 = vmatprep.subr.mxu0 %v384
      %1691 = vmatpush1.msra.mxu0 %v383
      %1692 = vmatprep.subr.mxu0 %v386
      %1693 = vmatpush1.msra.mxu0 %v385
      %1694 = vmatprep.subr.mxu0 %v388
      %1695 = vmatpush1.msra.mxu0 %v387
      %1696 = vmatprep.subr.mxu0 %v390
      %1697 = vmatpush1.msra.mxu0 %v389
      %1698 = vmatprep.subr.mxu0 %v392
      %1699 = vmatpush1.msra.mxu0 %v391
      %1700 = vmatprep.subr.mxu0 %v394
      %1701 = vmatpush1.msra.mxu0 %v393
      %1702 = vmatprep.subr.mxu0 %v396
      %1703 = vmatpush1.msra.mxu0 %v395
      %1704 = vmatprep.subr.mxu0 %v398
      %1705 = vmatpush1.msra.mxu0 %v397
      %1706 = vmatprep.subr.mxu0 %v400
      %1707 = vmatpush1.msra.mxu0 %v399
      %1708 = vmatprep.mubr.f32.mxu0 %v1641
      %1709 = vmatmul.mubr.f32.gmra.mrb[0].mxu0 %v1640
      %v1710 = vpop.f32.mrb[0].mxu0
      %v1711 = vadd.f32 0.0, %v1710
      %v1712 = vpop.f32.mrb[0].mxu0
      %v1713 = vadd.f32 0.0, %v1712
      %1714 = vdwg.mxu0
      %1715 = vmatprep.subr.mxu0 %v474
      %1716 = vmatpush1.msra.mxu0 %v473
      %1717 = vmatprep.subr.mxu0 %v476
      %1718 = vmatpush1.msra.mxu0 %v475
      %1719 = vmatprep.subr.mxu0 %v478
      %1720 = vmatpush1.msra.mxu0 %v477
      %1721 = vmatprep.subr.mxu0 %v480
      %1722 = vmatpush1.msra.mxu0 %v479
      %1723 = vmatprep.subr.mxu0 %v482
      %1724 = vmatpush1.msra.mxu0 %v481
      %1725 = vmatprep.subr.mxu0 %v484
      %1726 = vmatpush1.msra.mxu0 %v483
      %1727 = vmatprep.subr.mxu0 %v486
      %1728 = vmatpush1.msra.mxu0 %v485
      %1729 = vmatprep.subr.mxu0 %v488
      %1730 = vmatpush1.msra.mxu0 %v487
      %1731 = vmatprep.subr.mxu0 %v490
      %1732 = vmatpush1.msra.mxu0 %v489
      %1733 = vmatprep.subr.mxu0 %v492
      %1734 = vmatpush1.msra.mxu0 %v491
      %1735 = vmatprep.subr.mxu0 %v494
      %1736 = vmatpush1.msra.mxu0 %v493
      %1737 = vmatprep.subr.mxu0 %v496
      %1738 = vmatpush1.msra.mxu0 %v495
      %1739 = vmatprep.subr.mxu0 %v498
      %1740 = vmatpush1.msra.mxu0 %v497
      %1741 = vmatprep.subr.mxu0 %v500
      %1742 = vmatpush1.msra.mxu0 %v499
      %1743 = vmatprep.subr.mxu0 %v502
      %1744 = vmatpush1.msra.mxu0 %v501
      %1745 = vmatprep.subr.mxu0 %v504
      %1746 = vmatpush1.msra.mxu0 %v503
      %1747 = vmatprep.subr.mxu0 %v506
      %1748 = vmatpush1.msra.mxu0 %v505
      %1749 = vmatprep.subr.mxu0 %v508
      %1750 = vmatpush1.msra.mxu0 %v507
      %1751 = vmatprep.subr.mxu0 %v510
      %1752 = vmatpush1.msra.mxu0 %v509
      %1753 = vmatprep.subr.mxu0 %v512
      %1754 = vmatpush1.msra.mxu0 %v511
      %1755 = vmatprep.subr.mxu0 %v514
      %1756 = vmatpush1.msra.mxu0 %v513
      %1757 = vmatprep.subr.mxu0 %v516
      %1758 = vmatpush1.msra.mxu0 %v515
      %1759 = vmatprep.subr.mxu0 %v518
      %1760 = vmatpush1.msra.mxu0 %v517
      %1761 = vmatprep.subr.mxu0 %v520
      %1762 = vmatpush1.msra.mxu0 %v519
      %1763 = vmatprep.subr.mxu0 %v522
      %1764 = vmatpush1.msra.mxu0 %v521
      %1765 = vmatprep.subr.mxu0 %v524
      %1766 = vmatpush1.msra.mxu0 %v523
      %1767 = vmatprep.subr.mxu0 %v526
      %1768 = vmatpush1.msra.mxu0 %v525
      %1769 = vmatprep.subr.mxu0 %v528
      %1770 = vmatpush1.msra.mxu0 %v527
      %1771 = vmatprep.subr.mxu0 %v530
      %1772 = vmatpush1.msra.mxu0 %v529
      %1773 = vmatprep.subr.mxu0 %v532
      %1774 = vmatpush1.msra.mxu0 %v531
      %1775 = vmatprep.subr.mxu0 %v534
      %1776 = vmatpush1.msra.mxu0 %v533
      %1777 = vmatprep.subr.mxu0 %v536
      %1778 = vmatpush1.msra.mxu0 %v535
      %1779 = vmatprep.mubr.f32.mxu0 %v1641
      %1780 = vmatmul.mubr.f32.gmra.mrb[0].mxu0 %v1640
      %v1781 = vpop.f32.mrb[0].mxu0
      %v1782 = vadd.f32 0.0, %v1781
      %v1783 = vpop.f32.mrb[0].mxu0
      %v1784 = vadd.f32 0.0, %v1783
      %1785 = vdwg.mxu0
      %1786 = vmatprep.subr.mxu0 %v610
      %1787 = vmatpush1.msra.mxu0 %v609
      %1788 = vmatprep.subr.mxu0 %v612
      %1789 = vmatpush1.msra.mxu0 %v611
      %1790 = vmatprep.subr.mxu0 %v614
      %1791 = vmatpush1.msra.mxu0 %v613
      %1792 = vmatprep.subr.mxu0 %v616
      %1793 = vmatpush1.msra.mxu0 %v615
      %1794 = vmatprep.subr.mxu0 %v618
      %1795 = vmatpush1.msra.mxu0 %v617
      %1796 = vmatprep.subr.mxu0 %v620
      %1797 = vmatpush1.msra.mxu0 %v619
      %1798 = vmatprep.subr.mxu0 %v622
      %1799 = vmatpush1.msra.mxu0 %v621
      %1800 = vmatprep.subr.mxu0 %v624
      %1801 = vmatpush1.msra.mxu0 %v623
      %1802 = vmatprep.subr.mxu0 %v626
      %1803 = vmatpush1.msra.mxu0 %v625
      %1804 = vmatprep.subr.mxu0 %v628
      %1805 = vmatpush1.msra.mxu0 %v627
      %1806 = vmatprep.subr.mxu0 %v630
      %1807 = vmatpush1.msra.mxu0 %v629
      %1808 = vmatprep.subr.mxu0 %v632
      %1809 = vmatpush1.msra.mxu0 %v631
      %1810 = vmatprep.subr.mxu0 %v634
      %1811 = vmatpush1.msra.mxu0 %v633
      %1812 = vmatprep.subr.mxu0 %v636
      %1813 = vmatpush1.msra.mxu0 %v635
      %1814 = vmatprep.subr.mxu0 %v638
      %1815 = vmatpush1.msra.mxu0 %v637
      %1816 = vmatprep.subr.mxu0 %v640
      %1817 = vmatpush1.msra.mxu0 %v639
      %1818 = vmatprep.subr.mxu0 %v642
      %1819 = vmatpush1.msra.mxu0 %v641
      %1820 = vmatprep.subr.mxu0 %v644
      %1821 = vmatpush1.msra.mxu0 %v643
      %1822 = vmatprep.subr.mxu0 %v646
      %1823 = vmatpush1.msra.mxu0 %v645
      %1824 = vmatprep.subr.mxu0 %v648
      %1825 = vmatpush1.msra.mxu0 %v647
      %1826 = vmatprep.subr.mxu0 %v650
      %1827 = vmatpush1.msra.mxu0 %v649
      %1828 = vmatprep.subr.mxu0 %v652
      %1829 = vmatpush1.msra.mxu0 %v651
      %1830 = vmatprep.subr.mxu0 %v654
      %1831 = vmatpush1.msra.mxu0 %v653
      %1832 = vmatprep.subr.mxu0 %v656
      %1833 = vmatpush1.msra.mxu0 %v655
      %1834 = vmatprep.subr.mxu0 %v658
      %1835 = vmatpush1.msra.mxu0 %v657
      %1836 = vmatprep.subr.mxu0 %v660
      %1837 = vmatpush1.msra.mxu0 %v659
      %1838 = vmatprep.subr.mxu0 %v662
      %1839 = vmatpush1.msra.mxu0 %v661
      %1840 = vmatprep.subr.mxu0 %v664
      %1841 = vmatpush1.msra.mxu0 %v663
      %1842 = vmatprep.subr.mxu0 %v666
      %1843 = vmatpush1.msra.mxu0 %v665
      %1844 = vmatprep.subr.mxu0 %v668
      %1845 = vmatpush1.msra.mxu0 %v667
      %1846 = vmatprep.subr.mxu0 %v670
      %1847 = vmatpush1.msra.mxu0 %v669
      %1848 = vmatprep.subr.mxu0 %v672
      %1849 = vmatpush1.msra.mxu0 %v671
      %1850 = vmatprep.mubr.f32.mxu0 %v1641
      %1851 = vmatmul.mubr.f32.gmra.mrb[0].mxu0 %v1640
      %v1852 = vpop.f32.mrb[0].mxu0
      %v1853 = vadd.f32 0.0, %v1852
      %v1854 = vpop.f32.mrb[0].mxu0
      %v1855 = vadd.f32 0.0, %v1854
      %1856 = vdwg.mxu0
      %1857 = vmatprep.subr.mxu0 %v746
      %1858 = vmatpush1.msra.mxu0 %v745
      %1859 = vmatprep.subr.mxu0 %v748
      %1860 = vmatpush1.msra.mxu0 %v747
      %1861 = vmatprep.subr.mxu0 %v750
      %1862 = vmatpush1.msra.mxu0 %v749
      %1863 = vmatprep.subr.mxu0 %v752
      %1864 = vmatpush1.msra.mxu0 %v751
      %1865 = vmatprep.subr.mxu0 %v754
      %1866 = vmatpush1.msra.mxu0 %v753
      %1867 = vmatprep.subr.mxu0 %v756
      %1868 = vmatpush1.msra.mxu0 %v755
      %1869 = vmatprep.subr.mxu0 %v758
      %1870 = vmatpush1.msra.mxu0 %v757
      %1871 = vmatprep.subr.mxu0 %v760
      %1872 = vmatpush1.msra.mxu0 %v759
      %1873 = vmatprep.subr.mxu0 %v762
      %1874 = vmatpush1.msra.mxu0 %v761
      %1875 = vmatprep.subr.mxu0 %v764
      %1876 = vmatpush1.msra.mxu0 %v763
      %1877 = vmatprep.subr.mxu0 %v766
      %1878 = vmatpush1.msra.mxu0 %v765
      %1879 = vmatprep.subr.mxu0 %v768
      %1880 = vmatpush1.msra.mxu0 %v767
      %1881 = vmatprep.subr.mxu0 %v770
      %1882 = vmatpush1.msra.mxu0 %v769
      %1883 = vmatprep.subr.mxu0 %v772
      %1884 = vmatpush1.msra.mxu0 %v771
      %1885 = vmatprep.subr.mxu0 %v774
      %1886 = vmatpush1.msra.mxu0 %v773
      %1887 = vmatprep.subr.mxu0 %v776
      %1888 = vmatpush1.msra.mxu0 %v775
      %1889 = vmatprep.subr.mxu0 %v778
      %1890 = vmatpush1.msra.mxu0 %v777
      %1891 = vmatprep.subr.mxu0 %v780
      %1892 = vmatpush1.msra.mxu0 %v779
      %1893 = vmatprep.subr.mxu0 %v782
      %1894 = vmatpush1.msra.mxu0 %v781
      %1895 = vmatprep.subr.mxu0 %v784
      %1896 = vmatpush1.msra.mxu0 %v783
      %1897 = vmatprep.subr.mxu0 %v786
      %1898 = vmatpush1.msra.mxu0 %v785
      %1899 = vmatprep.subr.mxu0 %v788
      %1900 = vmatpush1.msra.mxu0 %v787
      %1901 = vmatprep.subr.mxu0 %v790
      %1902 = vmatpush1.msra.mxu0 %v789
      %1903 = vmatprep.subr.mxu0 %v792
      %1904 = vmatpush1.msra.mxu0 %v791
      %1905 = vmatprep.subr.mxu0 %v794
      %1906 = vmatpush1.msra.mxu0 %v793
      %1907 = vmatprep.subr.mxu0 %v796
      %1908 = vmatpush1.msra.mxu0 %v795
      %1909 = vmatprep.subr.mxu0 %v798
      %1910 = vmatpush1.msra.mxu0 %v797
      %1911 = vmatprep.subr.mxu0 %v800
      %1912 = vmatpush1.msra.mxu0 %v799
      %1913 = vmatprep.subr.mxu0 %v802
      %1914 = vmatpush1.msra.mxu0 %v801
      %1915 = vmatprep.subr.mxu0 %v804
      %1916 = vmatpush1.msra.mxu0 %v803
      %1917 = vmatprep.subr.mxu0 %v806
      %1918 = vmatpush1.msra.mxu0 %v805
      %1919 = vmatprep.subr.mxu0 %v808
      %1920 = vmatpush1.msra.mxu0 %v807
      %1921 = vmatprep.mubr.f32.mxu0 %v1641
      %1922 = vmatmul.mubr.f32.gmra.mrb[0].mxu0 %v1640
      %v1923 = vpop.f32.mrb[0].mxu0
      %v1924 = vadd.f32 0.0, %v1923
      %v1925 = vpop.f32.mrb[0].mxu0
      %v1926 = vadd.f32 0.0, %v1925
      %1927 = vdwg.mxu0
      %1928 = vmatprep.subr.mxu0 %v882
      %1929 = vmatpush1.msra.mxu0 %v881
      %1930 = vmatprep.subr.mxu0 %v884
      %1931 = vmatpush1.msra.mxu0 %v883
      %1932 = vmatprep.subr.mxu0 %v886
      %1933 = vmatpush1.msra.mxu0 %v885
      %1934 = vmatprep.subr.mxu0 %v888
      %1935 = vmatpush1.msra.mxu0 %v887
      %1936 = vmatprep.subr.mxu0 %v890
      %1937 = vmatpush1.msra.mxu0 %v889
      %1938 = vmatprep.subr.mxu0 %v892
      %1939 = vmatpush1.msra.mxu0 %v891
      %1940 = vmatprep.subr.mxu0 %v894
      %1941 = vmatpush1.msra.mxu0 %v893
      %1942 = vmatprep.subr.mxu0 %v896
      %1943 = vmatpush1.msra.mxu0 %v895
      %1944 = vmatprep.subr.mxu0 %v898
      %1945 = vmatpush1.msra.mxu0 %v897
      %1946 = vmatprep.subr.mxu0 %v900
      %1947 = vmatpush1.msra.mxu0 %v899
      %1948 = vmatprep.subr.mxu0 %v902
      %1949 = vmatpush1.msra.mxu0 %v901
      %1950 = vmatprep.subr.mxu0 %v904
      %1951 = vmatpush1.msra.mxu0 %v903
      %1952 = vmatprep.subr.mxu0 %v906
      %1953 = vmatpush1.msra.mxu0 %v905
      %1954 = vmatprep.subr.mxu0 %v908
      %1955 = vmatpush1.msra.mxu0 %v907
      %1956 = vmatprep.subr.mxu0 %v910
      %1957 = vmatpush1.msra.mxu0 %v909
      %1958 = vmatprep.subr.mxu0 %v912
      %1959 = vmatpush1.msra.mxu0 %v911
      %1960 = vmatprep.subr.mxu0 %v914
      %1961 = vmatpush1.msra.mxu0 %v913
      %1962 = vmatprep.subr.mxu0 %v916
      %1963 = vmatpush1.msra.mxu0 %v915
      %1964 = vmatprep.subr.mxu0 %v918
      %1965 = vmatpush1.msra.mxu0 %v917
      %1966 = vmatprep.subr.mxu0 %v920
      %1967 = vmatpush1.msra.mxu0 %v919
      %1968 = vmatprep.subr.mxu0 %v922
      %1969 = vmatpush1.msra.mxu0 %v921
      %1970 = vmatprep.subr.mxu0 %v924
      %1971 = vmatpush1.msra.mxu0 %v923
      %1972 = vmatprep.subr.mxu0 %v926
      %1973 = vmatpush1.msra.mxu0 %v925
      %1974 = vmatprep.subr.mxu0 %v928
      %1975 = vmatpush1.msra.mxu0 %v927
      %1976 = vmatprep.subr.mxu0 %v930
      %1977 = vmatpush1.msra.mxu0 %v929
      %1978 = vmatprep.subr.mxu0 %v932
      %1979 = vmatpush1.msra.mxu0 %v931
      %1980 = vmatprep.subr.mxu0 %v934
      %1981 = vmatpush1.msra.mxu0 %v933
      %1982 = vmatprep.subr.mxu0 %v936
      %1983 = vmatpush1.msra.mxu0 %v935
      %1984 = vmatprep.subr.mxu0 %v938
      %1985 = vmatpush1.msra.mxu0 %v937
      %1986 = vmatprep.subr.mxu0 %v940
      %1987 = vmatpush1.msra.mxu0 %v939
      %1988 = vmatprep.subr.mxu0 %v942
      %1989 = vmatpush1.msra.mxu0 %v941
      %1990 = vmatprep.subr.mxu0 %v944
      %1991 = vmatpush1.msra.mxu0 %v943
      %1992 = vmatprep.mubr.f32.mxu0 %v1641
      %1993 = vmatmul.mubr.f32.gmra.mrb[0].mxu0 %v1640
      %v1994 = vpop.f32.mrb[0].mxu0
      %v1995 = vadd.f32 0.0, %v1994
      %v1996 = vpop.f32.mrb[0].mxu0
      %v1997 = vadd.f32 0.0, %v1996
      %1998 = vdwg.mxu0
      %1999 = vmatprep.subr.mxu0 %v1018
      %2000 = vmatpush1.msra.mxu0 %v1017
      %2001 = vmatprep.subr.mxu0 %v1020
      %2002 = vmatpush1.msra.mxu0 %v1019
      %2003 = vmatprep.subr.mxu0 %v1022
      %2004 = vmatpush1.msra.mxu0 %v1021
      %2005 = vmatprep.subr.mxu0 %v1024
      %2006 = vmatpush1.msra.mxu0 %v1023
      %2007 = vmatprep.subr.mxu0 %v1026
      %2008 = vmatpush1.msra.mxu0 %v1025
      %2009 = vmatprep.subr.mxu0 %v1028
      %2010 = vmatpush1.msra.mxu0 %v1027
      %2011 = vmatprep.subr.mxu0 %v1030
      %2012 = vmatpush1.msra.mxu0 %v1029
      %2013 = vmatprep.subr.mxu0 %v1032
      %2014 = vmatpush1.msra.mxu0 %v1031
      %2015 = vmatprep.subr.mxu0 %v1034
      %2016 = vmatpush1.msra.mxu0 %v1033
      %2017 = vmatprep.subr.mxu0 %v1036
      %2018 = vmatpush1.msra.mxu0 %v1035
      %2019 = vmatprep.subr.mxu0 %v1038
      %2020 = vmatpush1.msra.mxu0 %v1037
      %2021 = vmatprep.subr.mxu0 %v1040
      %2022 = vmatpush1.msra.mxu0 %v1039
      %2023 = vmatprep.subr.mxu0 %v1042
      %2024 = vmatpush1.msra.mxu0 %v1041
      %2025 = vmatprep.subr.mxu0 %v1044
      %2026 = vmatpush1.msra.mxu0 %v1043
      %2027 = vmatprep.subr.mxu0 %v1046
      %2028 = vmatpush1.msra.mxu0 %v1045
      %2029 = vmatprep.subr.mxu0 %v1048
      %2030 = vmatpush1.msra.mxu0 %v1047
      %2031 = vmatprep.subr.mxu0 %v1050
      %2032 = vmatpush1.msra.mxu0 %v1049
      %2033 = vmatprep.subr.mxu0 %v1052
      %2034 = vmatpush1.msra.mxu0 %v1051
      %2035 = vmatprep.subr.mxu0 %v1054
      %2036 = vmatpush1.msra.mxu0 %v1053
      %2037 = vmatprep.subr.mxu0 %v1056
      %2038 = vmatpush1.msra.mxu0 %v1055
      %2039 = vmatprep.subr.mxu0 %v1058
      %2040 = vmatpush1.msra.mxu0 %v1057
      %2041 = vmatprep.subr.mxu0 %v1060
      %2042 = vmatpush1.msra.mxu0 %v1059
      %2043 = vmatprep.subr.mxu0 %v1062
      %2044 = vmatpush1.msra.mxu0 %v1061
      %2045 = vmatprep.subr.mxu0 %v1064
      %2046 = vmatpush1.msra.mxu0 %v1063
      %2047 = vmatprep.subr.mxu0 %v1066
      %2048 = vmatpush1.msra.mxu0 %v1065
      %2049 = vmatprep.subr.mxu0 %v1068
      %2050 = vmatpush1.msra.mxu0 %v1067
      %2051 = vmatprep.subr.mxu0 %v1070
      %2052 = vmatpush1.msra.mxu0 %v1069
      %2053 = vmatprep.subr.mxu0 %v1072
      %2054 = vmatpush1.msra.mxu0 %v1071
      %2055 = vmatprep.subr.mxu0 %v1074
      %2056 = vmatpush1.msra.mxu0 %v1073
      %2057 = vmatprep.subr.mxu0 %v1076
      %2058 = vmatpush1.msra.mxu0 %v1075
      %2059 = vmatprep.subr.mxu0 %v1078
      %2060 = vmatpush1.msra.mxu0 %v1077
      %2061 = vmatprep.subr.mxu0 %v1080
      %2062 = vmatpush1.msra.mxu0 %v1079
      %2063 = vmatprep.mubr.f32.mxu0 %v1641
      %2064 = vmatmul.mubr.f32.gmra.mrb[0].mxu0 %v1640
      %v2065 = vpop.f32.mrb[0].mxu0
      %v2066 = vadd.f32 0.0, %v2065
      %v2067 = vpop.f32.mrb[0].mxu0
      %v2068 = vadd.f32 0.0, %v2067
      %2069 = vdwg.mxu0
      %2070 = vmatprep.subr.mxu0 %v1154
      %2071 = vmatpush1.msra.mxu0 %v1153
      %2072 = vmatprep.subr.mxu0 %v1156
      %2073 = vmatpush1.msra.mxu0 %v1155
      %2074 = vmatprep.subr.mxu0 %v1158
      %2075 = vmatpush1.msra.mxu0 %v1157
      %2076 = vmatprep.subr.mxu0 %v1160
      %2077 = vmatpush1.msra.mxu0 %v1159
      %2078 = vmatprep.subr.mxu0 %v1162
      %2079 = vmatpush1.msra.mxu0 %v1161
      %2080 = vmatprep.subr.mxu0 %v1164
      %2081 = vmatpush1.msra.mxu0 %v1163
      %2082 = vmatprep.subr.mxu0 %v1166
      %2083 = vmatpush1.msra.mxu0 %v1165
      %2084 = vmatprep.subr.mxu0 %v1168
      %2085 = vmatpush1.msra.mxu0 %v1167
      %2086 = vmatprep.subr.mxu0 %v1170
      %2087 = vmatpush1.msra.mxu0 %v1169
      %2088 = vmatprep.subr.mxu0 %v1172
      %2089 = vmatpush1.msra.mxu0 %v1171
      %2090 = vmatprep.subr.mxu0 %v1174
      %2091 = vmatpush1.msra.mxu0 %v1173
      %2092 = vmatprep.subr.mxu0 %v1176
      %2093 = vmatpush1.msra.mxu0 %v1175
      %2094 = vmatprep.subr.mxu0 %v1178
      %2095 = vmatpush1.msra.mxu0 %v1177
      %2096 = vmatprep.subr.mxu0 %v1180
      %2097 = vmatpush1.msra.mxu0 %v1179
      %2098 = vmatprep.subr.mxu0 %v1182
      %2099 = vmatpush1.msra.mxu0 %v1181
      %2100 = vmatprep.subr.mxu0 %v1184
      %2101 = vmatpush1.msra.mxu0 %v1183
      %2102 = vmatprep.subr.mxu0 %v1186
      %2103 = vmatpush1.msra.mxu0 %v1185
      %2104 = vmatprep.subr.mxu0 %v1188
      %2105 = vmatpush1.msra.mxu0 %v1187
      %2106 = vmatprep.subr.mxu0 %v1190
      %2107 = vmatpush1.msra.mxu0 %v1189
      %2108 = vmatprep.subr.mxu0 %v1192
      %2109 = vmatpush1.msra.mxu0 %v1191
      %2110 = vmatprep.subr.mxu0 %v1194
      %2111 = vmatpush1.msra.mxu0 %v1193
      %2112 = vmatprep.subr.mxu0 %v1196
      %2113 = vmatpush1.msra.mxu0 %v1195
      %2114 = vmatprep.subr.mxu0 %v1198
      %2115 = vmatpush1.msra.mxu0 %v1197
      %2116 = vmatprep.subr.mxu0 %v1200
      %2117 = vmatpush1.msra.mxu0 %v1199
      %2118 = vmatprep.subr.mxu0 %v1202
      %2119 = vmatpush1.msra.mxu0 %v1201
      %2120 = vmatprep.subr.mxu0 %v1204
      %2121 = vmatpush1.msra.mxu0 %v1203
      %2122 = vmatprep.subr.mxu0 %v1206
      %2123 = vmatpush1.msra.mxu0 %v1205
      %2124 = vmatprep.subr.mxu0 %v1208
      %2125 = vmatpush1.msra.mxu0 %v1207
      %2126 = vmatprep.subr.mxu0 %v1210
      %2127 = vmatpush1.msra.mxu0 %v1209
      %2128 = vmatprep.subr.mxu0 %v1212
      %2129 = vmatpush1.msra.mxu0 %v1211
      %2130 = vmatprep.subr.mxu0 %v1214
      %2131 = vmatpush1.msra.mxu0 %v1213
      %2132 = vmatprep.subr.mxu0 %v1216
      %2133 = vmatpush1.msra.mxu0 %v1215
      %2134 = vmatprep.mubr.f32.mxu0 %v1641
      %2135 = vmatmul.mubr.f32.gmra.mrb[0].mxu0 %v1640
      %v2136 = vpop.f32.mrb[0].mxu0
      %v2137 = vadd.f32 0.0, %v2136
      %v2138 = vpop.f32.mrb[0].mxu0
      %v2139 = vadd.f32 0.0, %v2138
      %2140 = vdwg.mxu0
      %2141 = vmatprep.subr.mxu0 %v1290
      %2142 = vmatpush1.msra.mxu0 %v1289
      %2143 = vmatprep.subr.mxu0 %v1292
      %2144 = vmatpush1.msra.mxu0 %v1291
      %2145 = vmatprep.subr.mxu0 %v1294
      %2146 = vmatpush1.msra.mxu0 %v1293
      %2147 = vmatprep.subr.mxu0 %v1296
      %2148 = vmatpush1.msra.mxu0 %v1295
      %2149 = vmatprep.subr.mxu0 %v1298
      %2150 = vmatpush1.msra.mxu0 %v1297
      %2151 = vmatprep.subr.mxu0 %v1300
      %2152 = vmatpush1.msra.mxu0 %v1299
      %2153 = vmatprep.subr.mxu0 %v1302
      %2154 = vmatpush1.msra.mxu0 %v1301
      %2155 = vmatprep.subr.mxu0 %v1304
      %2156 = vmatpush1.msra.mxu0 %v1303
      %2157 = vmatprep.subr.mxu0 %v1306
      %2158 = vmatpush1.msra.mxu0 %v1305
      %2159 = vmatprep.subr.mxu0 %v1308
      %2160 = vmatpush1.msra.mxu0 %v1307
      %2161 = vmatprep.subr.mxu0 %v1310
      %2162 = vmatpush1.msra.mxu0 %v1309
      %2163 = vmatprep.subr.mxu0 %v1312
      %2164 = vmatpush1.msra.mxu0 %v1311
      %2165 = vmatprep.subr.mxu0 %v1314
      %2166 = vmatpush1.msra.mxu0 %v1313
      %2167 = vmatprep.subr.mxu0 %v1316
      %2168 = vmatpush1.msra.mxu0 %v1315
      %2169 = vmatprep.subr.mxu0 %v1318
      %2170 = vmatpush1.msra.mxu0 %v1317
      %2171 = vmatprep.subr.mxu0 %v1320
      %2172 = vmatpush1.msra.mxu0 %v1319
      %2173 = vmatprep.subr.mxu0 %v1322
      %2174 = vmatpush1.msra.mxu0 %v1321
      %2175 = vmatprep.subr.mxu0 %v1324
      %2176 = vmatpush1.msra.mxu0 %v1323
      %2177 = vmatprep.subr.mxu0 %v1326
      %2178 = vmatpush1.msra.mxu0 %v1325
      %2179 = vmatprep.subr.mxu0 %v1328
      %2180 = vmatpush1.msra.mxu0 %v1327
      %2181 = vmatprep.subr.mxu0 %v1330
      %2182 = vmatpush1.msra.mxu0 %v1329
      %2183 = vmatprep.subr.mxu0 %v1332
      %2184 = vmatpush1.msra.mxu0 %v1331
      %2185 = vmatprep.subr.mxu0 %v1334
      %2186 = vmatpush1.msra.mxu0 %v1333
      %2187 = vmatprep.subr.mxu0 %v1336
      %2188 = vmatpush1.msra.mxu0 %v1335
      %2189 = vmatprep.subr.mxu0 %v1338
      %2190 = vmatpush1.msra.mxu0 %v1337
      %2191 = vmatprep.subr.mxu0 %v1340
      %2192 = vmatpush1.msra.mxu0 %v1339
      %2193 = vmatprep.subr.mxu0 %v1342
      %2194 = vmatpush1.msra.mxu0 %v1341
      %2195 = vmatprep.subr.mxu0 %v1344
      %2196 = vmatpush1.msra.mxu0 %v1343
      %2197 = vmatprep.subr.mxu0 %v1346
      %2198 = vmatpush1.msra.mxu0 %v1345
      %2199 = vmatprep.subr.mxu0 %v1348
      %2200 = vmatpush1.msra.mxu0 %v1347
      %2201 = vmatprep.subr.mxu0 %v1350
      %2202 = vmatpush1.msra.mxu0 %v1349
      %2203 = vmatprep.subr.mxu0 %v1352
      %2204 = vmatpush1.msra.mxu0 %v1351
      %2205 = vmatprep.mubr.f32.mxu0 %v1641
      %2206 = vmatmul.mubr.f32.gmra.mrb[0].mxu0 %v1640
      %v2207 = vpop.f32.mrb[0].mxu0
      %v2208 = vadd.f32 0.0, %v2207
      %v2209 = vpop.f32.mrb[0].mxu0
      %v2210 = vadd.f32 0.0, %v2209
      %2211 = vdwg.mxu0
      %2212 = vmatprep.subr.mxu0 %v1426
      %2213 = vmatpush1.msra.mxu0 %v1425
      %2214 = vmatprep.subr.mxu0 %v1428
      %2215 = vmatpush1.msra.mxu0 %v1427
      %2216 = vmatprep.subr.mxu0 %v1430
      %2217 = vmatpush1.msra.mxu0 %v1429
      %2218 = vmatprep.subr.mxu0 %v1432
      %2219 = vmatpush1.msra.mxu0 %v1431
      %2220 = vmatprep.subr.mxu0 %v1434
      %2221 = vmatpush1.msra.mxu0 %v1433
      %2222 = vmatprep.subr.mxu0 %v1436
      %2223 = vmatpush1.msra.mxu0 %v1435
      %2224 = vmatprep.subr.mxu0 %v1438
      %2225 = vmatpush1.msra.mxu0 %v1437
      %2226 = vmatprep.subr.mxu0 %v1440
      %2227 = vmatpush1.msra.mxu0 %v1439
      %2228 = vmatprep.subr.mxu0 %v1442
      %2229 = vmatpush1.msra.mxu0 %v1441
      %2230 = vmatprep.subr.mxu0 %v1444
      %2231 = vmatpush1.msra.mxu0 %v1443
      %2232 = vmatprep.subr.mxu0 %v1446
      %2233 = vmatpush1.msra.mxu0 %v1445
      %2234 = vmatprep.subr.mxu0 %v1448
      %2235 = vmatpush1.msra.mxu0 %v1447
      %2236 = vmatprep.subr.mxu0 %v1450
      %2237 = vmatpush1.msra.mxu0 %v1449
      %2238 = vmatprep.subr.mxu0 %v1452
      %2239 = vmatpush1.msra.mxu0 %v1451
      %2240 = vmatprep.subr.mxu0 %v1454
      %2241 = vmatpush1.msra.mxu0 %v1453
      %2242 = vmatprep.subr.mxu0 %v1456
      %2243 = vmatpush1.msra.mxu0 %v1455
      %2244 = vmatprep.subr.mxu0 %v1458
      %2245 = vmatpush1.msra.mxu0 %v1457
      %2246 = vmatprep.subr.mxu0 %v1460
      %2247 = vmatpush1.msra.mxu0 %v1459
      %2248 = vmatprep.subr.mxu0 %v1462
      %2249 = vmatpush1.msra.mxu0 %v1461
      %2250 = vmatprep.subr.mxu0 %v1464
      %2251 = vmatpush1.msra.mxu0 %v1463
      %2252 = vmatprep.subr.mxu0 %v1466
      %2253 = vmatpush1.msra.mxu0 %v1465
      %2254 = vmatprep.subr.mxu0 %v1468
      %2255 = vmatpush1.msra.mxu0 %v1467
      %2256 = vmatprep.subr.mxu0 %v1470
      %2257 = vmatpush1.msra.mxu0 %v1469
      %2258 = vmatprep.subr.mxu0 %v1472
      %2259 = vmatpush1.msra.mxu0 %v1471
      %2260 = vmatprep.subr.mxu0 %v1474
      %2261 = vmatpush1.msra.mxu0 %v1473
      %2262 = vmatprep.subr.mxu0 %v1476
      %2263 = vmatpush1.msra.mxu0 %v1475
      %2264 = vmatprep.subr.mxu0 %v1478
      %2265 = vmatpush1.msra.mxu0 %v1477
      %2266 = vmatprep.subr.mxu0 %v1480
      %2267 = vmatpush1.msra.mxu0 %v1479
      %2268 = vmatprep.subr.mxu0 %v1482
      %2269 = vmatpush1.msra.mxu0 %v1481
      %2270 = vmatprep.subr.mxu0 %v1484
      %2271 = vmatpush1.msra.mxu0 %v1483
      %2272 = vmatprep.subr.mxu0 %v1486
      %2273 = vmatpush1.msra.mxu0 %v1485
      %2274 = vmatprep.subr.mxu0 %v1488
      %2275 = vmatpush1.msra.mxu0 %v1487
      %2276 = vmatprep.mubr.f32.mxu0 %v1641
      %2277 = vmatmul.mubr.f32.gmra.mrb[0].mxu0 %v1640
      %v2278 = vpop.f32.mrb[0].mxu0
      %v2279 = vadd.f32 0.0, %v2278
      %v2280 = vpop.f32.mrb[0].mxu0
      %v2281 = vadd.f32 0.0, %v2280
      %2282 = vdwg.mxu0
      %2284 = vset.pattern.permute.xlu0 0
      %2285 = vperm.xlu0 %2284, %v1643
      %v2286 = vpop.permute.xlu0 %2285
      %v2289 = vsel %vm1565, %v1642, 0
      %2291 = vmatprep.subr.mxu0 %v1713
      %2292 = vmatpush1.msra.mxu0 %v1711
      %2293 = vmatprep.subr.mxu0 %v1784
      %2294 = vmatpush1.msra.mxu0 %v1782
      %2295 = vmatprep.subr.mxu0 %v1855
      %2296 = vmatpush1.msra.mxu0 %v1853
      %2297 = vmatprep.subr.mxu0 %v1926
      %2298 = vmatpush1.msra.mxu0 %v1924
      %2299 = vmatprep.subr.mxu0 %v1997
      %2300 = vmatpush1.msra.mxu0 %v1995
      %2301 = vmatprep.subr.mxu0 %v2068
      %2302 = vmatpush1.msra.mxu0 %v2066
      %2303 = vmatprep.subr.mxu0 %v2139
      %2304 = vmatpush1.msra.mxu0 %v2137
      %2305 = vmatprep.subr.mxu0 %v2210
      %2306 = vmatpush1.msra.mxu0 %v2208
      %2307 = vmatprep.subr.mxu0 %v2281
      %2308 = vmatpush1.msra.mxu0 %v2279
      %2309 = vmatprep.subr.mxu0 0.0
      %2310 = vmatpush1.msra.mxu0 0.0
      %2311 = vmatprep.subr.mxu0 0.0
      %2312 = vmatpush1.msra.mxu0 0.0
      %2313 = vmatprep.subr.mxu0 0.0
      %2314 = vmatpush1.msra.mxu0 0.0
      %2315 = vmatprep.subr.mxu0 0.0
      %2316 = vmatpush1.msra.mxu0 0.0
      %2317 = vmatprep.subr.mxu0 0.0
      %2318 = vmatpush1.msra.mxu0 0.0
      %2319 = vmatprep.subr.mxu0 0.0
      %2320 = vmatpush1.msra.mxu0 0.0
      %2321 = vmatprep.subr.mxu0 0.0
      %2322 = vmatpush1.msra.mxu0 0.0
      %2323 = vmatprep.subr.mxu0 0.0
      %2324 = vmatpush1.msra.mxu0 0.0
      %2325 = vmatprep.subr.mxu0 0.0
      %2326 = vmatpush1.msra.mxu0 0.0
      %2327 = vmatprep.subr.mxu0 0.0
      %2328 = vmatpush1.msra.mxu0 0.0
      %2329 = vmatprep.subr.mxu0 0.0
      %2330 = vmatpush1.msra.mxu0 0.0
      %2331 = vmatprep.subr.mxu0 0.0
      %2332 = vmatpush1.msra.mxu0 0.0
      %2333 = vmatprep.subr.mxu0 0.0
      %2334 = vmatpush1.msra.mxu0 0.0
      %2335 = vmatprep.subr.mxu0 0.0
      %2336 = vmatpush1.msra.mxu0 0.0
      %2337 = vmatprep.subr.mxu0 0.0
      %2338 = vmatpush1.msra.mxu0 0.0
      %2339 = vmatprep.subr.mxu0 0.0
      %2340 = vmatpush1.msra.mxu0 0.0
      %2341 = vmatprep.subr.mxu0 0.0
      %2342 = vmatpush1.msra.mxu0 0.0
      %2343 = vmatprep.subr.mxu0 0.0
      %2344 = vmatpush1.msra.mxu0 0.0
      %2345 = vmatprep.subr.mxu0 0.0
      %2346 = vmatpush1.msra.mxu0 0.0
      %2347 = vmatprep.subr.mxu0 0.0
      %2348 = vmatpush1.msra.mxu0 0.0
      %2349 = vmatprep.subr.mxu0 0.0
      %2350 = vmatpush1.msra.mxu0 0.0
      %2351 = vmatprep.subr.mxu0 0.0
      %2352 = vmatpush1.msra.mxu0 0.0
      %2353 = vmatprep.subr.mxu0 0.0
      %2354 = vmatpush1.msra.mxu0 0.0
      %2355 = vmatprep.mubr.f32.mxu0 0.0
      %2356 = vmatmul.mubr.f32.gmra.mrb[0].mxu0 %v2289
      %v2357 = vpop.f32.mrb[0].mxu0
      %v2358 = vadd.f32 %v2286, %v2357
      %v2359 = vpop.f32.mrb[0].mxu0
      %v2360 = vadd.f32 %v2286, %v2359
      %2361 = vdwg.mxu0
      %v2362 = vld [vmem:[%s6] sm:$0xff]
      %vm2363 = vcmask 64512
      %v2365 = vsel %vm2363, %v2362, 0
      %2367 = vmatprep.subr.mxu0 %v334
      %2368 = vmatpush1.msra.mxu0 %v333
      %2369 = vmatprep.subr.mxu0 0.0
      %2370 = vmatpush1.msra.mxu0 0.0
      %2371 = vmatprep.subr.mxu0 0.0
      %2372 = vmatpush1.msra.mxu0 0.0
      %2373 = vmatprep.subr.mxu0 0.0
      %2374 = vmatpush1.msra.mxu0 0.0
      %2375 = vmatprep.subr.mxu0 0.0
      %2376 = vmatpush1.msra.mxu0 0.0
      %2377 = vmatprep.subr.mxu0 0.0
      %2378 = vmatpush1.msra.mxu0 0.0
      %2379 = vmatprep.subr.mxu0 0.0
      %2380 = vmatpush1.msra.mxu0 0.0
      %2381 = vmatprep.subr.mxu0 0.0
      %2382 = vmatpush1.msra.mxu0 0.0
      %2383 = vmatprep.subr.mxu0 0.0
      %2384 = vmatpush1.msra.mxu0 0.0
      %2385 = vmatprep.subr.mxu0 0.0
      %2386 = vmatpush1.msra.mxu0 0.0
      %2387 = vmatprep.subr.mxu0 0.0
      %2388 = vmatpush1.msra.mxu0 0.0
      %2389 = vmatprep.subr.mxu0 0.0
      %2390 = vmatpush1.msra.mxu0 0.0
      %2391 = vmatprep.subr.mxu0 0.0
      %2392 = vmatpush1.msra.mxu0 0.0
      %2393 = vmatprep.subr.mxu0 0.0
      %2394 = vmatpush1.msra.mxu0 0.0
      %2395 = vmatprep.subr.mxu0 0.0
      %2396 = vmatpush1.msra.mxu0 0.0
      %2397 = vmatprep.subr.mxu0 0.0
      %2398 = vmatpush1.msra.mxu0 0.0
      %2399 = vmatprep.subr.mxu0 0.0
      %2400 = vmatpush1.msra.mxu0 0.0
      %2401 = vmatprep.subr.mxu0 0.0
      %2402 = vmatpush1.msra.mxu0 0.0
      %2403 = vmatprep.subr.mxu0 0.0
      %2404 = vmatpush1.msra.mxu0 0.0
      %2405 = vmatprep.subr.mxu0 0.0
      %2406 = vmatpush1.msra.mxu0 0.0
      %2407 = vmatprep.subr.mxu0 0.0
      %2408 = vmatpush1.msra.mxu0 0.0
      %2409 = vmatprep.subr.mxu0 0.0
      %2410 = vmatpush1.msra.mxu0 0.0
      %2411 = vmatprep.subr.mxu0 0.0
      %2412 = vmatpush1.msra.mxu0 0.0
      %2413 = vmatprep.subr.mxu0 0.0
      %2414 = vmatpush1.msra.mxu0 0.0
      %2415 = vmatprep.subr.mxu0 0.0
      %2416 = vmatpush1.msra.mxu0 0.0
      %2417 = vmatprep.subr.mxu0 0.0
      %2418 = vmatpush1.msra.mxu0 0.0
      %2419 = vmatprep.subr.mxu0 0.0
      %2420 = vmatpush1.msra.mxu0 0.0
      %2421 = vmatprep.subr.mxu0 0.0
      %2422 = vmatpush1.msra.mxu0 0.0
      %2423 = vmatprep.subr.mxu0 0.0
      %2424 = vmatpush1.msra.mxu0 0.0
      %2425 = vmatprep.subr.mxu0 0.0
      %2426 = vmatpush1.msra.mxu0 0.0
      %2427 = vmatprep.subr.mxu0 0.0
      %2428 = vmatpush1.msra.mxu0 0.0
      %2429 = vmatprep.subr.mxu0 0.0
      %2430 = vmatpush1.msra.mxu0 0.0
      %2431 = vmatprep.mubr.f32.mxu0 0.0
      %2432 = vmatmul.mubr.f32.gmra.mrb[0].mxu0 %v2365
      %v2433 = vpop.f32.mrb[0].mxu0
      %v2434 = vadd.f32 0.0, %v2433
      %v2435 = vpop.f32.mrb[0].mxu0
      %v2436 = vadd.f32 0.0, %v2435
      %2437 = vdwg.mxu0
      %v2438 = vadd.f32 %v2358, %v2434
      %v2439 = vadd.f32 %v2360, %v2436
      %v2440 = vtanh.pop %v2438
      %v2441 = vtanh.pop %v2439
      %v2442 = vld [vmem:[%s7] sm:$0xff]
      %v2443 = vld [vmem:[%s8] sm:$0xff]
      %2444 = vmatprep.subr.mxu0 %v338
      %2445 = vmatpush1.msra.mxu0 %v337
      %2446 = vmatprep.subr.mxu0 %v340
      %2447 = vmatpush1.msra.mxu0 %v339
      %2448 = vmatprep.subr.mxu0 %v342
      %2449 = vmatpush1.msra.mxu0 %v341
      %2450 = vmatprep.subr.mxu0 %v344
      %2451 = vmatpush1.msra.mxu0 %v343
      %2452 = vmatprep.subr.mxu0 %v346
      %2453 = vmatpush1.msra.mxu0 %v345
      %2454 = vmatprep.subr.mxu0 %v348
      %2455 = vmatpush1.msra.mxu0 %v347
      %2456 = vmatprep.subr.mxu0 %v350
      %2457 = vmatpush1.msra.mxu0 %v349
      %2458 = vmatprep.subr.mxu0 %v352
      %2459 = vmatpush1.msra.mxu0 %v351
      %2460 = vmatprep.subr.mxu0 %v354
      %2461 = vmatpush1.msra.mxu0 %v353
      %2462 = vmatprep.subr.mxu0 %v356
      %2463 = vmatpush1.msra.mxu0 %v355
      %2464 = vmatprep.subr.mxu0 %v358
      %2465 = vmatpush1.msra.mxu0 %v357
      %2466 = vmatprep.subr.mxu0 %v360
      %2467 = vmatpush1.msra.mxu0 %v359
      %2468 = vmatprep.subr.mxu0 %v362
      %2469 = vmatpush1.msra.mxu0 %v361
      %2470 = vmatprep.subr.mxu0 %v364
      %2471 = vmatpush1.msra.mxu0 %v363
      %2472 = vmatprep.subr.mxu0 %v366
      %2473 = vmatpush1.msra.mxu0 %v365
      %2474 = vmatprep.subr.mxu0 %v368
      %2475 = vmatpush1.msra.mxu0 %v367
      %2476 = vmatprep.subr.mxu0 %v370
      %2477 = vmatpush1.msra.mxu0 %v369
      %2478 = vmatprep.subr.mxu0 %v372
      %2479 = vmatpush1.msra.mxu0 %v371
      %2480 = vmatprep.subr.mxu0 %v374
      %2481 = vmatpush1.msra.mxu0 %v373
      %2482 = vmatprep.subr.mxu0 %v376
      %2483 = vmatpush1.msra.mxu0 %v375
      %2484 = vmatprep.subr.mxu0 %v378
      %2485 = vmatpush1.msra.mxu0 %v377
      %2486 = vmatprep.subr.mxu0 %v380
      %2487 = vmatpush1.msra.mxu0 %v379
      %2488 = vmatprep.subr.mxu0 %v382
      %2489 = vmatpush1.msra.mxu0 %v381
      %2490 = vmatprep.subr.mxu0 %v384
      %2491 = vmatpush1.msra.mxu0 %v383
      %2492 = vmatprep.subr.mxu0 %v386
      %2493 = vmatpush1.msra.mxu0 %v385
      %2494 = vmatprep.subr.mxu0 %v388
      %2495 = vmatpush1.msra.mxu0 %v387
      %2496 = vmatprep.subr.mxu0 %v390
      %2497 = vmatpush1.msra.mxu0 %v389
      %2498 = vmatprep.subr.mxu0 %v392
      %2499 = vmatpush1.msra.mxu0 %v391
      %2500 = vmatprep.subr.mxu0 %v394
      %2501 = vmatpush1.msra.mxu0 %v393
      %2502 = vmatprep.subr.mxu0 %v396
      %2503 = vmatpush1.msra.mxu0 %v395
      %2504 = vmatprep.subr.mxu0 %v398
      %2505 = vmatpush1.msra.mxu0 %v397
      %2506 = vmatprep.subr.mxu0 %v400
      %2507 = vmatpush1.msra.mxu0 %v399
      %2508 = vmatprep.mubr.f32.mxu0 %v2441
      %2509 = vmatmul.mubr.f32.gmra.mrb[0].mxu0 %v2440
      %v2510 = vpop.f32.mrb[0].mxu0
      %v2511 = vadd.f32 0.0, %v2510
      %v2512 = vpop.f32.mrb[0].mxu0
      %v2513 = vadd.f32 0.0, %v2512
      %2514 = vdwg.mxu0
      %2515 = vmatprep.subr.mxu0 %v474
      %2516 = vmatpush1.msra.mxu0 %v473
      %2517 = vmatprep.subr.mxu0 %v476
      %2518 = vmatpush1.msra.mxu0 %v475
      %2519 = vmatprep.subr.mxu0 %v478
      %2520 = vmatpush1.msra.mxu0 %v477
      %2521 = vmatprep.subr.mxu0 %v480
      %2522 = vmatpush1.msra.mxu0 %v479
      %2523 = vmatprep.subr.mxu0 %v482
      %2524 = vmatpush1.msra.mxu0 %v481
      %2525 = vmatprep.subr.mxu0 %v484
      %2526 = vmatpush1.msra.mxu0 %v483
      %2527 = vmatprep.subr.mxu0 %v486
      %2528 = vmatpush1.msra.mxu0 %v485
      %2529 = vmatprep.subr.mxu0 %v488
      %2530 = vmatpush1.msra.mxu0 %v487
      %2531 = vmatprep.subr.mxu0 %v490
      %2532 = vmatpush1.msra.mxu0 %v489
      %2533 = vmatprep.subr.mxu0 %v492
      %2534 = vmatpush1.msra.mxu0 %v491
      %2535 = vmatprep.subr.mxu0 %v494
      %2536 = vmatpush1.msra.mxu0 %v493
      %2537 = vmatprep.subr.mxu0 %v496
      %2538 = vmatpush1.msra.mxu0 %v495
      %2539 = vmatprep.subr.mxu0 %v498
      %2540 = vmatpush1.msra.mxu0 %v497
      %2541 = vmatprep.subr.mxu0 %v500
      %2542 = vmatpush1.msra.mxu0 %v499
      %2543 = vmatprep.subr.mxu0 %v502
      %2544 = vmatpush1.msra.mxu0 %v501
      %2545 = vmatprep.subr.mxu0 %v504
      %2546 = vmatpush1.msra.mxu0 %v503
      %2547 = vmatprep.subr.mxu0 %v506
      %2548 = vmatpush1.msra.mxu0 %v505
      %2549 = vmatprep.subr.mxu0 %v508
      %2550 = vmatpush1.msra.mxu0 %v507
      %2551 = vmatprep.subr.mxu0 %v510
      %2552 = vmatpush1.msra.mxu0 %v509
      %2553 = vmatprep.subr.mxu0 %v512
      %2554 = vmatpush1.msra.mxu0 %v511
      %2555 = vmatprep.subr.mxu0 %v514
      %2556 = vmatpush1.msra.mxu0 %v513
      %2557 = vmatprep.subr.mxu0 %v516
      %2558 = vmatpush1.msra.mxu0 %v515
      %2559 = vmatprep.subr.mxu0 %v518
      %2560 = vmatpush1.msra.mxu0 %v517
      %2561 = vmatprep.subr.mxu0 %v520
      %2562 = vmatpush1.msra.mxu0 %v519
      %2563 = vmatprep.subr.mxu0 %v522
      %2564 = vmatpush1.msra.mxu0 %v521
      %2565 = vmatprep.subr.mxu0 %v524
      %2566 = vmatpush1.msra.mxu0 %v523
      %2567 = vmatprep.subr.mxu0 %v526
      %2568 = vmatpush1.msra.mxu0 %v525
      %2569 = vmatprep.subr.mxu0 %v528
      %2570 = vmatpush1.msra.mxu0 %v527
      %2571 = vmatprep.subr.mxu0 %v530
      %2572 = vmatpush1.msra.mxu0 %v529
      %2573 = vmatprep.subr.mxu0 %v532
      %2574 = vmatpush1.msra.mxu0 %v531
      %2575 = vmatprep.subr.mxu0 %v534
      %2576 = vmatpush1.msra.mxu0 %v533
      %2577 = vmatprep.subr.mxu0 %v536
      %2578 = vmatpush1.msra.mxu0 %v535
      %2579 = vmatprep.mubr.f32.mxu0 %v2441
      %2580 = vmatmul.mubr.f32.gmra.mrb[0].mxu0 %v2440
      %v2581 = vpop.f32.mrb[0].mxu0
      %v2582 = vadd.f32 0.0, %v2581
      %v2583 = vpop.f32.mrb[0].mxu0
      %v2584 = vadd.f32 0.0, %v2583
      %2585 = vdwg.mxu0
      %2586 = vmatprep.subr.mxu0 %v610
      %2587 = vmatpush1.msra.mxu0 %v609
      %2588 = vmatprep.subr.mxu0 %v612
      %2589 = vmatpush1.msra.mxu0 %v611
      %2590 = vmatprep.subr.mxu0 %v614
      %2591 = vmatpush1.msra.mxu0 %v613
      %2592 = vmatprep.subr.mxu0 %v616
      %2593 = vmatpush1.msra.mxu0 %v615
      %2594 = vmatprep.subr.mxu0 %v618
      %2595 = vmatpush1.msra.mxu0 %v617
      %2596 = vmatprep.subr.mxu0 %v620
      %2597 = vmatpush1.msra.mxu0 %v619
      %2598 = vmatprep.subr.mxu0 %v622
      %2599 = vmatpush1.msra.mxu0 %v621
      %2600 = vmatprep.subr.mxu0 %v624
      %2601 = vmatpush1.msra.mxu0 %v623
      %2602 = vmatprep.subr.mxu0 %v626
      %2603 = vmatpush1.msra.mxu0 %v625
      %2604 = vmatprep.subr.mxu0 %v628
      %2605 = vmatpush1.msra.mxu0 %v627
      %2606 = vmatprep.subr.mxu0 %v630
      %2607 = vmatpush1.msra.mxu0 %v629
      %2608 = vmatprep.subr.mxu0 %v632
      %2609 = vmatpush1.msra.mxu0 %v631
      %2610 = vmatprep.subr.mxu0 %v634
      %2611 = vmatpush1.msra.mxu0 %v633
      %2612 = vmatprep.subr.mxu0 %v636
      %2613 = vmatpush1.msra.mxu0 %v635
      %2614 = vmatprep.subr.mxu0 %v638
      %2615 = vmatpush1.msra.mxu0 %v637
      %2616 = vmatprep.subr.mxu0 %v640
      %2617 = vmatpush1.msra.mxu0 %v639
      %2618 = vmatprep.subr.mxu0 %v642
      %2619 = vmatpush1.msra.mxu0 %v641
      %2620 = vmatprep.subr.mxu0 %v644
      %2621 = vmatpush1.msra.mxu0 %v643
      %2622 = vmatprep.subr.mxu0 %v646
      %2623 = vmatpush1.msra.mxu0 %v645
      %2624 = vmatprep.subr.mxu0 %v648
      %2625 = vmatpush1.msra.mxu0 %v647
      %2626 = vmatprep.subr.mxu0 %v650
      %2627 = vmatpush1.msra.mxu0 %v649
      %2628 = vmatprep.subr.mxu0 %v652
      %2629 = vmatpush1.msra.mxu0 %v651
      %2630 = vmatprep.subr.mxu0 %v654
      %2631 = vmatpush1.msra.mxu0 %v653
      %2632 = vmatprep.subr.mxu0 %v656
      %2633 = vmatpush1.msra.mxu0 %v655
      %2634 = vmatprep.subr.mxu0 %v658
      %2635 = vmatpush1.msra.mxu0 %v657
      %2636 = vmatprep.subr.mxu0 %v660
      %2637 = vmatpush1.msra.mxu0 %v659
      %2638 = vmatprep.subr.mxu0 %v662
      %2639 = vmatpush1.msra.mxu0 %v661
      %2640 = vmatprep.subr.mxu0 %v664
      %2641 = vmatpush1.msra.mxu0 %v663
      %2642 = vmatprep.subr.mxu0 %v666
      %2643 = vmatpush1.msra.mxu0 %v665
      %2644 = vmatprep.subr.mxu0 %v668
      %2645 = vmatpush1.msra.mxu0 %v667
      %2646 = vmatprep.subr.mxu0 %v670
      %2647 = vmatpush1.msra.mxu0 %v669
      %2648 = vmatprep.subr.mxu0 %v672
      %2649 = vmatpush1.msra.mxu0 %v671
      %2650 = vmatprep.mubr.f32.mxu0 %v2441
      %2651 = vmatmul.mubr.f32.gmra.mrb[0].mxu0 %v2440
      %v2652 = vpop.f32.mrb[0].mxu0
      %v2653 = vadd.f32 0.0, %v2652
      %v2654 = vpop.f32.mrb[0].mxu0
      %v2655 = vadd.f32 0.0, %v2654
      %2656 = vdwg.mxu0
      %2657 = vmatprep.subr.mxu0 %v746
      %2658 = vmatpush1.msra.mxu0 %v745
      %2659 = vmatprep.subr.mxu0 %v748
      %2660 = vmatpush1.msra.mxu0 %v747
      %2661 = vmatprep.subr.mxu0 %v750
      %2662 = vmatpush1.msra.mxu0 %v749
      %2663 = vmatprep.subr.mxu0 %v752
      %2664 = vmatpush1.msra.mxu0 %v751
      %2665 = vmatprep.subr.mxu0 %v754
      %2666 = vmatpush1.msra.mxu0 %v753
      %2667 = vmatprep.subr.mxu0 %v756
      %2668 = vmatpush1.msra.mxu0 %v755
      %2669 = vmatprep.subr.mxu0 %v758
      %2670 = vmatpush1.msra.mxu0 %v757
      %2671 = vmatprep.subr.mxu0 %v760
      %2672 = vmatpush1.msra.mxu0 %v759
      %2673 = vmatprep.subr.mxu0 %v762
      %2674 = vmatpush1.msra.mxu0 %v761
      %2675 = vmatprep.subr.mxu0 %v764
      %2676 = vmatpush1.msra.mxu0 %v763
      %2677 = vmatprep.subr.mxu0 %v766
      %2678 = vmatpush1.msra.mxu0 %v765
      %2679 = vmatprep.subr.mxu0 %v768
      %2680 = vmatpush1.msra.mxu0 %v767
      %2681 = vmatprep.subr.mxu0 %v770
      %2682 = vmatpush1.msra.mxu0 %v769
      %2683 = vmatprep.subr.mxu0 %v772
      %2684 = vmatpush1.msra.mxu0 %v771
      %2685 = vmatprep.subr.mxu0 %v774
      %2686 = vmatpush1.msra.mxu0 %v773
      %2687 = vmatprep.subr.mxu0 %v776
      %2688 = vmatpush1.msra.mxu0 %v775
      %2689 = vmatprep.subr.mxu0 %v778
      %2690 = vmatpush1.msra.mxu0 %v777
      %2691 = vmatprep.subr.mxu0 %v780
      %2692 = vmatpush1.msra.mxu0 %v779
      %2693 = vmatprep.subr.mxu0 %v782
      %2694 = vmatpush1.msra.mxu0 %v781
      %2695 = vmatprep.subr.mxu0 %v784
      %2696 = vmatpush1.msra.mxu0 %v783
      %2697 = vmatprep.subr.mxu0 %v786
      %2698 = vmatpush1.msra.mxu0 %v785
      %2699 = vmatprep.subr.mxu0 %v788
      %2700 = vmatpush1.msra.mxu0 %v787
      %2701 = vmatprep.subr.mxu0 %v790
      %2702 = vmatpush1.msra.mxu0 %v789
      %2703 = vmatprep.subr.mxu0 %v792
      %2704 = vmatpush1.msra.mxu0 %v791
      %2705 = vmatprep.subr.mxu0 %v794
      %2706 = vmatpush1.msra.mxu0 %v793
      %2707 = vmatprep.subr.mxu0 %v796
      %2708 = vmatpush1.msra.mxu0 %v795
      %2709 = vmatprep.subr.mxu0 %v798
      %2710 = vmatpush1.msra.mxu0 %v797
      %2711 = vmatprep.subr.mxu0 %v800
      %2712 = vmatpush1.msra.mxu0 %v799
      %2713 = vmatprep.subr.mxu0 %v802
      %2714 = vmatpush1.msra.mxu0 %v801
      %2715 = vmatprep.subr.mxu0 %v804
      %2716 = vmatpush1.msra.mxu0 %v803
      %2717 = vmatprep.subr.mxu0 %v806
      %2718 = vmatpush1.msra.mxu0 %v805
      %2719 = vmatprep.subr.mxu0 %v808
      %2720 = vmatpush1.msra.mxu0 %v807
      %2721 = vmatprep.mubr.f32.mxu0 %v2441
      %2722 = vmatmul.mubr.f32.gmra.mrb[0].mxu0 %v2440
      %v2723 = vpop.f32.mrb[0].mxu0
      %v2724 = vadd.f32 0.0, %v2723
      %v2725 = vpop.f32.mrb[0].mxu0
      %v2726 = vadd.f32 0.0, %v2725
      %2727 = vdwg.mxu0
      %2728 = vmatprep.subr.mxu0 %v882
      %2729 = vmatpush1.msra.mxu0 %v881
      %2730 = vmatprep.subr.mxu0 %v884
      %2731 = vmatpush1.msra.mxu0 %v883
      %2732 = vmatprep.subr.mxu0 %v886
      %2733 = vmatpush1.msra.mxu0 %v885
      %2734 = vmatprep.subr.mxu0 %v888
      %2735 = vmatpush1.msra.mxu0 %v887
      %2736 = vmatprep.subr.mxu0 %v890
      %2737 = vmatpush1.msra.mxu0 %v889
      %2738 = vmatprep.subr.mxu0 %v892
      %2739 = vmatpush1.msra.mxu0 %v891
      %2740 = vmatprep.subr.mxu0 %v894
      %2741 = vmatpush1.msra.mxu0 %v893
      %2742 = vmatprep.subr.mxu0 %v896
      %2743 = vmatpush1.msra.mxu0 %v895
      %2744 = vmatprep.subr.mxu0 %v898
      %2745 = vmatpush1.msra.mxu0 %v897
      %2746 = vmatprep.subr.mxu0 %v900
      %2747 = vmatpush1.msra.mxu0 %v899
      %2748 = vmatprep.subr.mxu0 %v902
      %2749 = vmatpush1.msra.mxu0 %v901
      %2750 = vmatprep.subr.mxu0 %v904
      %2751 = vmatpush1.msra.mxu0 %v903
      %2752 = vmatprep.subr.mxu0 %v906
      %2753 = vmatpush1.msra.mxu0 %v905
      %2754 = vmatprep.subr.mxu0 %v908
      %2755 = vmatpush1.msra.mxu0 %v907
      %2756 = vmatprep.subr.mxu0 %v910
      %2757 = vmatpush1.msra.mxu0 %v909
      %2758 = vmatprep.subr.mxu0 %v912
      %2759 = vmatpush1.msra.mxu0 %v911
      %2760 = vmatprep.subr.mxu0 %v914
      %2761 = vmatpush1.msra.mxu0 %v913
      %2762 = vmatprep.subr.mxu0 %v916
      %2763 = vmatpush1.msra.mxu0 %v915
      %2764 = vmatprep.subr.mxu0 %v918
      %2765 = vmatpush1.msra.mxu0 %v917
      %2766 = vmatprep.subr.mxu0 %v920
      %2767 = vmatpush1.msra.mxu0 %v919
      %2768 = vmatprep.subr.mxu0 %v922
      %2769 = vmatpush1.msra.mxu0 %v921
      %2770 = vmatprep.subr.mxu0 %v924
      %2771 = vmatpush1.msra.mxu0 %v923
      %2772 = vmatprep.subr.mxu0 %v926
      %2773 = vmatpush1.msra.mxu0 %v925
      %2774 = vmatprep.subr.mxu0 %v928
      %2775 = vmatpush1.msra.mxu0 %v927
      %2776 = vmatprep.subr.mxu0 %v930
      %2777 = vmatpush1.msra.mxu0 %v929
      %2778 = vmatprep.subr.mxu0 %v932
      %2779 = vmatpush1.msra.mxu0 %v931
      %2780 = vmatprep.subr.mxu0 %v934
      %2781 = vmatpush1.msra.mxu0 %v933
      %2782 = vmatprep.subr.mxu0 %v936
      %2783 = vmatpush1.msra.mxu0 %v935
      %2784 = vmatprep.subr.mxu0 %v938
      %2785 = vmatpush1.msra.mxu0 %v937
      %2786 = vmatprep.subr.mxu0 %v940
      %2787 = vmatpush1.msra.mxu0 %v939
      %2788 = vmatprep.subr.mxu0 %v942
      %2789 = vmatpush1.msra.mxu0 %v941
      %2790 = vmatprep.subr.mxu0 %v944
      %2791 = vmatpush1.msra.mxu0 %v943
      %2792 = vmatprep.mubr.f32.mxu0 %v2441
      %2793 = vmatmul.mubr.f32.gmra.mrb[0].mxu0 %v2440
      %v2794 = vpop.f32.mrb[0].mxu0
      %v2795 = vadd.f32 0.0, %v2794
      %v2796 = vpop.f32.mrb[0].mxu0
      %v2797 = vadd.f32 0.0, %v2796
      %2798 = vdwg.mxu0
      %2799 = vmatprep.subr.mxu0 %v1018
      %2800 = vmatpush1.msra.mxu0 %v1017
      %2801 = vmatprep.subr.mxu0 %v1020
      %2802 = vmatpush1.msra.mxu0 %v1019
      %2803 = vmatprep.subr.mxu0 %v1022
      %2804 = vmatpush1.msra.mxu0 %v1021
      %2805 = vmatprep.subr.mxu0 %v1024
      %2806 = vmatpush1.msra.mxu0 %v1023
      %2807 = vmatprep.subr.mxu0 %v1026
      %2808 = vmatpush1.msra.mxu0 %v1025
      %2809 = vmatprep.subr.mxu0 %v1028
      %2810 = vmatpush1.msra.mxu0 %v1027
      %2811 = vmatprep.subr.mxu0 %v1030
      %2812 = vmatpush1.msra.mxu0 %v1029
      %2813 = vmatprep.subr.mxu0 %v1032
      %2814 = vmatpush1.msra.mxu0 %v1031
      %2815 = vmatprep.subr.mxu0 %v1034
      %2816 = vmatpush1.msra.mxu0 %v1033
      %2817 = vmatprep.subr.mxu0 %v1036
      %2818 = vmatpush1.msra.mxu0 %v1035
      %2819 = vmatprep.subr.mxu0 %v1038
      %2820 = vmatpush1.msra.mxu0 %v1037
      %2821 = vmatprep.subr.mxu0 %v1040
      %2822 = vmatpush1.msra.mxu0 %v1039
      %2823 = vmatprep.subr.mxu0 %v1042
      %2824 = vmatpush1.msra.mxu0 %v1041
      %2825 = vmatprep.subr.mxu0 %v1044
      %2826 = vmatpush1.msra.mxu0 %v1043
      %2827 = vmatprep.subr.mxu0 %v1046
      %2828 = vmatpush1.msra.mxu0 %v1045
      %2829 = vmatprep.subr.mxu0 %v1048
      %2830 = vmatpush1.msra.mxu0 %v1047
      %2831 = vmatprep.subr.mxu0 %v1050
      %2832 = vmatpush1.msra.mxu0 %v1049
      %2833 = vmatprep.subr.mxu0 %v1052
      %2834 = vmatpush1.msra.mxu0 %v1051
      %2835 = vmatprep.subr.mxu0 %v1054
      %2836 = vmatpush1.msra.mxu0 %v1053
      %2837 = vmatprep.subr.mxu0 %v1056
      %2838 = vmatpush1.msra.mxu0 %v1055
      %2839 = vmatprep.subr.mxu0 %v1058
      %2840 = vmatpush1.msra.mxu0 %v1057
      %2841 = vmatprep.subr.mxu0 %v1060
      %2842 = vmatpush1.msra.mxu0 %v1059
      %2843 = vmatprep.subr.mxu0 %v1062
      %2844 = vmatpush1.msra.mxu0 %v1061
      %2845 = vmatprep.subr.mxu0 %v1064
      %2846 = vmatpush1.msra.mxu0 %v1063
      %2847 = vmatprep.subr.mxu0 %v1066
      %2848 = vmatpush1.msra.mxu0 %v1065
      %2849 = vmatprep.subr.mxu0 %v1068
      %2850 = vmatpush1.msra.mxu0 %v1067
      %2851 = vmatprep.subr.mxu0 %v1070
      %2852 = vmatpush1.msra.mxu0 %v1069
      %2853 = vmatprep.subr.mxu0 %v1072
      %2854 = vmatpush1.msra.mxu0 %v1071
      %2855 = vmatprep.subr.mxu0 %v1074
      %2856 = vmatpush1.msra.mxu0 %v1073
      %2857 = vmatprep.subr.mxu0 %v1076
      %2858 = vmatpush1.msra.mxu0 %v1075
      %2859 = vmatprep.subr.mxu0 %v1078
      %2860 = vmatpush1.msra.mxu0 %v1077
      %2861 = vmatprep.subr.mxu0 %v1080
      %2862 = vmatpush1.msra.mxu0 %v1079
      %2863 = vmatprep.mubr.f32.mxu0 %v2441
      %2864 = vmatmul.mubr.f32.gmra.mrb[0].mxu0 %v2440
      %v2865 = vpop.f32.mrb[0].mxu0
      %v2866 = vadd.f32 0.0, %v2865
      %v2867 = vpop.f32.mrb[0].mxu0
      %v2868 = vadd.f32 0.0, %v2867
      %2869 = vdwg.mxu0
      %2870 = vmatprep.subr.mxu0 %v1154
      %2871 = vmatpush1.msra.mxu0 %v1153
      %2872 = vmatprep.subr.mxu0 %v1156
      %2873 = vmatpush1.msra.mxu0 %v1155
      %2874 = vmatprep.subr.mxu0 %v1158
      %2875 = vmatpush1.msra.mxu0 %v1157
      %2876 = vmatprep.subr.mxu0 %v1160
      %2877 = vmatpush1.msra.mxu0 %v1159
      %2878 = vmatprep.subr.mxu0 %v1162
      %2879 = vmatpush1.msra.mxu0 %v1161
      %2880 = vmatprep.subr.mxu0 %v1164
      %2881 = vmatpush1.msra.mxu0 %v1163
      %2882 = vmatprep.subr.mxu0 %v1166
      %2883 = vmatpush1.msra.mxu0 %v1165
      %2884 = vmatprep.subr.mxu0 %v1168
      %2885 = vmatpush1.msra.mxu0 %v1167
      %2886 = vmatprep.subr.mxu0 %v1170
      %2887 = vmatpush1.msra.mxu0 %v1169
      %2888 = vmatprep.subr.mxu0 %v1172
      %2889 = vmatpush1.msra.mxu0 %v1171
      %2890 = vmatprep.subr.mxu0 %v1174
      %2891 = vmatpush1.msra.mxu0 %v1173
      %2892 = vmatprep.subr.mxu0 %v1176
      %2893 = vmatpush1.msra.mxu0 %v1175
      %2894 = vmatprep.subr.mxu0 %v1178
      %2895 = vmatpush1.msra.mxu0 %v1177
      %2896 = vmatprep.subr.mxu0 %v1180
      %2897 = vmatpush1.msra.mxu0 %v1179
      %2898 = vmatprep.subr.mxu0 %v1182
      %2899 = vmatpush1.msra.mxu0 %v1181
      %2900 = vmatprep.subr.mxu0 %v1184
      %2901 = vmatpush1.msra.mxu0 %v1183
      %2902 = vmatprep.subr.mxu0 %v1186
      %2903 = vmatpush1.msra.mxu0 %v1185
      %2904 = vmatprep.subr.mxu0 %v1188
      %2905 = vmatpush1.msra.mxu0 %v1187
      %2906 = vmatprep.subr.mxu0 %v1190
      %2907 = vmatpush1.msra.mxu0 %v1189
      %2908 = vmatprep.subr.mxu0 %v1192
      %2909 = vmatpush1.msra.mxu0 %v1191
      %2910 = vmatprep.subr.mxu0 %v1194
      %2911 = vmatpush1.msra.mxu0 %v1193
      %2912 = vmatprep.subr.mxu0 %v1196
      %2913 = vmatpush1.msra.mxu0 %v1195
      %2914 = vmatprep.subr.mxu0 %v1198
      %2915 = vmatpush1.msra.mxu0 %v1197
      %2916 = vmatprep.subr.mxu0 %v1200
      %2917 = vmatpush1.msra.mxu0 %v1199
      %2918 = vmatprep.subr.mxu0 %v1202
      %2919 = vmatpush1.msra.mxu0 %v1201
      %2920 = vmatprep.subr.mxu0 %v1204
      %2921 = vmatpush1.msra.mxu0 %v1203
      %2922 = vmatprep.subr.mxu0 %v1206
      %2923 = vmatpush1.msra.mxu0 %v1205
      %2924 = vmatprep.subr.mxu0 %v1208
      %2925 = vmatpush1.msra.mxu0 %v1207
      %2926 = vmatprep.subr.mxu0 %v1210
      %2927 = vmatpush1.msra.mxu0 %v1209
      %2928 = vmatprep.subr.mxu0 %v1212
      %2929 = vmatpush1.msra.mxu0 %v1211
      %2930 = vmatprep.subr.mxu0 %v1214
      %2931 = vmatpush1.msra.mxu0 %v1213
      %2932 = vmatprep.subr.mxu0 %v1216
      %2933 = vmatpush1.msra.mxu0 %v1215
      %2934 = vmatprep.mubr.f32.mxu0 %v2441
      %2935 = vmatmul.mubr.f32.gmra.mrb[0].mxu0 %v2440
      %v2936 = vpop.f32.mrb[0].mxu0
      %v2937 = vadd.f32 0.0, %v2936
      %v2938 = vpop.f32.mrb[0].mxu0
      %v2939 = vadd.f32 0.0, %v2938
      %2940 = vdwg.mxu0
      %2941 = vmatprep.subr.mxu0 %v1290
      %2942 = vmatpush1.msra.mxu0 %v1289
      %2943 = vmatprep.subr.mxu0 %v1292
      %2944 = vmatpush1.msra.mxu0 %v1291
      %2945 = vmatprep.subr.mxu0 %v1294
      %2946 = vmatpush1.msra.mxu0 %v1293
      %2947 = vmatprep.subr.mxu0 %v1296
      %2948 = vmatpush1.msra.mxu0 %v1295
      %2949 = vmatprep.subr.mxu0 %v1298
      %2950 = vmatpush1.msra.mxu0 %v1297
      %2951 = vmatprep.subr.mxu0 %v1300
      %2952 = vmatpush1.msra.mxu0 %v1299
      %2953 = vmatprep.subr.mxu0 %v1302
      %2954 = vmatpush1.msra.mxu0 %v1301
      %2955 = vmatprep.subr.mxu0 %v1304
      %2956 = vmatpush1.msra.mxu0 %v1303
      %2957 = vmatprep.subr.mxu0 %v1306
      %2958 = vmatpush1.msra.mxu0 %v1305
      %2959 = vmatprep.subr.mxu0 %v1308
      %2960 = vmatpush1.msra.mxu0 %v1307
      %2961 = vmatprep.subr.mxu0 %v1310
      %2962 = vmatpush1.msra.mxu0 %v1309
      %2963 = vmatprep.subr.mxu0 %v1312
      %2964 = vmatpush1.msra.mxu0 %v1311
      %2965 = vmatprep.subr.mxu0 %v1314
      %2966 = vmatpush1.msra.mxu0 %v1313
      %2967 = vmatprep.subr.mxu0 %v1316
      %2968 = vmatpush1.msra.mxu0 %v1315
      %2969 = vmatprep.subr.mxu0 %v1318
      %2970 = vmatpush1.msra.mxu0 %v1317
      %2971 = vmatprep.subr.mxu0 %v1320
      %2972 = vmatpush1.msra.mxu0 %v1319
      %2973 = vmatprep.subr.mxu0 %v1322
      %2974 = vmatpush1.msra.mxu0 %v1321
      %2975 = vmatprep.subr.mxu0 %v1324
      %2976 = vmatpush1.msra.mxu0 %v1323
      %2977 = vmatprep.subr.mxu0 %v1326
      %2978 = vmatpush1.msra.mxu0 %v1325
      %2979 = vmatprep.subr.mxu0 %v1328
      %2980 = vmatpush1.msra.mxu0 %v1327
      %2981 = vmatprep.subr.mxu0 %v1330
      %2982 = vmatpush1.msra.mxu0 %v1329
      %2983 = vmatprep.subr.mxu0 %v1332
      %2984 = vmatpush1.msra.mxu0 %v1331
      %2985 = vmatprep.subr.mxu0 %v1334
      %2986 = vmatpush1.msra.mxu0 %v1333
      %2987 = vmatprep.subr.mxu0 %v1336
      %2988 = vmatpush1.msra.mxu0 %v1335
      %2989 = vmatprep.subr.mxu0 %v1338
      %2990 = vmatpush1.msra.mxu0 %v1337
      %2991 = vmatprep.subr.mxu0 %v1340
      %2992 = vmatpush1.msra.mxu0 %v1339
      %2993 = vmatprep.subr.mxu0 %v1342
      %2994 = vmatpush1.msra.mxu0 %v1341
      %2995 = vmatprep.subr.mxu0 %v1344
      %2996 = vmatpush1.msra.mxu0 %v1343
      %2997 = vmatprep.subr.mxu0 %v1346
      %2998 = vmatpush1.msra.mxu0 %v1345
      %2999 = vmatprep.subr.mxu0 %v1348
      %3000 = vmatpush1.msra.mxu0 %v1347
      %3001 = vmatprep.subr.mxu0 %v1350
      %3002 = vmatpush1.msra.mxu0 %v1349
      %3003 = vmatprep.subr.mxu0 %v1352
      %3004 = vmatpush1.msra.mxu0 %v1351
      %3005 = vmatprep.mubr.f32.mxu0 %v2441
      %3006 = vmatmul.mubr.f32.gmra.mrb[0].mxu0 %v2440
      %v3007 = vpop.f32.mrb[0].mxu0
      %v3008 = vadd.f32 0.0, %v3007
      %v3009 = vpop.f32.mrb[0].mxu0
      %v3010 = vadd.f32 0.0, %v3009
      %3011 = vdwg.mxu0
      %3012 = vmatprep.subr.mxu0 %v1426
      %3013 = vmatpush1.msra.mxu0 %v1425
      %3014 = vmatprep.subr.mxu0 %v1428
      %3015 = vmatpush1.msra.mxu0 %v1427
      %3016 = vmatprep.subr.mxu0 %v1430
      %3017 = vmatpush1.msra.mxu0 %v1429
      %3018 = vmatprep.subr.mxu0 %v1432
      %3019 = vmatpush1.msra.mxu0 %v1431
      %3020 = vmatprep.subr.mxu0 %v1434
      %3021 = vmatpush1.msra.mxu0 %v1433
      %3022 = vmatprep.subr.mxu0 %v1436
      %3023 = vmatpush1.msra.mxu0 %v1435
      %3024 = vmatprep.subr.mxu0 %v1438
      %3025 = vmatpush1.msra.mxu0 %v1437
      %3026 = vmatprep.subr.mxu0 %v1440
      %3027 = vmatpush1.msra.mxu0 %v1439
      %3028 = vmatprep.subr.mxu0 %v1442
      %3029 = vmatpush1.msra.mxu0 %v1441
      %3030 = vmatprep.subr.mxu0 %v1444
      %3031 = vmatpush1.msra.mxu0 %v1443
      %3032 = vmatprep.subr.mxu0 %v1446
      %3033 = vmatpush1.msra.mxu0 %v1445
      %3034 = vmatprep.subr.mxu0 %v1448
      %3035 = vmatpush1.msra.mxu0 %v1447
      %3036 = vmatprep.subr.mxu0 %v1450
      %3037 = vmatpush1.msra.mxu0 %v1449
      %3038 = vmatprep.subr.mxu0 %v1452
      %3039 = vmatpush1.msra.mxu0 %v1451
      %3040 = vmatprep.subr.mxu0 %v1454
      %3041 = vmatpush1.msra.mxu0 %v1453
      %3042 = vmatprep.subr.mxu0 %v1456
      %3043 = vmatpush1.msra.mxu0 %v1455
      %3044 = vmatprep.subr.mxu0 %v1458
      %3045 = vmatpush1.msra.mxu0 %v1457
      %3046 = vmatprep.subr.mxu0 %v1460
      %3047 = vmatpush1.msra.mxu0 %v1459
      %3048 = vmatprep.subr.mxu0 %v1462
      %3049 = vmatpush1.msra.mxu0 %v1461
      %3050 = vmatprep.subr.mxu0 %v1464
      %3051 = vmatpush1.msra.mxu0 %v1463
      %3052 = vmatprep.subr.mxu0 %v1466
      %3053 = vmatpush1.msra.mxu0 %v1465
      %3054 = vmatprep.subr.mxu0 %v1468
      %3055 = vmatpush1.msra.mxu0 %v1467
      %3056 = vmatprep.subr.mxu0 %v1470
      %3057 = vmatpush1.msra.mxu0 %v1469
      %3058 = vmatprep.subr.mxu0 %v1472
      %3059 = vmatpush1.msra.mxu0 %v1471
      %3060 = vmatprep.subr.mxu0 %v1474
      %3061 = vmatpush1.msra.mxu0 %v1473
      %3062 = vmatprep.subr.mxu0 %v1476
      %3063 = vmatpush1.msra.mxu0 %v1475
      %3064 = vmatprep.subr.mxu0 %v1478
      %3065 = vmatpush1.msra.mxu0 %v1477
      %3066 = vmatprep.subr.mxu0 %v1480
      %3067 = vmatpush1.msra.mxu0 %v1479
      %3068 = vmatprep.subr.mxu0 %v1482
      %3069 = vmatpush1.msra.mxu0 %v1481
      %3070 = vmatprep.subr.mxu0 %v1484
      %3071 = vmatpush1.msra.mxu0 %v1483
      %3072 = vmatprep.subr.mxu0 %v1486
      %3073 = vmatpush1.msra.mxu0 %v1485
      %3074 = vmatprep.subr.mxu0 %v1488
      %3075 = vmatpush1.msra.mxu0 %v1487
      %3076 = vmatprep.mubr.f32.mxu0 %v2441
      %3077 = vmatmul.mubr.f32.gmra.mrb[0].mxu0 %v2440
      %v3078 = vpop.f32.mrb[0].mxu0
      %v3079 = vadd.f32 0.0, %v3078
      %v3080 = vpop.f32.mrb[0].mxu0
      %v3081 = vadd.f32 0.0, %v3080
      %3082 = vdwg.mxu0
      %3084 = vset.pattern.permute.xlu0 0
      %3085 = vperm.xlu0 %3084, %v2443
      %v3086 = vpop.permute.xlu0 %3085
      %v3089 = vsel %vm1565, %v2442, 0
      %3091 = vmatprep.subr.mxu0 %v2513
      %3092 = vmatpush1.msra.mxu0 %v2511
      %3093 = vmatprep.subr.mxu0 %v2584
      %3094 = vmatpush1.msra.mxu0 %v2582
      %3095 = vmatprep.subr.mxu0 %v2655
      %3096 = vmatpush1.msra.mxu0 %v2653
      %3097 = vmatprep.subr.mxu0 %v2726
      %3098 = vmatpush1.msra.mxu0 %v2724
      %3099 = vmatprep.subr.mxu0 %v2797
      %3100 = vmatpush1.msra.mxu0 %v2795
      %3101 = vmatprep.subr.mxu0 %v2868
      %3102 = vmatpush1.msra.mxu0 %v2866
      %3103 = vmatprep.subr.mxu0 %v2939
      %3104 = vmatpush1.msra.mxu0 %v2937
      %3105 = vmatprep.subr.mxu0 %v3010
      %3106 = vmatpush1.msra.mxu0 %v3008
      %3107 = vmatprep.subr.mxu0 %v3081
      %3108 = vmatpush1.msra.mxu0 %v3079
      %3109 = vmatprep.subr.mxu0 0.0
      %3110 = vmatpush1.msra.mxu0 0.0
      %3111 = vmatprep.subr.mxu0 0.0
      %3112 = vmatpush1.msra.mxu0 0.0
      %3113 = vmatprep.subr.mxu0 0.0
      %3114 = vmatpush1.msra.mxu0 0.0
      %3115 = vmatprep.subr.mxu0 0.0
      %3116 = vmatpush1.msra.mxu0 0.0
      %3117 = vmatprep.subr.mxu0 0.0
      %3118 = vmatpush1.msra.mxu0 0.0
      %3119 = vmatprep.subr.mxu0 0.0
      %3120 = vmatpush1.msra.mxu0 0.0
      %3121 = vmatprep.subr.mxu0 0.0
      %3122 = vmatpush1.msra.mxu0 0.0
      %3123 = vmatprep.subr.mxu0 0.0
      %3124 = vmatpush1.msra.mxu0 0.0
      %3125 = vmatprep.subr.mxu0 0.0
      %3126 = vmatpush1.msra.mxu0 0.0
      %3127 = vmatprep.subr.mxu0 0.0
      %3128 = vmatpush1.msra.mxu0 0.0
      %3129 = vmatprep.subr.mxu0 0.0
      %3130 = vmatpush1.msra.mxu0 0.0
      %3131 = vmatprep.subr.mxu0 0.0
      %3132 = vmatpush1.msra.mxu0 0.0
      %3133 = vmatprep.subr.mxu0 0.0
      %3134 = vmatpush1.msra.mxu0 0.0
      %3135 = vmatprep.subr.mxu0 0.0
      %3136 = vmatpush1.msra.mxu0 0.0
      %3137 = vmatprep.subr.mxu0 0.0
      %3138 = vmatpush1.msra.mxu0 0.0
      %3139 = vmatprep.subr.mxu0 0.0
      %3140 = vmatpush1.msra.mxu0 0.0
      %3141 = vmatprep.subr.mxu0 0.0
      %3142 = vmatpush1.msra.mxu0 0.0
      %3143 = vmatprep.subr.mxu0 0.0
      %3144 = vmatpush1.msra.mxu0 0.0
      %3145 = vmatprep.subr.mxu0 0.0
      %3146 = vmatpush1.msra.mxu0 0.0
      %3147 = vmatprep.subr.mxu0 0.0
      %3148 = vmatpush1.msra.mxu0 0.0
      %3149 = vmatprep.subr.mxu0 0.0
      %3150 = vmatpush1.msra.mxu0 0.0
      %3151 = vmatprep.subr.mxu0 0.0
      %3152 = vmatpush1.msra.mxu0 0.0
      %3153 = vmatprep.subr.mxu0 0.0
      %3154 = vmatpush1.msra.mxu0 0.0
      %3155 = vmatprep.mubr.f32.mxu0 0.0
      %3156 = vmatmul.mubr.f32.gmra.mrb[0].mxu0 %v3089
      %v3157 = vpop.f32.mrb[0].mxu0
      %v3158 = vadd.f32 %v3086, %v3157
      %v3159 = vpop.f32.mrb[0].mxu0
      %v3160 = vadd.f32 %v3086, %v3159
      %3161 = vdwg.mxu0
      %v3162 = vxor.u32 %v3158, 2147483648
      %v3163 = vxor.u32 %v3160, 2147483648
      %v3164 = vmul.f32 %v3162, 1.442695
      %v3165 = vpow.pop %v3164
      %v3166 = vmul.f32 %v3163, 1.442695
      %v3167 = vpow.pop %v3166
      %v3168 = vadd.f32 %v3165, 1.0
      %v3169 = vadd.f32 %v3167, 1.0
      %v3170 = vrcp.pop %v3168
      %v3171 = vmul.f32 1.0, %v3170
      %v3172 = vrcp.pop %v3169
      %v3173 = vmul.f32 1.0, %v3172
      %3174 = vst [vmem:[%s332] sm:$0xff] %v3171
      %3175 = vst [vmem:[%s332 + $0x8] sm:$0xff] %v3173
      %p3176 = scmp.lt.s32.totalorder %s20, 1
      %s3177 = scalar_select %p3176, %s20, 1
      %s3178 = smul.addr %s3177, 2
      %s3179 = smul.addr %s3178, 8
      %s3180 = scalar_lea.vmem %s9, %s3179
      // Predicated region
      $region57: #{denoising_ae_forward.1} parent=55 // pred_check
        %p3181 = pneg %p232
      $region58: #{denoising_ae_forward.1} parent=55 // pred_check_branch
        %3183 = sbr.rel (%p3181) target = $region60
      $region59: #{denoising_ae_forward.1} parent=55 // pred_region
        _
      $region60: #{denoising_ae_forward.1} parent=55 // pred_fallthru
        _
    $region56: #{denoising_ae_forward.1} parent=5 // pred_fallthru
      _
    %p3184 = scmp.le.s32.totalorder 2, %s15
    // Predicated region
    $region61: #{denoising_ae_forward.1} parent=5 // pred_check
      %p3185 = pneg %p3184
    $region62: #{denoising_ae_forward.1} parent=5 // pred_check_branch
      %3187 = sbr.rel (%p3185) target = $region64
    $region63: #{denoising_ae_forward.1} parent=5 // pred_region
      %s3188 = ssub.s32 %s15, 2
      // Predicated region
      $region65: #{denoising_ae_forward.1} parent=63 // pred_check
        %p3189 = pneg %p238
      $region66: #{denoising_ae_forward.1} parent=63 // pred_check_branch
        %3191 = sbr.rel (%p3189) target = $region68
      $region67: #{denoising_ae_forward.1} parent=63 // pred_region
        %p3192 = scmp.lt.s32.totalorder %s21, 1
        %s3193 = scalar_select %p3192, %s21, 1
        %s3194 = smul.addr %s3193, 2
        %s3195 = smul.addr %s3194, 8
        %s3196 = scalar_lea.vmem %s9, %s3195
      $region68: #{denoising_ae_forward.1} parent=63 // pred_fallthru
        _
    $region64: #{denoising_ae_forward.1} parent=5 // pred_fallthru
      _
  $region6: #{denoising_ae_forward.1} parent=0 // loop_footer
    %s19 = sadd.s32 1, %s15
  $region7: #{denoising_ae_forward.1} parent=0 // loop_footer_branch
    %14 = sbr.rel target = $region3
  $region8: #{denoising_ae_forward.1} parent=0 // loop_exit
    _

</llo_original>
